<compile_context>
chip_gen: v5e
topology: v5e:2x2
jax: 0.10.0
libtpu: 0.0.40
codegen_flags: <defaults>
</compile_context>

<pallas_src>
import math

import jax
import jax.numpy as jnp
from jax.experimental import pallas as pl
from jax.experimental.pallas import tpu as pltpu


# ---------------------------------------------------------------------------
# Shared attention core (head-batched): scores -> masked softmax -> PV -> Wo.
# ---------------------------------------------------------------------------
def _attention_core(q, k, v, mask_ref, wo_ref, bo_ref, o_ref):
    """q, k, v: (H, S, d_k) f32 (Q already scaled by 1/sqrt(d_k));
    mask_ref: (H, S, S) raw mask; wo_ref: (H, d_k, D) bf16; bo_ref: (1, D) f32."""
    bf16 = jnp.bfloat16

    # scores = q @ k^T per head, heads batched on the MXU (leading batch dim).
    s = jnp.einsum("hqd,hkd->hqk", q.astype(bf16), k.astype(bf16),
                   preferred_element_type=jnp.float32)             # (H, S, S)

    # Exact masked_fill(mask == 0, -1e9), computed in-kernel from the single raw mask
    # (fully-masked rows still yield a uniform softmax, matching PyTorch).
    s = jnp.where(mask_ref[...] == 0.0, jnp.float32(-1e9), s)

    # Numerically-stable softmax in f32 (v5e-safe VPU/EUP math).
    m = jnp.max(s, axis=-1, keepdims=True)
    e = jnp.exp(s - m)
    p = e * pl.reciprocal(jnp.sum(e, axis=-1, keepdims=True), approx=True)

    # TODO(synk): nn.Dropout(p=0.1) on p_attn is omitted (deterministic / eval mode).

    ctx = jnp.einsum("hqk,hkd->hqd", p.astype(bf16), v.astype(bf16),
                     preferred_element_type=jnp.float32)            # (H, S, d_k)

    # Head concat folded into the output projection: per-head (S,d_k)@(d_k,D) batched
    # on the MXU, then a cheap elementwise sum over the leading head dim.
    part = jnp.einsum("hsd,hdm->hsm", ctx.astype(bf16), wo_ref[...],
                      preferred_element_type=jnp.float32)           # (H, S, D)
    out = jnp.sum(part, axis=0) + bo_ref[...]                       # (S, D)
    o_ref[0] = out.astype(o_ref.dtype)


# ---------------------------------------------------------------------------
# Self-attention fast path: query is key is value -> one fused QKV projection.
# ---------------------------------------------------------------------------
def _mha_self_attn_kernel(x_ref, wqkv_ref, bqkv_ref, wo_ref, bo_ref, mask_ref, o_ref):
    H = wqkv_ref.shape[0]
    d_k = wqkv_ref.shape[2] // 3
    S, D = x_ref.shape[1], x_ref.shape[2]

    x = jnp.broadcast_to(x_ref[0].astype(jnp.bfloat16), (H, S, D))
    qkv = jnp.einsum("hsd,hdk->hsk", x, wqkv_ref[...],
                     preferred_element_type=jnp.float32) + bqkv_ref[...]   # (H, S, 3*d_k)
    q = qkv[:, :, 0:d_k]
    k = qkv[:, :, d_k:2 * d_k]
    v = qkv[:, :, 2 * d_k:3 * d_k]
    _attention_core(q, k, v, mask_ref, wo_ref, bo_ref, o_ref)


# ---------------------------------------------------------------------------
# General path: distinct query / key / value tensors.
# ---------------------------------------------------------------------------
def _mha_general_kernel(q_ref, k_ref, v_ref, wqkv_ref, bqkv_ref, wo_ref, bo_ref,
                        mask_ref, o_ref):
    H = wqkv_ref.shape[0]
    d_k = wqkv_ref.shape[2] // 3
    S, D = q_ref.shape[1], q_ref.shape[2]

    def project(x_ref, lo, hi):
        x = jnp.broadcast_to(x_ref[0].astype(jnp.bfloat16), (H, S, D))
        return (jnp.einsum("hsd,hdk->hsk", x, wqkv_ref[:, :, lo:hi],
                           preferred_element_type=jnp.float32)
                + bqkv_ref[:, :, lo:hi])

    q = project(q_ref, 0, d_k)
    k = project(k_ref, d_k, 2 * d_k)
    v = project(v_ref, 2 * d_k, 3 * d_k)
    _attention_core(q, k, v, mask_ref, wo_ref, bo_ref, o_ref)


# ---------------------------------------------------------------------------
# One-time parameter preparation (hoisted out of the forward call).
# ---------------------------------------------------------------------------
def prepare_mha_params(params, head):
    """Transpose nn.Linear weights to [D_in, D_out], split per head, fold 1/sqrt(d_k)
    into the Q projection, fuse QKV, and cast MXU operands to bf16."""
    D = params["wq"].shape[0]
    d_k = D // head
    scale = 1.0 / math.sqrt(d_k)

    def heads_w(w, s=1.0):        # (out, in) -> (H, D_in, d_k)
        return (w.T * s).reshape(D, head, d_k).transpose(1, 0, 2)

    def heads_b(b, s=1.0):        # (D,) -> (H, 1, d_k)
        return (b * s).reshape(head, 1, d_k)

    wqkv = jnp.concatenate([heads_w(params["wq"], scale),
                            heads_w(params["wk"]),
                            heads_w(params["wv"])], axis=-1)        # (H, D, 3*d_k)
    bqkv = jnp.concatenate([heads_b(params["bq"], scale),
                            heads_b(params["bk"]),
                            heads_b(params["bv"])], axis=-1)        # (H, 1, 3*d_k)
    wo = params["wo"].T.reshape(head, d_k, D)                       # (H, d_k, D)

    return {
        "head": head,
        "wqkv": wqkv.astype(jnp.bfloat16),
        "bqkv": bqkv.astype(jnp.float32),
        "wo": wo.astype(jnp.bfloat16),
        "bo": params["bo"].reshape(1, D).astype(jnp.float32),
    }


# ---------------------------------------------------------------------------
# MultiHeadedAttention.forward
# ---------------------------------------------------------------------------
def multi_headed_attention(prep, query, key, value, mask):
    """query/key/value: (B, S, D) f32; mask: (H, S, S) (broadcast over batch, like
    mask.unsqueeze(0) in the PyTorch module). `prep` comes from prepare_mha_params."""
    B, S, D = query.shape
    H = prep["head"]
    d_k = D // H

    act_spec = pl.BlockSpec((1, S, D), lambda b: (b, 0, 0))

    def resident(shape):          # full-array block, constant index_map -> VMEM-resident
        n = len(shape)
        return pl.BlockSpec(shape, lambda b, _n=n: (0,) * _n)

    weight_specs = [
        resident((H, D, 3 * d_k)),   # fused per-head QKV weight (bf16)
        resident((H, 1, 3 * d_k)),   # fused per-head QKV bias (f32)
        resident((H, d_k, D)),       # output projection weight (bf16)
        resident((1, D)),            # output projection bias (f32)
        resident((H, S, S)),         # raw mask; compare done in-kernel
    ]
    weight_args = (prep["wqkv"], prep["bqkv"], prep["wo"], prep["bo"], mask)

    if (query is key) and (key is value):      # self-attention fast path
        kernel = _mha_self_attn_kernel
        in_specs = [act_spec] + weight_specs
        args = (query,) + weight_args
    else:
        kernel = _mha_general_kernel
        in_specs = [act_spec, act_spec, act_spec] + weight_specs
        args = (query, key, value) + weight_args

    return pl.pallas_call(
        kernel,
        out_shape=jax.ShapeDtypeStruct((B, S, D), query.dtype),
        grid_spec=pltpu.PrefetchScalarGridSpec(
            num_scalar_prefetch=0,
            grid=(B,),                          # batch shards across TCs on v7x
            in_specs=in_specs,
            out_specs=act_spec,
        ),
        compiler_params=pltpu.CompilerParams(
            dimension_semantics=("parallel",)),
    )(*args)


# ---------------------------------------------------------------------------
# Pure-JAX reference (mirrors the PyTorch module) for correctness checking.
# ---------------------------------------------------------------------------
def mha_reference(params, query, key, value, mask, head):
    B, S, D = query.shape
    d_k = D // head

    def lin(x, w, b):
        return jnp.einsum("bsd,od->bso", x, w) + b

    q = lin(query, params["wq"], params["bq"]).reshape(B, S, head, d_k).transpose(0, 2, 1, 3)
    k = lin(key, params["wk"], params["bk"]).reshape(B, S, head, d_k).transpose(0, 2, 1, 3)
    v = lin(value, params["wv"], params["bv"]).reshape(B, S, head, d_k).transpose(0, 2, 1, 3)

    scores = jnp.einsum("bhqd,bhkd->bhqk", q, k) / math.sqrt(d_k)
    scores = jnp.where(mask[None, ...] == 0, jnp.float32(-1e9), scores)
    p = jax.nn.softmax(scores, axis=-1)
    x = jnp.einsum("bhqk,bhkd->bhqd", p, v)
    x = x.transpose(0, 2, 1, 3).reshape(B, S, D)
    return lin(x, params["wo"], params["bo"])


# ---------------------------------------------------------------------------
# Deterministic parameter init (nn.Linear shapes: weight [D, D], bias [D]).
# ---------------------------------------------------------------------------
def init_params(key, d_model):
    keys = jax.random.split(key, 8)
    scale = 1.0 / math.sqrt(d_model)

    def w(k):
        return jax.random.uniform(k, (d_model, d_model), jnp.float32, -scale, scale)

    def b(k):
        return jax.random.uniform(k, (d_model,), jnp.float32, -scale, scale)

    return {
        "wq": w(keys[0]), "bq": b(keys[1]),
        "wk": w(keys[2]), "bk": b(keys[3]),
        "wv": w(keys[4]), "bv": b(keys[5]),
        "wo": w(keys[6]), "bo": b(keys[7]),
    }


if __name__ == "__main__":
    head = 8
    d_model = 512          # matches the spec (divisible by head)
    batch = 2
    seq = 4                # matches the 2x4 token input in the spec

    root = jax.random.PRNGKey(0)
    k_params, k_x, k_k, k_v = jax.random.split(root, 4)

    params = init_params(k_params, d_model)
    prep = prepare_mha_params(params, head)      # one-time weight preparation

    # query = key = value = pe_result  (same tensor fed three times)
    pe_result = jax.random.normal(k_x, (batch, seq, d_model), jnp.float32)

    # mask = zeros(head, seq, seq), like Variable(torch.zeros(8, 4, 4))
    mask = jnp.zeros((head, seq, seq), jnp.float32)

    out = multi_headed_attention(prep, pe_result, pe_result, pe_result, mask)
    out = jax.block_until_ready(out)
    ref = mha_reference(params, pe_result, pe_result, pe_result, mask, head)

    assert out.shape == (batch, seq, d_model)
    assert bool(jnp.all(jnp.isfinite(out)))
    assert jnp.allclose(out, ref, atol=3e-2, rtol=3e-2), \
        f"max_err={float(jnp.max(jnp.abs(out - ref)))}"

    # Also exercise the general (non-aliased q/k/v) path with a non-degenerate mask.
    key_in = jax.random.normal(k_k, (batch, seq, d_model), jnp.float32)
    val_in = jax.random.normal(k_v, (batch, seq, d_model), jnp.float32)
    mask2 = jnp.ones((head, seq, seq), jnp.float32)
    out2 = multi_headed_attention(prep, pe_result, key_in, val_in, mask2)
    out2 = jax.block_until_ready(out2)
    ref2 = mha_reference(params, pe_result, key_in, val_in, mask2, head)
    assert jnp.allclose(out2, ref2, atol=3e-2, rtol=3e-2), \
        f"max_err={float(jnp.max(jnp.abs(out2 - ref2)))}"

    print("KERNEL_OK")
</pallas_src>

<mosaic_0001>
module attributes {stable_mosaic.version = 11 : i64} {
  func.func @_mha_self_attn_kernel(%arg0: i32, %arg1: memref<1x4x512xf32, #tpu.memory_space<vmem>>, %arg2: memref<8x512x192xbf16, #tpu.memory_space<vmem>>, %arg3: memref<8x1x192xf32, #tpu.memory_space<vmem>>, %arg4: memref<8x64x512xbf16, #tpu.memory_space<vmem>>, %arg5: memref<1x512xf32, #tpu.memory_space<vmem>>, %arg6: memref<8x4x4xf32, #tpu.memory_space<vmem>>, %arg7: memref<1x4x512xf32, #tpu.memory_space<vmem>>) attributes {dimension_semantics = [#tpu.dimension_semantics<parallel>], iteration_bounds = array<i64: 2>, scalar_prefetch = 0 : i64, scratch_operands = 0 : i64, tpu.core_type = #tpu.core_type<tc>, window_params = [{transform_indices = @transform_0, window_bounds = array<i64: 1, 4, 512>}, {pipeline_mode = #tpu.pipeline_mode<synchronous>, transform_indices = @transform_1, window_bounds = array<i64: 8, 512, 192>}, {pipeline_mode = #tpu.pipeline_mode<synchronous>, transform_indices = @transform_2, window_bounds = array<i64: 8, 1, 192>}, {pipeline_mode = #tpu.pipeline_mode<synchronous>, transform_indices = @transform_3, window_bounds = array<i64: 8, 64, 512>}, {pipeline_mode = #tpu.pipeline_mode<synchronous>, transform_indices = @transform_4, window_bounds = array<i64: 1, 512>}, {pipeline_mode = #tpu.pipeline_mode<synchronous>, transform_indices = @transform_5, window_bounds = array<i64: 8, 4, 4>}, {transform_indices = @transform_6, window_bounds = array<i64: 1, 4, 512>}]} {
    %c0 = arith.constant 0 : index
    %c0_0 = arith.constant 0 : index
    %c0_1 = arith.constant 0 : index
    %0 = vector.load %arg1[%c0, %c0_0, %c0_1] : memref<1x4x512xf32, #tpu.memory_space<vmem>>, vector<1x4x512xf32>
    %1 = vector.shape_cast %0 : vector<1x4x512xf32> to vector<4x512xf32>
    %2 = arith.truncf %1 : vector<4x512xf32> to vector<4x512xbf16>
    %3 = vector.shape_cast %2 : vector<4x512xbf16> to vector<1x4x512xbf16>
    %4 = vector.broadcast %3 : vector<1x4x512xbf16> to vector<8x4x512xbf16>
    %c0_2 = arith.constant 0 : index
    %c0_3 = arith.constant 0 : index
    %c0_4 = arith.constant 0 : index
    %5 = vector.load %arg2[%c0_2, %c0_3, %c0_4] : memref<8x512x192xbf16, #tpu.memory_space<vmem>>, vector<8x512x192xbf16>
    "tpu.trace_start"() <{level = 10 : i32, message = "hsd,hdk->hsk"}> : () -> ()
    %cst = arith.constant dense<0.000000e+00> : vector<8x4x192xf32>
    %6 = tpu.matmul %4, %5, %cst {dimension_numbers = #tpu.dot_dimension_numbers<[2], [1], [1], [2], [0, 0, 0, 1, 1, 2], [0], [0]>} : vector<8x4x512xbf16>, vector<8x512x192xbf16>, vector<8x4x192xf32> -> vector<8x4x192xf32>
    "tpu.trace_stop"() : () -> ()
    %c0_5 = arith.constant 0 : index
    %c0_6 = arith.constant 0 : index
    %c0_7 = arith.constant 0 : index
    %7 = vector.load %arg3[%c0_5, %c0_6, %c0_7] : memref<8x1x192xf32, #tpu.memory_space<vmem>>, vector<8x1x192xf32>
    %8 = vector.broadcast %7 : vector<8x1x192xf32> to vector<8x4x192xf32>
    %9 = arith.addf %6, %8 : vector<8x4x192xf32>
    %10 = vector.extract_strided_slice %9 {offsets = [0, 0, 0], sizes = [8, 4, 64], strides = [1, 1, 1]} : vector<8x4x192xf32> to vector<8x4x64xf32>
    %11 = vector.extract_strided_slice %9 {offsets = [0, 0, 64], sizes = [8, 4, 64], strides = [1, 1, 1]} : vector<8x4x192xf32> to vector<8x4x64xf32>
    %12 = vector.extract_strided_slice %9 {offsets = [0, 0, 128], sizes = [8, 4, 64], strides = [1, 1, 1]} : vector<8x4x192xf32> to vector<8x4x64xf32>
    %13 = arith.truncf %10 : vector<8x4x64xf32> to vector<8x4x64xbf16>
    %14 = arith.truncf %11 : vector<8x4x64xf32> to vector<8x4x64xbf16>
    "tpu.trace_start"() <{level = 10 : i32, message = "hqd,hkd->hqk"}> : () -> ()
    %cst_8 = arith.constant dense<0.000000e+00> : vector<8x4x4xf32>
    %15 = tpu.matmul %13, %14, %cst_8 {dimension_numbers = #tpu.dot_dimension_numbers<[2], [2], [1], [1], [0, 0, 0, 1, 1, 1], [0], [0]>} : vector<8x4x64xbf16>, vector<8x4x64xbf16>, vector<8x4x4xf32> -> vector<8x4x4xf32>
    "tpu.trace_stop"() : () -> ()
    %c0_9 = arith.constant 0 : index
    %c0_10 = arith.constant 0 : index
    %c0_11 = arith.constant 0 : index
    %16 = vector.load %arg6[%c0_9, %c0_10, %c0_11] : memref<8x4x4xf32, #tpu.memory_space<vmem>>, vector<8x4x4xf32>
    %cst_12 = arith.constant 0.000000e+00 : f32
    %17 = vector.broadcast %cst_12 : f32 to vector<8x4x4xf32>
    %18 = arith.cmpf oeq, %16, %17 : vector<8x4x4xf32>
    %cst_13 = arith.constant -1.000000e+09 : f32
    %19 = vector.broadcast %cst_13 : f32 to vector<8x4x4xf32>
    %20 = arith.select %18, %19, %15 : vector<8x4x4xi1>, vector<8x4x4xf32>
    %cst_14 = arith.constant dense<0xFF800000> : vector<8x4xf32>
    %21 = vector.multi_reduction <maximumf>, %20, %cst_14 [2] : vector<8x4x4xf32> to vector<8x4xf32>
    %22 = vector.shape_cast %21 : vector<8x4xf32> to vector<8x4x1xf32>
    %23 = vector.broadcast %22 : vector<8x4x1xf32> to vector<8x4x4xf32>
    %24 = arith.subf %20, %23 : vector<8x4x4xf32>
    %25 = math.exp %24 : vector<8x4x4xf32>
    %cst_15 = arith.constant dense<0.000000e+00> : vector<8x4xf32>
    %26 = vector.multi_reduction <add>, %25, %cst_15 [2] : vector<8x4x4xf32> to vector<8x4xf32>
    %27 = vector.shape_cast %26 : vector<8x4xf32> to vector<8x4x1xf32>
    %28 = tpu.reciprocal %27 {approx = true} : vector<8x4x1xf32> -> vector<8x4x1xf32>
    %29 = vector.broadcast %28 : vector<8x4x1xf32> to vector<8x4x4xf32>
    %30 = arith.mulf %25, %29 : vector<8x4x4xf32>
    %31 = arith.truncf %30 : vector<8x4x4xf32> to vector<8x4x4xbf16>
    %32 = arith.truncf %12 : vector<8x4x64xf32> to vector<8x4x64xbf16>
    "tpu.trace_start"() <{level = 10 : i32, message = "hqk,hkd->hqd"}> : () -> ()
    %cst_16 = arith.constant dense<0.000000e+00> : vector<8x4x64xf32>
    %33 = tpu.matmul %31, %32, %cst_16 {dimension_numbers = #tpu.dot_dimension_numbers<[2], [1], [1], [2], [0, 0, 0, 1, 1, 2], [0], [0]>} : vector<8x4x4xbf16>, vector<8x4x64xbf16>, vector<8x4x64xf32> -> vector<8x4x64xf32>
    "tpu.trace_stop"() : () -> ()
    %34 = arith.truncf %33 : vector<8x4x64xf32> to vector<8x4x64xbf16>
    %c0_17 = arith.constant 0 : index
    %c0_18 = arith.constant 0 : index
    %c0_19 = arith.constant 0 : index
    %35 = vector.load %arg4[%c0_17, %c0_18, %c0_19] : memref<8x64x512xbf16, #tpu.memory_space<vmem>>, vector<8x64x512xbf16>
    "tpu.trace_start"() <{level = 10 : i32, message = "hsd,hdm->hsm"}> : () -> ()
    %cst_20 = arith.constant dense<0.000000e+00> : vector<8x4x512xf32>
    %36 = tpu.matmul %34, %35, %cst_20 {dimension_numbers = #tpu.dot_dimension_numbers<[2], [1], [1], [2], [0, 0, 0, 1, 1, 2], [0], [0]>} : vector<8x4x64xbf16>, vector<8x64x512xbf16>, vector<8x4x512xf32> -> vector<8x4x512xf32>
    "tpu.trace_stop"() : () -> ()
    %cst_21 = arith.constant dense<0.000000e+00> : vector<4x512xf32>
    %37 = vector.multi_reduction <add>, %36, %cst_21 [0] : vector<8x4x512xf32> to vector<4x512xf32>
    %c0_22 = arith.constant 0 : index
    %c0_23 = arith.constant 0 : index
    %38 = vector.load %arg5[%c0_22, %c0_23] : memref<1x512xf32, #tpu.memory_space<vmem>>, vector<1x512xf32>
    %39 = vector.broadcast %38 : vector<1x512xf32> to vector<4x512xf32>
    %40 = arith.addf %37, %39 : vector<4x512xf32>
    %c0_24 = arith.constant 0 : index
    %c0_25 = arith.constant 0 : index
    %c0_26 = arith.constant 0 : index
    %41 = vector.load %arg7[%c0_24, %c0_25, %c0_26] : memref<1x4x512xf32, #tpu.memory_space<vmem>>, vector<1x4x512xf32>
    %42 = vector.shape_cast %41 : vector<1x4x512xf32> to vector<4x512xf32>
    %43 = vector.shape_cast %40 : vector<4x512xf32> to vector<1x4x512xf32>
    tpu.vector_store %arg7[%c0_24, %c0_25, %c0_26], %43 {strides = array<i32>} : memref<1x4x512xf32, #tpu.memory_space<vmem>>, vector<1x4x512xf32>,
    return
  }
  func.func @transform_0(%arg0: i32) -> (i32, i32, i32) {
    %c0_i32 = arith.constant 0 : i32
    %c0_i32_0 = arith.constant 0 : i32
    %c0_i32_1 = arith.constant 0 : i32
    return %arg0, %c0_i32, %c0_i32_0 : i32, i32, i32
  }
  func.func @transform_1(%arg0: i32) -> (i32, i32, i32) {
    %c0_i32 = arith.constant 0 : i32
    %c0_i32_0 = arith.constant 0 : i32
    %c0_i32_1 = arith.constant 0 : i32
    %c0_i32_2 = arith.constant 0 : i32
    return %c0_i32, %c0_i32_0, %c0_i32_1 : i32, i32, i32
  }
  func.func @transform_2(%arg0: i32) -> (i32, i32, i32) {
    %c0_i32 = arith.constant 0 : i32
    %c0_i32_0 = arith.constant 0 : i32
    %c0_i32_1 = arith.constant 0 : i32
    %c0_i32_2 = arith.constant 0 : i32
    return %c0_i32, %c0_i32_0, %c0_i32_1 : i32, i32, i32
  }
  func.func @transform_3(%arg0: i32) -> (i32, i32, i32) {
    %c0_i32 = arith.constant 0 : i32
    %c0_i32_0 = arith.constant 0 : i32
    %c0_i32_1 = arith.constant 0 : i32
    %c0_i32_2 = arith.constant 0 : i32
    return %c0_i32, %c0_i32_0, %c0_i32_1 : i32, i32, i32
  }
  func.func @transform_4(%arg0: i32) -> (i32, i32) {
    %c0_i32 = arith.constant 0 : i32
    %c0_i32_0 = arith.constant 0 : i32
    %c0_i32_1 = arith.constant 0 : i32
    return %c0_i32, %c0_i32_0 : i32, i32
  }
  func.func @transform_5(%arg0: i32) -> (i32, i32, i32) {
    %c0_i32 = arith.constant 0 : i32
    %c0_i32_0 = arith.constant 0 : i32
    %c0_i32_1 = arith.constant 0 : i32
    %c0_i32_2 = arith.constant 0 : i32
    return %c0_i32, %c0_i32_0, %c0_i32_1 : i32, i32, i32
  }
  func.func @transform_6(%arg0: i32) -> (i32, i32, i32) {
    %c0_i32 = arith.constant 0 : i32
    %c0_i32_0 = arith.constant 0 : i32
    %c0_i32_1 = arith.constant 0 : i32
    return %arg0, %c0_i32, %c0_i32_0 : i32, i32, i32
  }
}

</mosaic_0001>

<llo_original>
// kernel: tpu_custom_call.1
$region0: #{tpu_custom_call.1}
  #allocation0 [shape = 'u32[]', space=smem, size = 0x4, offset = 0x4, fixed_abs, tag = 'smem constant byte address 0x4 - core index']
  #allocation1 [shape = 'u32[72,128]{1,0:T(1,128)}', space=vmem, size = 0x9000, scoped, tag = 'internal scratch']
  %s0 = inlined_call_operand.vmem [shape: f32[2,4,512], index: 0, kind: input, shape index: {}]
  %s1 = inlined_call_operand.vmem [shape: bf16[8,512,192], index: 1, kind: input, shape index: {}]
  %s2 = inlined_call_operand.vmem [shape: f32[8,1,192], index: 2, kind: input, shape index: {}]
  %s3 = inlined_call_operand.vmem [shape: bf16[8,64,512], index: 3, kind: input, shape index: {}]
  %s4 = inlined_call_operand.vmem [shape: f32[1,512], index: 4, kind: input, shape index: {}]
  %s5 = inlined_call_operand.vmem [shape: f32[8,4,4], index: 5, kind: input, shape index: {}]
  %s6 = inlined_call_operand.hbm [shape: f32[2,4,512], index: 6, kind: output, shape index: {}]
  %s7 = sld [smem:[#allocation0]]
  $region57: #{tpu_custom_call.1} parent=0
    _
  %s9 = ssub.s32 1, %s7
  %s10 = scalar_select 0, %s9, %s7
  $region1: #{tpu_custom_call.1} parent=0
    #allocation2 [shape = 'u8[16384]{0}', space=vmem, size = 0x4000, scoped, tag = 'output window, operand 0']
    #allocation3 [shape = 's32[2]{0}', space=sflag, size = 0x8, scoped, tag = 'scoped memory for tpu_custom_call.1']
    %11 = vsyncpa [#allocation3], 0
    %s12 = scalar_lea.sflag [#allocation3], 1
    %13 = vsyncpa %s12, 0
    loop: start=0, step=1, limit=4
    $region2: #{tpu_custom_call.1} parent=1 // loop_pre_header
      _
    $region3: #{tpu_custom_call.1} parent=1 // loop_header
      %s15 = sphi 0, %s19
      %p16 = scmp.ge.s32.totalorder %s15, 4
      %s25 = sphi 0, %s27
      %s28 = sphi 0, %s25
      %s29 = sphi 0, %s28
      %s45 = sphi 0, %s29
      %s49 = sphi 0, %s49
      %s51 = sphi 0, %s49
      %s52 = sphi 0, %s51
      %s66 = sphi 0, %s52
      %s70 = sphi 0, %s70
      %s72 = sphi 0, %s70
      %s73 = sphi 0, %s72
      %s87 = sphi 0, %s73
      %s91 = sphi 0, %s91
      %s93 = sphi 0, %s91
      %s94 = sphi 0, %s93
      %s108 = sphi 0, %s94
      %s112 = sphi 0, %s112
      %s114 = sphi 0, %s112
      %s115 = sphi 0, %s114
      %s129 = sphi 0, %s115
      %s133 = sphi 0, %s133
      %s135 = sphi 0, %s133
      %s136 = sphi 0, %s135
      %s150 = sphi 0, %s136
      %s156 = sphi 0, %s158
      %s159 = sphi 0, %s156
      %s160 = sphi 0, %s159
      %s176 = sphi 0, %s160
    $region4: #{tpu_custom_call.1} parent=1 // loop_header_branch
      %18 = sbr.rel (%p16) target = $region8
    $region5: #{tpu_custom_call.1} parent=1 // loop_body
      %s20 = ssub.s32 %s15, 1
      %s21 = ssub.s32 %s15, 2
      %s22 = sadd.s32 %s15, 1
      %s23 = ssub.s32 %s15, %s22
      %p24 = scmp.eq.s32.totalorder %s23, 0
      %s26 = sadd.s32 %s25, 1
      %s27 = scalar_select %p24, %s25, %s26
      %p30 = pneg %p24
      %p31 = scmp.eq.s32.totalorder %s15, 1
      %p32 = por %p30, %p31
      %p33 = scmp.ne.s32.totalorder %s25, %s28
      %p34 = scmp.eq.s32.totalorder %s15, 0
      %p35 = por %p33, %p34
      %p36 = scmp.ne.s32.totalorder %s25, %s28
      %p37 = scmp.eq.s32.totalorder %s20, 1
      %p38 = por %p36, %p37
      %p39 = scmp.ne.s32.totalorder %s28, %s29
      %p40 = scmp.eq.s32.totalorder %s20, 0
      %p41 = por %p39, %p40
      %p42 = scmp.ne.s32.totalorder %s28, %s29
      %p43 = scmp.eq.s32.totalorder %s21, 1
      %p44 = por %p42, %p43
      %p46 = scmp.ne.s32.totalorder %s29, %s45
      %p47 = scmp.eq.s32.totalorder %s21, 0
      %p48 = por %p46, %p47
      %s50 = sadd.s32 %s49, 1
      %p53 = scmp.eq.s32.totalorder %s15, 1
      %p54 = scmp.ne.s32.totalorder %s49, %s51
      %p55 = scmp.eq.s32.totalorder %s15, 0
      %p56 = por %p54, %p55
      %p57 = scmp.ne.s32.totalorder %s49, %s51
      %p58 = scmp.eq.s32.totalorder %s20, 1
      %p59 = por %p57, %p58
      %p60 = scmp.ne.s32.totalorder %s51, %s52
      %p61 = scmp.eq.s32.totalorder %s20, 0
      %p62 = por %p60, %p61
      %p63 = scmp.ne.s32.totalorder %s51, %s52
      %p64 = scmp.eq.s32.totalorder %s21, 1
      %p65 = por %p63, %p64
      %p67 = scmp.ne.s32.totalorder %s52, %s66
      %p68 = scmp.eq.s32.totalorder %s21, 0
      %p69 = por %p67, %p68
      %s71 = sadd.s32 %s70, 1
      %p74 = scmp.eq.s32.totalorder %s15, 1
      %p75 = scmp.ne.s32.totalorder %s70, %s72
      %p76 = scmp.eq.s32.totalorder %s15, 0
      %p77 = por %p75, %p76
      %p78 = scmp.ne.s32.totalorder %s70, %s72
      %p79 = scmp.eq.s32.totalorder %s20, 1
      %p80 = por %p78, %p79
      %p81 = scmp.ne.s32.totalorder %s72, %s73
      %p82 = scmp.eq.s32.totalorder %s20, 0
      %p83 = por %p81, %p82
      %p84 = scmp.ne.s32.totalorder %s72, %s73
      %p85 = scmp.eq.s32.totalorder %s21, 1
      %p86 = por %p84, %p85
      %p88 = scmp.ne.s32.totalorder %s73, %s87
      %p89 = scmp.eq.s32.totalorder %s21, 0
      %p90 = por %p88, %p89
      %s92 = sadd.s32 %s91, 1
      %p95 = scmp.eq.s32.totalorder %s15, 1
      %p96 = scmp.ne.s32.totalorder %s91, %s93
      %p97 = scmp.eq.s32.totalorder %s15, 0
      %p98 = por %p96, %p97
      %p99 = scmp.ne.s32.totalorder %s91, %s93
      %p100 = scmp.eq.s32.totalorder %s20, 1
      %p101 = por %p99, %p100
      %p102 = scmp.ne.s32.totalorder %s93, %s94
      %p103 = scmp.eq.s32.totalorder %s20, 0
      %p104 = por %p102, %p103
      %p105 = scmp.ne.s32.totalorder %s93, %s94
      %p106 = scmp.eq.s32.totalorder %s21, 1
      %p107 = por %p105, %p106
      %p109 = scmp.ne.s32.totalorder %s94, %s108
      %p110 = scmp.eq.s32.totalorder %s21, 0
      %p111 = por %p109, %p110
      %s113 = sadd.s32 %s112, 1
      %p116 = scmp.eq.s32.totalorder %s15, 1
      %p117 = scmp.ne.s32.totalorder %s112, %s114
      %p118 = scmp.eq.s32.totalorder %s15, 0
      %p119 = por %p117, %p118
      %p120 = scmp.ne.s32.totalorder %s112, %s114
      %p121 = scmp.eq.s32.totalorder %s20, 1
      %p122 = por %p120, %p121
      %p123 = scmp.ne.s32.totalorder %s114, %s115
      %p124 = scmp.eq.s32.totalorder %s20, 0
      %p125 = por %p123, %p124
      %p126 = scmp.ne.s32.totalorder %s114, %s115
      %p127 = scmp.eq.s32.totalorder %s21, 1
      %p128 = por %p126, %p127
      %p130 = scmp.ne.s32.totalorder %s115, %s129
      %p131 = scmp.eq.s32.totalorder %s21, 0
      %p132 = por %p130, %p131
      %s134 = sadd.s32 %s133, 1
      %p137 = scmp.eq.s32.totalorder %s15, 1
      %p138 = scmp.ne.s32.totalorder %s133, %s135
      %p139 = scmp.eq.s32.totalorder %s15, 0
      %p140 = por %p138, %p139
      %p141 = scmp.ne.s32.totalorder %s133, %s135
      %p142 = scmp.eq.s32.totalorder %s20, 1
      %p143 = por %p141, %p142
      %p144 = scmp.ne.s32.totalorder %s135, %s136
      %p145 = scmp.eq.s32.totalorder %s20, 0
      %p146 = por %p144, %p145
      %p147 = scmp.ne.s32.totalorder %s135, %s136
      %p148 = scmp.eq.s32.totalorder %s21, 1
      %p149 = por %p147, %p148
      %p151 = scmp.ne.s32.totalorder %s136, %s150
      %p152 = scmp.eq.s32.totalorder %s21, 0
      %p153 = por %p151, %p152
      %s154 = ssub.s32 %s15, %s22
      %p155 = scmp.eq.s32.totalorder %s154, 0
      %s157 = sadd.s32 %s156, 1
      %s158 = scalar_select %p155, %s156, %s157
      %p161 = pneg %p155
      %p162 = scmp.eq.s32.totalorder %s15, 1
      %p163 = por %p161, %p162
      %p164 = scmp.ne.s32.totalorder %s156, %s159
      %p165 = scmp.eq.s32.totalorder %s15, 0
      %p166 = por %p164, %p165
      %p167 = scmp.ne.s32.totalorder %s156, %s159
      %p168 = scmp.eq.s32.totalorder %s20, 1
      %p169 = por %p167, %p168
      %p170 = scmp.ne.s32.totalorder %s159, %s160
      %p171 = scmp.eq.s32.totalorder %s20, 0
      %p172 = por %p170, %p171
      %p173 = scmp.ne.s32.totalorder %s159, %s160
      %p174 = scmp.eq.s32.totalorder %s21, 1
      %p175 = por %p173, %p174
      %p177 = scmp.ne.s32.totalorder %s160, %s176
      %p178 = scmp.eq.s32.totalorder %s21, 0
      %p179 = por %p177, %p178
      %p180 = scmp.le.s32.totalorder 1, %s15
      %p181 = scmp.lt.s32.totalorder %s15, 3
      %p182 = pnand %p180, %p181
      %p183 = pneg %p182
      // Predicated region
      $region9: #{tpu_custom_call.1} parent=5 // pred_check
        _
      $region10: #{tpu_custom_call.1} parent=5 // pred_check_branch
        %185 = sbr.rel (%p182) target = $region12
      $region11: #{tpu_custom_call.1} parent=5 // pred_region
        %s186 = ssub.s32 %s15, 1
        // Predicated region
        $region13: #{tpu_custom_call.1} parent=11 // pred_check
          %p187 = pneg %p62
        $region14: #{tpu_custom_call.1} parent=11 // pred_check_branch
          %189 = sbr.rel (%p187) target = $region16
        $region15: #{tpu_custom_call.1} parent=11 // pred_region
          _
        $region16: #{tpu_custom_call.1} parent=11 // pred_fallthru
          _
        // Predicated region
        $region17: #{tpu_custom_call.1} parent=11 // pred_check
          %p190 = pneg %p83
        $region18: #{tpu_custom_call.1} parent=11 // pred_check_branch
          %192 = sbr.rel (%p190) target = $region20
        $region19: #{tpu_custom_call.1} parent=11 // pred_region
          _
        $region20: #{tpu_custom_call.1} parent=11 // pred_fallthru
          _
        // Predicated region
        $region21: #{tpu_custom_call.1} parent=11 // pred_check
          %p193 = pneg %p104
        $region22: #{tpu_custom_call.1} parent=11 // pred_check_branch
          %195 = sbr.rel (%p193) target = $region24
        $region23: #{tpu_custom_call.1} parent=11 // pred_region
          _
        $region24: #{tpu_custom_call.1} parent=11 // pred_fallthru
          _
        // Predicated region
        $region25: #{tpu_custom_call.1} parent=11 // pred_check
          %p196 = pneg %p125
        $region26: #{tpu_custom_call.1} parent=11 // pred_check_branch
          %198 = sbr.rel (%p196) target = $region28
        $region27: #{tpu_custom_call.1} parent=11 // pred_region
          _
        $region28: #{tpu_custom_call.1} parent=11 // pred_fallthru
          _
        // Predicated region
        $region29: #{tpu_custom_call.1} parent=11 // pred_check
          %p199 = pneg %p146
        $region30: #{tpu_custom_call.1} parent=11 // pred_check_branch
          %201 = sbr.rel (%p199) target = $region32
        $region31: #{tpu_custom_call.1} parent=11 // pred_region
          _
        $region32: #{tpu_custom_call.1} parent=11 // pred_fallthru
          _
      $region12: #{tpu_custom_call.1} parent=5 // pred_fallthru
        _
      %p202 = scmp.lt.s32.totalorder %s15, 2
      // Predicated region
      $region33: #{tpu_custom_call.1} parent=5 // pred_check
        %p203 = pneg %p202
      $region34: #{tpu_custom_call.1} parent=5 // pred_check_branch
        %205 = sbr.rel (%p203) target = $region36
      $region35: #{tpu_custom_call.1} parent=5 // pred_region
        // Predicated region
        $region37: #{tpu_custom_call.1} parent=35 // pred_check
          %p206 = pneg %p35
        $region38: #{tpu_custom_call.1} parent=35 // pred_check_branch
          %208 = sbr.rel (%p206) target = $region40
        $region39: #{tpu_custom_call.1} parent=35 // pred_region
          %p209 = scmp.lt.s32.totalorder %s15, 1
          %s210 = scalar_select %p209, %s15, 1
          %s211 = smul.addr %s210, 4
          %s212 = smul.addr %s211, 4
          %s213 = scalar_lea.vmem %s0, %s212
        $region40: #{tpu_custom_call.1} parent=35 // pred_fallthru
          _
      $region36: #{tpu_custom_call.1} parent=5 // pred_fallthru
        _
      %p214 = scmp.le.s32.totalorder 1, %s15
      %p215 = scmp.lt.s32.totalorder %s15, 3
      %p216 = pnand %p214, %p215
      %p217 = pneg %p216
      // Predicated region
      $region41: #{tpu_custom_call.1} parent=5 // pred_check
        _
      $region42: #{tpu_custom_call.1} parent=5 // pred_check_branch
        %219 = sbr.rel (%p216) target = $region44
      $region43: #{tpu_custom_call.1} parent=5 // pred_region
        %s220 = ssub.s32 %s15, 1
        %p221 = scmp.lt.s32.totalorder %s20, 1
        %s222 = scalar_select %p221, %s20, 1
        %s223 = smul.addr %s222, 4
        %s224 = smul.addr %s223, 4
        %s225 = scalar_lea.vmem %s0, %s224
        %p226 = pneg %p41
        %p227 = pneg %p38
        %p228 = pneg %p62
        %p229 = pneg %p59
        %p230 = pneg %p83
        %p231 = pneg %p80
        %p232 = pneg %p104
        %p233 = pneg %p101
        %p234 = pneg %p125
        %p235 = pneg %p122
        %p236 = pneg %p146
        %p237 = pneg %p143
        %p238 = pneg %p172
        %p239 = pneg %p169
        %s240 = sand.u32 %s159, 1
        %s241 = scalar_lea.sflag [#allocation3], %s240
        %s242 = sand.u32 %s159, 1
        %s243 = smul.addr %s242, 16
        %s244 = scalar_lea.vmem [#allocation2], %s243
        %p245 = scmp.lt.s32.totalorder %s20, 1
        %s246 = scalar_select %p245, %s20, 1
        %s247 = smul.addr %s246, 4
        %s248 = smul.addr %s247, 4
        %s249 = scalar_lea.vmem %s0, %s248
        %v251 = vld [vmem:[%s249] sm:$0xff]
        %v252 = vld [vmem:[%s249 + $0x8] sm:$0xff]
        %255 = vst [vmem:[#allocation1] ss:$2 sm:$0xff] %v251
        %s256 = scalar_lea.vmem [#allocation1], 16
        %257 = vst [vmem:[%s256] ss:$2 sm:$0xff] %v252
        %v258 = vld.sshfl [vmem:[#allocation1] sm:$0xff pattern:$0x75316420]
        %v259 = vld.sshfl [vmem:[#allocation1 + $0x8] sm:$0xff pattern:$0x75316420]
        %v260 = vld.sshfl [vmem:[#allocation1 + $0x10] sm:$0xff pattern:$0x75316420]
        %v261 = vld.sshfl [vmem:[#allocation1 + $0x18] sm:$0xff pattern:$0x75316420]
        %v266 = vpack.c.bf16 %v259, %v258
        %v267 = vpack.c.bf16 %v261, %v260
        %v268 = vld [vmem:[%s1] sm:$0xff]
        %v269 = vld [vmem:[%s1 + $0x8] sm:$0xff]
        %v270 = vld [vmem:[%s1 + $0x10] sm:$0xff]
        %v271 = vld [vmem:[%s1 + $0x18] sm:$0xff]
        %v272 = vld [vmem:[%s1 + $0x20] sm:$0xff]
        %v273 = vld [vmem:[%s1 + $0x28] sm:$0xff]
        %v274 = vld [vmem:[%s1 + $0x30] sm:$0xff]
        %v275 = vld [vmem:[%s1 + $0x38] sm:$0xff]
        %v276 = vld [vmem:[%s1 + $0x40] sm:$0xff]
        %v277 = vld [vmem:[%s1 + $0x48] sm:$0xff]
        %v278 = vld [vmem:[%s1 + $0x50] sm:$0xff]
        %v279 = vld [vmem:[%s1 + $0x58] sm:$0xff]
        %v280 = vld [vmem:[%s1 + $0x60] sm:$0xff]
        %v281 = vld [vmem:[%s1 + $0x68] sm:$0xff]
        %v282 = vld [vmem:[%s1 + $0x70] sm:$0xff]
        %v283 = vld [vmem:[%s1 + $0x78] sm:$0xff]
        %v284 = vld [vmem:[%s1 + $0x80] sm:$0xff]
        %v285 = vld [vmem:[%s1 + $0x88] sm:$0xff]
        %v286 = vld [vmem:[%s1 + $0x90] sm:$0xff]
        %v287 = vld [vmem:[%s1 + $0x98] sm:$0xff]
        %v288 = vld [vmem:[%s1 + $0xa0] sm:$0xff]
        %v289 = vld [vmem:[%s1 + $0xa8] sm:$0xff]
        %v290 = vld [vmem:[%s1 + $0xb0] sm:$0xff]
        %v291 = vld [vmem:[%s1 + $0xb8] sm:$0xff]
        %v292 = vld [vmem:[%s1 + $0xc0] sm:$0xff]
        %v293 = vld [vmem:[%s1 + $0xc8] sm:$0xff]
        %v294 = vld [vmem:[%s1 + $0xd0] sm:$0xff]
        %v295 = vld [vmem:[%s1 + $0xd8] sm:$0xff]
        %v296 = vld [vmem:[%s1 + $0xe0] sm:$0xff]
        %v297 = vld [vmem:[%s1 + $0xe8] sm:$0xff]
        %v298 = vld [vmem:[%s1 + $0xf0] sm:$0xff]
        %v299 = vld [vmem:[%s1 + $0xf8] sm:$0xff]
        %v300 = vld [vmem:[%s1 + $0x100] sm:$0xff]
        %v301 = vld [vmem:[%s1 + $0x108] sm:$0xff]
        %v302 = vld [vmem:[%s1 + $0x110] sm:$0xff]
        %v303 = vld [vmem:[%s1 + $0x118] sm:$0xff]
        %v304 = vld [vmem:[%s1 + $0x120] sm:$0xff]
        %v305 = vld [vmem:[%s1 + $0x128] sm:$0xff]
        %v306 = vld [vmem:[%s1 + $0x130] sm:$0xff]
        %v307 = vld [vmem:[%s1 + $0x138] sm:$0xff]
        %v308 = vld [vmem:[%s1 + $0x140] sm:$0xff]
        %v309 = vld [vmem:[%s1 + $0x148] sm:$0xff]
        %v310 = vld [vmem:[%s1 + $0x150] sm:$0xff]
        %v311 = vld [vmem:[%s1 + $0x158] sm:$0xff]
        %v312 = vld [vmem:[%s1 + $0x160] sm:$0xff]
        %v313 = vld [vmem:[%s1 + $0x168] sm:$0xff]
        %v314 = vld [vmem:[%s1 + $0x170] sm:$0xff]
        %v315 = vld [vmem:[%s1 + $0x178] sm:$0xff]
        %v316 = vld [vmem:[%s1 + $0x180] sm:$0xff]
        %v317 = vld [vmem:[%s1 + $0x188] sm:$0xff]
        %v318 = vld [vmem:[%s1 + $0x190] sm:$0xff]
        %v319 = vld [vmem:[%s1 + $0x198] sm:$0xff]
        %v320 = vld [vmem:[%s1 + $0x1a0] sm:$0xff]
        %v321 = vld [vmem:[%s1 + $0x1a8] sm:$0xff]
        %v322 = vld [vmem:[%s1 + $0x1b0] sm:$0xff]
        %v323 = vld [vmem:[%s1 + $0x1b8] sm:$0xff]
        %v324 = vld [vmem:[%s1 + $0x1c0] sm:$0xff]
        %v325 = vld [vmem:[%s1 + $0x1c8] sm:$0xff]
        %v326 = vld [vmem:[%s1 + $0x1d0] sm:$0xff]
        %v327 = vld [vmem:[%s1 + $0x1d8] sm:$0xff]
        %v328 = vld [vmem:[%s1 + $0x1e0] sm:$0xff]
        %v329 = vld [vmem:[%s1 + $0x1e8] sm:$0xff]
        %v330 = vld [vmem:[%s1 + $0x1f0] sm:$0xff]
        %v331 = vld [vmem:[%s1 + $0x1f8] sm:$0xff]
        %v332 = vld [vmem:[%s1 + $0x200] sm:$0xff]
        %v333 = vld [vmem:[%s1 + $0x208] sm:$0xff]
        %v334 = vld [vmem:[%s1 + $0x210] sm:$0xff]
        %v335 = vld [vmem:[%s1 + $0x218] sm:$0xff]
        %v336 = vld [vmem:[%s1 + $0x220] sm:$0xff]
        %v337 = vld [vmem:[%s1 + $0x228] sm:$0xff]
        %v338 = vld [vmem:[%s1 + $0x230] sm:$0xff]
        %v339 = vld [vmem:[%s1 + $0x238] sm:$0xff]
        %v340 = vld [vmem:[%s1 + $0x240] sm:$0xff]
        %v341 = vld [vmem:[%s1 + $0x248] sm:$0xff]
        %v342 = vld [vmem:[%s1 + $0x250] sm:$0xff]
        %v343 = vld [vmem:[%s1 + $0x258] sm:$0xff]
        %v344 = vld [vmem:[%s1 + $0x260] sm:$0xff]
        %v345 = vld [vmem:[%s1 + $0x268] sm:$0xff]
        %v346 = vld [vmem:[%s1 + $0x270] sm:$0xff]
        %v347 = vld [vmem:[%s1 + $0x278] sm:$0xff]
        %v348 = vld [vmem:[%s1 + $0x280] sm:$0xff]
        %v349 = vld [vmem:[%s1 + $0x288] sm:$0xff]
        %v350 = vld [vmem:[%s1 + $0x290] sm:$0xff]
        %v351 = vld [vmem:[%s1 + $0x298] sm:$0xff]
        %v352 = vld [vmem:[%s1 + $0x2a0] sm:$0xff]
        %v353 = vld [vmem:[%s1 + $0x2a8] sm:$0xff]
        %v354 = vld [vmem:[%s1 + $0x2b0] sm:$0xff]
        %v355 = vld [vmem:[%s1 + $0x2b8] sm:$0xff]
        %v356 = vld [vmem:[%s1 + $0x2c0] sm:$0xff]
        %v357 = vld [vmem:[%s1 + $0x2c8] sm:$0xff]
        %v358 = vld [vmem:[%s1 + $0x2d0] sm:$0xff]
        %v359 = vld [vmem:[%s1 + $0x2d8] sm:$0xff]
        %v360 = vld [vmem:[%s1 + $0x2e0] sm:$0xff]
        %v361 = vld [vmem:[%s1 + $0x2e8] sm:$0xff]
        %v362 = vld [vmem:[%s1 + $0x2f0] sm:$0xff]
        %v363 = vld [vmem:[%s1 + $0x2f8] sm:$0xff]
        %v364 = vld [vmem:[%s1 + $0x300] sm:$0xff]
        %v365 = vld [vmem:[%s1 + $0x308] sm:$0xff]
        %v366 = vld [vmem:[%s1 + $0x310] sm:$0xff]
        %v367 = vld [vmem:[%s1 + $0x318] sm:$0xff]
        %v368 = vld [vmem:[%s1 + $0x320] sm:$0xff]
        %v369 = vld [vmem:[%s1 + $0x328] sm:$0xff]
        %v370 = vld [vmem:[%s1 + $0x330] sm:$0xff]
        %v371 = vld [vmem:[%s1 + $0x338] sm:$0xff]
        %v372 = vld [vmem:[%s1 + $0x340] sm:$0xff]
        %v373 = vld [vmem:[%s1 + $0x348] sm:$0xff]
        %v374 = vld [vmem:[%s1 + $0x350] sm:$0xff]
        %v375 = vld [vmem:[%s1 + $0x358] sm:$0xff]
        %v376 = vld [vmem:[%s1 + $0x360] sm:$0xff]
        %v377 = vld [vmem:[%s1 + $0x368] sm:$0xff]
        %v378 = vld [vmem:[%s1 + $0x370] sm:$0xff]
        %v379 = vld [vmem:[%s1 + $0x378] sm:$0xff]
        %v380 = vld [vmem:[%s1 + $0x380] sm:$0xff]
        %v381 = vld [vmem:[%s1 + $0x388] sm:$0xff]
        %v382 = vld [vmem:[%s1 + $0x390] sm:$0xff]
        %v383 = vld [vmem:[%s1 + $0x398] sm:$0xff]
        %v384 = vld [vmem:[%s1 + $0x3a0] sm:$0xff]
        %v385 = vld [vmem:[%s1 + $0x3a8] sm:$0xff]
        %v386 = vld [vmem:[%s1 + $0x3b0] sm:$0xff]
        %v387 = vld [vmem:[%s1 + $0x3b8] sm:$0xff]
        %v388 = vld [vmem:[%s1 + $0x3c0] sm:$0xff]
        %v389 = vld [vmem:[%s1 + $0x3c8] sm:$0xff]
        %v390 = vld [vmem:[%s1 + $0x3d0] sm:$0xff]
        %v391 = vld [vmem:[%s1 + $0x3d8] sm:$0xff]
        %v392 = vld [vmem:[%s1 + $0x3e0] sm:$0xff]
        %v393 = vld [vmem:[%s1 + $0x3e8] sm:$0xff]
        %v394 = vld [vmem:[%s1 + $0x3f0] sm:$0xff]
        %v395 = vld [vmem:[%s1 + $0x3f8] sm:$0xff]
        %v396 = vld [vmem:[%s1 + $0x400] sm:$0xff]
        %v397 = vld [vmem:[%s1 + $0x408] sm:$0xff]
        %v398 = vld [vmem:[%s1 + $0x410] sm:$0xff]
        %v399 = vld [vmem:[%s1 + $0x418] sm:$0xff]
        %v400 = vld [vmem:[%s1 + $0x420] sm:$0xff]
        %v401 = vld [vmem:[%s1 + $0x428] sm:$0xff]
        %v402 = vld [vmem:[%s1 + $0x430] sm:$0xff]
        %v403 = vld [vmem:[%s1 + $0x438] sm:$0xff]
        %v404 = vld [vmem:[%s1 + $0x440] sm:$0xff]
        %v405 = vld [vmem:[%s1 + $0x448] sm:$0xff]
        %v406 = vld [vmem:[%s1 + $0x450] sm:$0xff]
        %v407 = vld [vmem:[%s1 + $0x458] sm:$0xff]
        %v408 = vld [vmem:[%s1 + $0x460] sm:$0xff]
        %v409 = vld [vmem:[%s1 + $0x468] sm:$0xff]
        %v410 = vld [vmem:[%s1 + $0x470] sm:$0xff]
        %v411 = vld [vmem:[%s1 + $0x478] sm:$0xff]
        %v412 = vld [vmem:[%s1 + $0x480] sm:$0xff]
        %v413 = vld [vmem:[%s1 + $0x488] sm:$0xff]
        %v414 = vld [vmem:[%s1 + $0x490] sm:$0xff]
        %v415 = vld [vmem:[%s1 + $0x498] sm:$0xff]
        %v416 = vld [vmem:[%s1 + $0x4a0] sm:$0xff]
        %v417 = vld [vmem:[%s1 + $0x4a8] sm:$0xff]
        %v418 = vld [vmem:[%s1 + $0x4b0] sm:$0xff]
        %v419 = vld [vmem:[%s1 + $0x4b8] sm:$0xff]
        %v420 = vld [vmem:[%s1 + $0x4c0] sm:$0xff]
        %v421 = vld [vmem:[%s1 + $0x4c8] sm:$0xff]
        %v422 = vld [vmem:[%s1 + $0x4d0] sm:$0xff]
        %v423 = vld [vmem:[%s1 + $0x4d8] sm:$0xff]
        %v424 = vld [vmem:[%s1 + $0x4e0] sm:$0xff]
        %v425 = vld [vmem:[%s1 + $0x4e8] sm:$0xff]
        %v426 = vld [vmem:[%s1 + $0x4f0] sm:$0xff]
        %v427 = vld [vmem:[%s1 + $0x4f8] sm:$0xff]
        %v428 = vld [vmem:[%s1 + $0x500] sm:$0xff]
        %v429 = vld [vmem:[%s1 + $0x508] sm:$0xff]
        %v430 = vld [vmem:[%s1 + $0x510] sm:$0xff]
        %v431 = vld [vmem:[%s1 + $0x518] sm:$0xff]
        %v432 = vld [vmem:[%s1 + $0x520] sm:$0xff]
        %v433 = vld [vmem:[%s1 + $0x528] sm:$0xff]
        %v434 = vld [vmem:[%s1 + $0x530] sm:$0xff]
        %v435 = vld [vmem:[%s1 + $0x538] sm:$0xff]
        %v436 = vld [vmem:[%s1 + $0x540] sm:$0xff]
        %v437 = vld [vmem:[%s1 + $0x548] sm:$0xff]
        %v438 = vld [vmem:[%s1 + $0x550] sm:$0xff]
        %v439 = vld [vmem:[%s1 + $0x558] sm:$0xff]
        %v440 = vld [vmem:[%s1 + $0x560] sm:$0xff]
        %v441 = vld [vmem:[%s1 + $0x568] sm:$0xff]
        %v442 = vld [vmem:[%s1 + $0x570] sm:$0xff]
        %v443 = vld [vmem:[%s1 + $0x578] sm:$0xff]
        %v444 = vld [vmem:[%s1 + $0x580] sm:$0xff]
        %v445 = vld [vmem:[%s1 + $0x588] sm:$0xff]
        %v446 = vld [vmem:[%s1 + $0x590] sm:$0xff]
        %v447 = vld [vmem:[%s1 + $0x598] sm:$0xff]
        %v448 = vld [vmem:[%s1 + $0x5a0] sm:$0xff]
        %v449 = vld [vmem:[%s1 + $0x5a8] sm:$0xff]
        %v450 = vld [vmem:[%s1 + $0x5b0] sm:$0xff]
        %v451 = vld [vmem:[%s1 + $0x5b8] sm:$0xff]
        %v452 = vld [vmem:[%s1 + $0x5c0] sm:$0xff]
        %v453 = vld [vmem:[%s1 + $0x5c8] sm:$0xff]
        %v454 = vld [vmem:[%s1 + $0x5d0] sm:$0xff]
        %v455 = vld [vmem:[%s1 + $0x5d8] sm:$0xff]
        %v456 = vld [vmem:[%s1 + $0x5e0] sm:$0xff]
        %v457 = vld [vmem:[%s1 + $0x5e8] sm:$0xff]
        %v458 = vld [vmem:[%s1 + $0x5f0] sm:$0xff]
        %v459 = vld [vmem:[%s1 + $0x5f8] sm:$0xff]
        %v460 = vld [vmem:[%s1 + $0x600] sm:$0xff]
        %v461 = vld [vmem:[%s1 + $0x608] sm:$0xff]
        %v462 = vld [vmem:[%s1 + $0x610] sm:$0xff]
        %v463 = vld [vmem:[%s1 + $0x618] sm:$0xff]
        %v464 = vld [vmem:[%s1 + $0x620] sm:$0xff]
        %v465 = vld [vmem:[%s1 + $0x628] sm:$0xff]
        %v466 = vld [vmem:[%s1 + $0x630] sm:$0xff]
        %v467 = vld [vmem:[%s1 + $0x638] sm:$0xff]
        %v468 = vld [vmem:[%s1 + $0x640] sm:$0xff]
        %v469 = vld [vmem:[%s1 + $0x648] sm:$0xff]
        %v470 = vld [vmem:[%s1 + $0x650] sm:$0xff]
        %v471 = vld [vmem:[%s1 + $0x658] sm:$0xff]
        %v472 = vld [vmem:[%s1 + $0x660] sm:$0xff]
        %v473 = vld [vmem:[%s1 + $0x668] sm:$0xff]
        %v474 = vld [vmem:[%s1 + $0x670] sm:$0xff]
        %v475 = vld [vmem:[%s1 + $0x678] sm:$0xff]
        %v476 = vld [vmem:[%s1 + $0x680] sm:$0xff]
        %v477 = vld [vmem:[%s1 + $0x688] sm:$0xff]
        %v478 = vld [vmem:[%s1 + $0x690] sm:$0xff]
        %v479 = vld [vmem:[%s1 + $0x698] sm:$0xff]
        %v480 = vld [vmem:[%s1 + $0x6a0] sm:$0xff]
        %v481 = vld [vmem:[%s1 + $0x6a8] sm:$0xff]
        %v482 = vld [vmem:[%s1 + $0x6b0] sm:$0xff]
        %v483 = vld [vmem:[%s1 + $0x6b8] sm:$0xff]
        %v484 = vld [vmem:[%s1 + $0x6c0] sm:$0xff]
        %v485 = vld [vmem:[%s1 + $0x6c8] sm:$0xff]
        %v486 = vld [vmem:[%s1 + $0x6d0] sm:$0xff]
        %v487 = vld [vmem:[%s1 + $0x6d8] sm:$0xff]
        %v488 = vld [vmem:[%s1 + $0x6e0] sm:$0xff]
        %v489 = vld [vmem:[%s1 + $0x6e8] sm:$0xff]
        %v490 = vld [vmem:[%s1 + $0x6f0] sm:$0xff]
        %v491 = vld [vmem:[%s1 + $0x6f8] sm:$0xff]
        %v492 = vld [vmem:[%s1 + $0x700] sm:$0xff]
        %v493 = vld [vmem:[%s1 + $0x708] sm:$0xff]
        %v494 = vld [vmem:[%s1 + $0x710] sm:$0xff]
        %v495 = vld [vmem:[%s1 + $0x718] sm:$0xff]
        %v496 = vld [vmem:[%s1 + $0x720] sm:$0xff]
        %v497 = vld [vmem:[%s1 + $0x728] sm:$0xff]
        %v498 = vld [vmem:[%s1 + $0x730] sm:$0xff]
        %v499 = vld [vmem:[%s1 + $0x738] sm:$0xff]
        %v500 = vld [vmem:[%s1 + $0x740] sm:$0xff]
        %v501 = vld [vmem:[%s1 + $0x748] sm:$0xff]
        %v502 = vld [vmem:[%s1 + $0x750] sm:$0xff]
        %v503 = vld [vmem:[%s1 + $0x758] sm:$0xff]
        %v504 = vld [vmem:[%s1 + $0x760] sm:$0xff]
        %v505 = vld [vmem:[%s1 + $0x768] sm:$0xff]
        %v506 = vld [vmem:[%s1 + $0x770] sm:$0xff]
        %v507 = vld [vmem:[%s1 + $0x778] sm:$0xff]
        %v508 = vld [vmem:[%s1 + $0x780] sm:$0xff]
        %v509 = vld [vmem:[%s1 + $0x788] sm:$0xff]
        %v510 = vld [vmem:[%s1 + $0x790] sm:$0xff]
        %v511 = vld [vmem:[%s1 + $0x798] sm:$0xff]
        %v512 = vld [vmem:[%s1 + $0x7a0] sm:$0xff]
        %v513 = vld [vmem:[%s1 + $0x7a8] sm:$0xff]
        %v514 = vld [vmem:[%s1 + $0x7b0] sm:$0xff]
        %v515 = vld [vmem:[%s1 + $0x7b8] sm:$0xff]
        %v516 = vld [vmem:[%s1 + $0x7c0] sm:$0xff]
        %v517 = vld [vmem:[%s1 + $0x7c8] sm:$0xff]
        %v518 = vld [vmem:[%s1 + $0x7d0] sm:$0xff]
        %v519 = vld [vmem:[%s1 + $0x7d8] sm:$0xff]
        %v520 = vld [vmem:[%s1 + $0x7e0] sm:$0xff]
        %v521 = vld [vmem:[%s1 + $0x7e8] sm:$0xff]
        %v522 = vld [vmem:[%s1 + $0x7f0] sm:$0xff]
        %v523 = vld [vmem:[%s1 + $0x7f8] sm:$0xff]
        %v524 = vld [vmem:[%s1 + $0x800] sm:$0xff]
        %v525 = vld [vmem:[%s1 + $0x808] sm:$0xff]
        %v526 = vld [vmem:[%s1 + $0x810] sm:$0xff]
        %v527 = vld [vmem:[%s1 + $0x818] sm:$0xff]
        %v528 = vld [vmem:[%s1 + $0x820] sm:$0xff]
        %v529 = vld [vmem:[%s1 + $0x828] sm:$0xff]
        %v530 = vld [vmem:[%s1 + $0x830] sm:$0xff]
        %v531 = vld [vmem:[%s1 + $0x838] sm:$0xff]
        %v532 = vld [vmem:[%s1 + $0x840] sm:$0xff]
        %v533 = vld [vmem:[%s1 + $0x848] sm:$0xff]
        %v534 = vld [vmem:[%s1 + $0x850] sm:$0xff]
        %v535 = vld [vmem:[%s1 + $0x858] sm:$0xff]
        %v536 = vld [vmem:[%s1 + $0x860] sm:$0xff]
        %v537 = vld [vmem:[%s1 + $0x868] sm:$0xff]
        %v538 = vld [vmem:[%s1 + $0x870] sm:$0xff]
        %v539 = vld [vmem:[%s1 + $0x878] sm:$0xff]
        %v540 = vld [vmem:[%s1 + $0x880] sm:$0xff]
        %v541 = vld [vmem:[%s1 + $0x888] sm:$0xff]
        %v542 = vld [vmem:[%s1 + $0x890] sm:$0xff]
        %v543 = vld [vmem:[%s1 + $0x898] sm:$0xff]
        %v544 = vld [vmem:[%s1 + $0x8a0] sm:$0xff]
        %v545 = vld [vmem:[%s1 + $0x8a8] sm:$0xff]
        %v546 = vld [vmem:[%s1 + $0x8b0] sm:$0xff]
        %v547 = vld [vmem:[%s1 + $0x8b8] sm:$0xff]
        %v548 = vld [vmem:[%s1 + $0x8c0] sm:$0xff]
        %v549 = vld [vmem:[%s1 + $0x8c8] sm:$0xff]
        %v550 = vld [vmem:[%s1 + $0x8d0] sm:$0xff]
        %v551 = vld [vmem:[%s1 + $0x8d8] sm:$0xff]
        %v552 = vld [vmem:[%s1 + $0x8e0] sm:$0xff]
        %v553 = vld [vmem:[%s1 + $0x8e8] sm:$0xff]
        %v554 = vld [vmem:[%s1 + $0x8f0] sm:$0xff]
        %v555 = vld [vmem:[%s1 + $0x8f8] sm:$0xff]
        %v556 = vld [vmem:[%s1 + $0x900] sm:$0xff]
        %v557 = vld [vmem:[%s1 + $0x908] sm:$0xff]
        %v558 = vld [vmem:[%s1 + $0x910] sm:$0xff]
        %v559 = vld [vmem:[%s1 + $0x918] sm:$0xff]
        %v560 = vld [vmem:[%s1 + $0x920] sm:$0xff]
        %v561 = vld [vmem:[%s1 + $0x928] sm:$0xff]
        %v562 = vld [vmem:[%s1 + $0x930] sm:$0xff]
        %v563 = vld [vmem:[%s1 + $0x938] sm:$0xff]
        %v564 = vld [vmem:[%s1 + $0x940] sm:$0xff]
        %v565 = vld [vmem:[%s1 + $0x948] sm:$0xff]
        %v566 = vld [vmem:[%s1 + $0x950] sm:$0xff]
        %v567 = vld [vmem:[%s1 + $0x958] sm:$0xff]
        %v568 = vld [vmem:[%s1 + $0x960] sm:$0xff]
        %v569 = vld [vmem:[%s1 + $0x968] sm:$0xff]
        %v570 = vld [vmem:[%s1 + $0x970] sm:$0xff]
        %v571 = vld [vmem:[%s1 + $0x978] sm:$0xff]
        %v572 = vld [vmem:[%s1 + $0x980] sm:$0xff]
        %v573 = vld [vmem:[%s1 + $0x988] sm:$0xff]
        %v574 = vld [vmem:[%s1 + $0x990] sm:$0xff]
        %v575 = vld [vmem:[%s1 + $0x998] sm:$0xff]
        %v576 = vld [vmem:[%s1 + $0x9a0] sm:$0xff]
        %v577 = vld [vmem:[%s1 + $0x9a8] sm:$0xff]
        %v578 = vld [vmem:[%s1 + $0x9b0] sm:$0xff]
        %v579 = vld [vmem:[%s1 + $0x9b8] sm:$0xff]
        %v580 = vld [vmem:[%s1 + $0x9c0] sm:$0xff]
        %v581 = vld [vmem:[%s1 + $0x9c8] sm:$0xff]
        %v582 = vld [vmem:[%s1 + $0x9d0] sm:$0xff]
        %v583 = vld [vmem:[%s1 + $0x9d8] sm:$0xff]
        %v584 = vld [vmem:[%s1 + $0x9e0] sm:$0xff]
        %v585 = vld [vmem:[%s1 + $0x9e8] sm:$0xff]
        %v586 = vld [vmem:[%s1 + $0x9f0] sm:$0xff]
        %v587 = vld [vmem:[%s1 + $0x9f8] sm:$0xff]
        %v588 = vld [vmem:[%s1 + $0xa00] sm:$0xff]
        %v589 = vld [vmem:[%s1 + $0xa08] sm:$0xff]
        %v590 = vld [vmem:[%s1 + $0xa10] sm:$0xff]
        %v591 = vld [vmem:[%s1 + $0xa18] sm:$0xff]
        %v592 = vld [vmem:[%s1 + $0xa20] sm:$0xff]
        %v593 = vld [vmem:[%s1 + $0xa28] sm:$0xff]
        %v594 = vld [vmem:[%s1 + $0xa30] sm:$0xff]
        %v595 = vld [vmem:[%s1 + $0xa38] sm:$0xff]
        %v596 = vld [vmem:[%s1 + $0xa40] sm:$0xff]
        %v597 = vld [vmem:[%s1 + $0xa48] sm:$0xff]
        %v598 = vld [vmem:[%s1 + $0xa50] sm:$0xff]
        %v599 = vld [vmem:[%s1 + $0xa58] sm:$0xff]
        %v600 = vld [vmem:[%s1 + $0xa60] sm:$0xff]
        %v601 = vld [vmem:[%s1 + $0xa68] sm:$0xff]
        %v602 = vld [vmem:[%s1 + $0xa70] sm:$0xff]
        %v603 = vld [vmem:[%s1 + $0xa78] sm:$0xff]
        %v604 = vld [vmem:[%s1 + $0xa80] sm:$0xff]
        %v605 = vld [vmem:[%s1 + $0xa88] sm:$0xff]
        %v606 = vld [vmem:[%s1 + $0xa90] sm:$0xff]
        %v607 = vld [vmem:[%s1 + $0xa98] sm:$0xff]
        %v608 = vld [vmem:[%s1 + $0xaa0] sm:$0xff]
        %v609 = vld [vmem:[%s1 + $0xaa8] sm:$0xff]
        %v610 = vld [vmem:[%s1 + $0xab0] sm:$0xff]
        %v611 = vld [vmem:[%s1 + $0xab8] sm:$0xff]
        %v612 = vld [vmem:[%s1 + $0xac0] sm:$0xff]
        %v613 = vld [vmem:[%s1 + $0xac8] sm:$0xff]
        %v614 = vld [vmem:[%s1 + $0xad0] sm:$0xff]
        %v615 = vld [vmem:[%s1 + $0xad8] sm:$0xff]
        %v616 = vld [vmem:[%s1 + $0xae0] sm:$0xff]
        %v617 = vld [vmem:[%s1 + $0xae8] sm:$0xff]
        %v618 = vld [vmem:[%s1 + $0xaf0] sm:$0xff]
        %v619 = vld [vmem:[%s1 + $0xaf8] sm:$0xff]
        %v620 = vld [vmem:[%s1 + $0xb00] sm:$0xff]
        %v621 = vld [vmem:[%s1 + $0xb08] sm:$0xff]
        %v622 = vld [vmem:[%s1 + $0xb10] sm:$0xff]
        %v623 = vld [vmem:[%s1 + $0xb18] sm:$0xff]
        %v624 = vld [vmem:[%s1 + $0xb20] sm:$0xff]
        %v625 = vld [vmem:[%s1 + $0xb28] sm:$0xff]
        %v626 = vld [vmem:[%s1 + $0xb30] sm:$0xff]
        %v627 = vld [vmem:[%s1 + $0xb38] sm:$0xff]
        %v628 = vld [vmem:[%s1 + $0xb40] sm:$0xff]
        %v629 = vld [vmem:[%s1 + $0xb48] sm:$0xff]
        %v630 = vld [vmem:[%s1 + $0xb50] sm:$0xff]
        %v631 = vld [vmem:[%s1 + $0xb58] sm:$0xff]
        %v632 = vld [vmem:[%s1 + $0xb60] sm:$0xff]
        %v633 = vld [vmem:[%s1 + $0xb68] sm:$0xff]
        %v634 = vld [vmem:[%s1 + $0xb70] sm:$0xff]
        %v635 = vld [vmem:[%s1 + $0xb78] sm:$0xff]
        %v636 = vld [vmem:[%s1 + $0xb80] sm:$0xff]
        %v637 = vld [vmem:[%s1 + $0xb88] sm:$0xff]
        %v638 = vld [vmem:[%s1 + $0xb90] sm:$0xff]
        %v639 = vld [vmem:[%s1 + $0xb98] sm:$0xff]
        %v640 = vld [vmem:[%s1 + $0xba0] sm:$0xff]
        %v641 = vld [vmem:[%s1 + $0xba8] sm:$0xff]
        %v642 = vld [vmem:[%s1 + $0xbb0] sm:$0xff]
        %v643 = vld [vmem:[%s1 + $0xbb8] sm:$0xff]
        %v644 = vld [vmem:[%s1 + $0xbc0] sm:$0xff]
        %v645 = vld [vmem:[%s1 + $0xbc8] sm:$0xff]
        %v646 = vld [vmem:[%s1 + $0xbd0] sm:$0xff]
        %v647 = vld [vmem:[%s1 + $0xbd8] sm:$0xff]
        %v648 = vld [vmem:[%s1 + $0xbe0] sm:$0xff]
        %v649 = vld [vmem:[%s1 + $0xbe8] sm:$0xff]
        %v650 = vld [vmem:[%s1 + $0xbf0] sm:$0xff]
        %v651 = vld [vmem:[%s1 + $0xbf8] sm:$0xff]
        %v652 = vld [vmem:[%s1 + $0xc00] sm:$0xff]
        %v653 = vld [vmem:[%s1 + $0xc08] sm:$0xff]
        %v654 = vld [vmem:[%s1 + $0xc10] sm:$0xff]
        %v655 = vld [vmem:[%s1 + $0xc18] sm:$0xff]
        %v656 = vld [vmem:[%s1 + $0xc20] sm:$0xff]
        %v657 = vld [vmem:[%s1 + $0xc28] sm:$0xff]
        %v658 = vld [vmem:[%s1 + $0xc30] sm:$0xff]
        %v659 = vld [vmem:[%s1 + $0xc38] sm:$0xff]
        %v660 = vld [vmem:[%s1 + $0xc40] sm:$0xff]
        %v661 = vld [vmem:[%s1 + $0xc48] sm:$0xff]
        %v662 = vld [vmem:[%s1 + $0xc50] sm:$0xff]
        %v663 = vld [vmem:[%s1 + $0xc58] sm:$0xff]
        %v664 = vld [vmem:[%s1 + $0xc60] sm:$0xff]
        %v665 = vld [vmem:[%s1 + $0xc68] sm:$0xff]
        %v666 = vld [vmem:[%s1 + $0xc70] sm:$0xff]
        %v667 = vld [vmem:[%s1 + $0xc78] sm:$0xff]
        %v668 = vld [vmem:[%s1 + $0xc80] sm:$0xff]
        %v669 = vld [vmem:[%s1 + $0xc88] sm:$0xff]
        %v670 = vld [vmem:[%s1 + $0xc90] sm:$0xff]
        %v671 = vld [vmem:[%s1 + $0xc98] sm:$0xff]
        %v672 = vld [vmem:[%s1 + $0xca0] sm:$0xff]
        %v673 = vld [vmem:[%s1 + $0xca8] sm:$0xff]
        %v674 = vld [vmem:[%s1 + $0xcb0] sm:$0xff]
        %v675 = vld [vmem:[%s1 + $0xcb8] sm:$0xff]
        %v676 = vld [vmem:[%s1 + $0xcc0] sm:$0xff]
        %v677 = vld [vmem:[%s1 + $0xcc8] sm:$0xff]
        %v678 = vld [vmem:[%s1 + $0xcd0] sm:$0xff]
        %v679 = vld [vmem:[%s1 + $0xcd8] sm:$0xff]
        %v680 = vld [vmem:[%s1 + $0xce0] sm:$0xff]
        %v681 = vld [vmem:[%s1 + $0xce8] sm:$0xff]
        %v682 = vld [vmem:[%s1 + $0xcf0] sm:$0xff]
        %v683 = vld [vmem:[%s1 + $0xcf8] sm:$0xff]
        %v684 = vld [vmem:[%s1 + $0xd00] sm:$0xff]
        %v685 = vld [vmem:[%s1 + $0xd08] sm:$0xff]
        %v686 = vld [vmem:[%s1 + $0xd10] sm:$0xff]
        %v687 = vld [vmem:[%s1 + $0xd18] sm:$0xff]
        %v688 = vld [vmem:[%s1 + $0xd20] sm:$0xff]
        %v689 = vld [vmem:[%s1 + $0xd28] sm:$0xff]
        %v690 = vld [vmem:[%s1 + $0xd30] sm:$0xff]
        %v691 = vld [vmem:[%s1 + $0xd38] sm:$0xff]
        %v692 = vld [vmem:[%s1 + $0xd40] sm:$0xff]
        %v693 = vld [vmem:[%s1 + $0xd48] sm:$0xff]
        %v694 = vld [vmem:[%s1 + $0xd50] sm:$0xff]
        %v695 = vld [vmem:[%s1 + $0xd58] sm:$0xff]
        %v696 = vld [vmem:[%s1 + $0xd60] sm:$0xff]
        %v697 = vld [vmem:[%s1 + $0xd68] sm:$0xff]
        %v698 = vld [vmem:[%s1 + $0xd70] sm:$0xff]
        %v699 = vld [vmem:[%s1 + $0xd78] sm:$0xff]
        %v700 = vld [vmem:[%s1 + $0xd80] sm:$0xff]
        %v701 = vld [vmem:[%s1 + $0xd88] sm:$0xff]
        %v702 = vld [vmem:[%s1 + $0xd90] sm:$0xff]
        %v703 = vld [vmem:[%s1 + $0xd98] sm:$0xff]
        %v704 = vld [vmem:[%s1 + $0xda0] sm:$0xff]
        %v705 = vld [vmem:[%s1 + $0xda8] sm:$0xff]
        %v706 = vld [vmem:[%s1 + $0xdb0] sm:$0xff]
        %v707 = vld [vmem:[%s1 + $0xdb8] sm:$0xff]
        %v708 = vld [vmem:[%s1 + $0xdc0] sm:$0xff]
        %v709 = vld [vmem:[%s1 + $0xdc8] sm:$0xff]
        %v710 = vld [vmem:[%s1 + $0xdd0] sm:$0xff]
        %v711 = vld [vmem:[%s1 + $0xdd8] sm:$0xff]
        %v712 = vld [vmem:[%s1 + $0xde0] sm:$0xff]
        %v713 = vld [vmem:[%s1 + $0xde8] sm:$0xff]
        %v714 = vld [vmem:[%s1 + $0xdf0] sm:$0xff]
        %v715 = vld [vmem:[%s1 + $0xdf8] sm:$0xff]
        %v716 = vld [vmem:[%s1 + $0xe00] sm:$0xff]
        %v717 = vld [vmem:[%s1 + $0xe08] sm:$0xff]
        %v718 = vld [vmem:[%s1 + $0xe10] sm:$0xff]
        %v719 = vld [vmem:[%s1 + $0xe18] sm:$0xff]
        %v720 = vld [vmem:[%s1 + $0xe20] sm:$0xff]
        %v721 = vld [vmem:[%s1 + $0xe28] sm:$0xff]
        %v722 = vld [vmem:[%s1 + $0xe30] sm:$0xff]
        %v723 = vld [vmem:[%s1 + $0xe38] sm:$0xff]
        %v724 = vld [vmem:[%s1 + $0xe40] sm:$0xff]
        %v725 = vld [vmem:[%s1 + $0xe48] sm:$0xff]
        %v726 = vld [vmem:[%s1 + $0xe50] sm:$0xff]
        %v727 = vld [vmem:[%s1 + $0xe58] sm:$0xff]
        %v728 = vld [vmem:[%s1 + $0xe60] sm:$0xff]
        %v729 = vld [vmem:[%s1 + $0xe68] sm:$0xff]
        %v730 = vld [vmem:[%s1 + $0xe70] sm:$0xff]
        %v731 = vld [vmem:[%s1 + $0xe78] sm:$0xff]
        %v732 = vld [vmem:[%s1 + $0xe80] sm:$0xff]
        %v733 = vld [vmem:[%s1 + $0xe88] sm:$0xff]
        %v734 = vld [vmem:[%s1 + $0xe90] sm:$0xff]
        %v735 = vld [vmem:[%s1 + $0xe98] sm:$0xff]
        %v736 = vld [vmem:[%s1 + $0xea0] sm:$0xff]
        %v737 = vld [vmem:[%s1 + $0xea8] sm:$0xff]
        %v738 = vld [vmem:[%s1 + $0xeb0] sm:$0xff]
        %v739 = vld [vmem:[%s1 + $0xeb8] sm:$0xff]
        %v740 = vld [vmem:[%s1 + $0xec0] sm:$0xff]
        %v741 = vld [vmem:[%s1 + $0xec8] sm:$0xff]
        %v742 = vld [vmem:[%s1 + $0xed0] sm:$0xff]
        %v743 = vld [vmem:[%s1 + $0xed8] sm:$0xff]
        %v744 = vld [vmem:[%s1 + $0xee0] sm:$0xff]
        %v745 = vld [vmem:[%s1 + $0xee8] sm:$0xff]
        %v746 = vld [vmem:[%s1 + $0xef0] sm:$0xff]
        %v747 = vld [vmem:[%s1 + $0xef8] sm:$0xff]
        %v748 = vld [vmem:[%s1 + $0xf00] sm:$0xff]
        %v749 = vld [vmem:[%s1 + $0xf08] sm:$0xff]
        %v750 = vld [vmem:[%s1 + $0xf10] sm:$0xff]
        %v751 = vld [vmem:[%s1 + $0xf18] sm:$0xff]
        %v752 = vld [vmem:[%s1 + $0xf20] sm:$0xff]
        %v753 = vld [vmem:[%s1 + $0xf28] sm:$0xff]
        %v754 = vld [vmem:[%s1 + $0xf30] sm:$0xff]
        %v755 = vld [vmem:[%s1 + $0xf38] sm:$0xff]
        %v756 = vld [vmem:[%s1 + $0xf40] sm:$0xff]
        %v757 = vld [vmem:[%s1 + $0xf48] sm:$0xff]
        %v758 = vld [vmem:[%s1 + $0xf50] sm:$0xff]
        %v759 = vld [vmem:[%s1 + $0xf58] sm:$0xff]
        %v760 = vld [vmem:[%s1 + $0xf60] sm:$0xff]
        %v761 = vld [vmem:[%s1 + $0xf68] sm:$0xff]
        %v762 = vld [vmem:[%s1 + $0xf70] sm:$0xff]
        %v763 = vld [vmem:[%s1 + $0xf78] sm:$0xff]
        %v764 = vld [vmem:[%s1 + $0xf80] sm:$0xff]
        %v765 = vld [vmem:[%s1 + $0xf88] sm:$0xff]
        %v766 = vld [vmem:[%s1 + $0xf90] sm:$0xff]
        %v767 = vld [vmem:[%s1 + $0xf98] sm:$0xff]
        %v768 = vld [vmem:[%s1 + $0xfa0] sm:$0xff]
        %v769 = vld [vmem:[%s1 + $0xfa8] sm:$0xff]
        %v770 = vld [vmem:[%s1 + $0xfb0] sm:$0xff]
        %v771 = vld [vmem:[%s1 + $0xfb8] sm:$0xff]
        %v772 = vld [vmem:[%s1 + $0xfc0] sm:$0xff]
        %v773 = vld [vmem:[%s1 + $0xfc8] sm:$0xff]
        %v774 = vld [vmem:[%s1 + $0xfd0] sm:$0xff]
        %v775 = vld [vmem:[%s1 + $0xfd8] sm:$0xff]
        %v776 = vld [vmem:[%s1 + $0xfe0] sm:$0xff]
        %v777 = vld [vmem:[%s1 + $0xfe8] sm:$0xff]
        %v778 = vld [vmem:[%s1 + $0xff0] sm:$0xff]
        %v779 = vld [vmem:[%s1 + $0xff8] sm:$0xff]
        %v780 = vld [vmem:[%s2] sm:$0x3]
        %v781 = vld [vmem:[%s2 + $0x2] sm:$0x3]
        %v782 = vld [vmem:[%s2 + $0x4] sm:$0x3]
        %v783 = vld [vmem:[%s2 + $0x6] sm:$0x3]
        %v784 = vld [vmem:[%s2 + $0x8] sm:$0x3]
        %v785 = vld [vmem:[%s2 + $0xa] sm:$0x3]
        %v786 = vld [vmem:[%s2 + $0xc] sm:$0x3]
        %v787 = vld [vmem:[%s2 + $0xe] sm:$0x3]
        %v796 = vperm.slane %v780, 0
        %v797 = vperm.slane %v780, 1
        %v798 = vperm.slane %v781, 0
        %v799 = vperm.slane %v781, 1
        %v800 = vperm.slane %v782, 0
        %v801 = vperm.slane %v782, 1
        %v802 = vperm.slane %v783, 0
        %v803 = vperm.slane %v783, 1
        %v804 = vperm.slane %v784, 0
        %v805 = vperm.slane %v784, 1
        %v806 = vperm.slane %v785, 0
        %v807 = vperm.slane %v785, 1
        %v808 = vperm.slane %v786, 0
        %v809 = vperm.slane %v786, 1
        %v810 = vperm.slane %v787, 0
        %v811 = vperm.slane %v787, 1
        %v830 = vunpack.c.l.b16 %v266
        %v831 = vunpack.c.h.b16 %v266
        %v832 = vunpack.c.l.b16 %v267
        %v833 = vunpack.c.h.b16 %v267
        %v834 = vpack.c.b16 %v830, %v830
        %v835 = vpack.c.b16 %v831, %v831
        %v836 = vpack.c.b16 %v832, %v832
        %v837 = vpack.c.b16 %v833, %v833
        %v906 = vunpack.c.l.b16 %v268
        %v907 = vunpack.c.h.b16 %v268
        %v908 = vunpack.c.l.b16 %v269
        %v909 = vunpack.c.h.b16 %v269
        %v910 = vunpack.c.l.b16 %v270
        %v911 = vunpack.c.h.b16 %v270
        %v912 = vunpack.c.l.b16 %v271
        %v913 = vunpack.c.h.b16 %v271
        %v914 = vunpack.c.l.b16 %v272
        %v915 = vunpack.c.h.b16 %v272
        %v916 = vunpack.c.l.b16 %v273
        %v917 = vunpack.c.h.b16 %v273
        %v918 = vunpack.c.l.b16 %v274
        %v919 = vunpack.c.h.b16 %v274
        %v920 = vunpack.c.l.b16 %v275
        %v921 = vunpack.c.h.b16 %v275
        %v922 = vunpack.c.l.b16 %v276
        %v923 = vunpack.c.h.b16 %v276
        %v924 = vunpack.c.l.b16 %v277
        %v925 = vunpack.c.h.b16 %v277
        %v926 = vunpack.c.l.b16 %v278
        %v927 = vunpack.c.h.b16 %v278
        %v928 = vunpack.c.l.b16 %v279
        %v929 = vunpack.c.h.b16 %v279
        %v930 = vunpack.c.l.b16 %v280
        %v931 = vunpack.c.h.b16 %v280
        %v932 = vunpack.c.l.b16 %v281
        %v933 = vunpack.c.h.b16 %v281
        %v934 = vunpack.c.l.b16 %v282
        %v935 = vunpack.c.h.b16 %v282
        %v936 = vunpack.c.l.b16 %v283
        %v937 = vunpack.c.h.b16 %v283
        %v938 = vunpack.c.l.b16 %v284
        %v939 = vunpack.c.h.b16 %v284
        %v940 = vunpack.c.l.b16 %v285
        %v941 = vunpack.c.h.b16 %v285
        %v942 = vunpack.c.l.b16 %v286
        %v943 = vunpack.c.h.b16 %v286
        %v944 = vunpack.c.l.b16 %v287
        %v945 = vunpack.c.h.b16 %v287
        %v946 = vunpack.c.l.b16 %v288
        %v947 = vunpack.c.h.b16 %v288
        %v948 = vunpack.c.l.b16 %v289
        %v949 = vunpack.c.h.b16 %v289
        %v950 = vunpack.c.l.b16 %v290
        %v951 = vunpack.c.h.b16 %v290
        %v952 = vunpack.c.l.b16 %v291
        %v953 = vunpack.c.h.b16 %v291
        %v954 = vunpack.c.l.b16 %v292
        %v955 = vunpack.c.h.b16 %v292
        %v956 = vunpack.c.l.b16 %v293
        %v957 = vunpack.c.h.b16 %v293
        %v958 = vunpack.c.l.b16 %v294
        %v959 = vunpack.c.h.b16 %v294
        %v960 = vunpack.c.l.b16 %v295
        %v961 = vunpack.c.h.b16 %v295
        %v962 = vunpack.c.l.b16 %v296
        %v963 = vunpack.c.h.b16 %v296
        %v964 = vunpack.c.l.b16 %v297
        %v965 = vunpack.c.h.b16 %v297
        %v966 = vunpack.c.l.b16 %v298
        %v967 = vunpack.c.h.b16 %v298
        %v968 = vunpack.c.l.b16 %v299
        %v969 = vunpack.c.h.b16 %v299
        %v970 = vunpack.c.l.b16 %v300
        %v971 = vunpack.c.h.b16 %v300
        %v972 = vunpack.c.l.b16 %v301
        %v973 = vunpack.c.h.b16 %v301
        %v974 = vunpack.c.l.b16 %v302
        %v975 = vunpack.c.h.b16 %v302
        %v976 = vunpack.c.l.b16 %v303
        %v977 = vunpack.c.h.b16 %v303
        %v978 = vunpack.c.l.b16 %v304
        %v979 = vunpack.c.h.b16 %v304
        %v980 = vunpack.c.l.b16 %v305
        %v981 = vunpack.c.h.b16 %v305
        %v982 = vunpack.c.l.b16 %v306
        %v983 = vunpack.c.h.b16 %v306
        %v984 = vunpack.c.l.b16 %v307
        %v985 = vunpack.c.h.b16 %v307
        %v986 = vunpack.c.l.b16 %v308
        %v987 = vunpack.c.h.b16 %v308
        %v988 = vunpack.c.l.b16 %v309
        %v989 = vunpack.c.h.b16 %v309
        %v990 = vunpack.c.l.b16 %v310
        %v991 = vunpack.c.h.b16 %v310
        %v992 = vunpack.c.l.b16 %v311
        %v993 = vunpack.c.h.b16 %v311
        %v994 = vunpack.c.l.b16 %v312
        %v995 = vunpack.c.h.b16 %v312
        %v996 = vunpack.c.l.b16 %v313
        %v997 = vunpack.c.h.b16 %v313
        %v998 = vunpack.c.l.b16 %v314
        %v999 = vunpack.c.h.b16 %v314
        %v1000 = vunpack.c.l.b16 %v315
        %v1001 = vunpack.c.h.b16 %v315
        %v1002 = vunpack.c.l.b16 %v316
        %v1003 = vunpack.c.h.b16 %v316
        %v1004 = vunpack.c.l.b16 %v317
        %v1005 = vunpack.c.h.b16 %v317
        %v1006 = vunpack.c.l.b16 %v318
        %v1007 = vunpack.c.h.b16 %v318
        %v1008 = vunpack.c.l.b16 %v319
        %v1009 = vunpack.c.h.b16 %v319
        %v1010 = vunpack.c.l.b16 %v320
        %v1011 = vunpack.c.h.b16 %v320
        %v1012 = vunpack.c.l.b16 %v321
        %v1013 = vunpack.c.h.b16 %v321
        %v1014 = vunpack.c.l.b16 %v322
        %v1015 = vunpack.c.h.b16 %v322
        %v1016 = vunpack.c.l.b16 %v323
        %v1017 = vunpack.c.h.b16 %v323
        %v1018 = vunpack.c.l.b16 %v324
        %v1019 = vunpack.c.h.b16 %v324
        %v1020 = vunpack.c.l.b16 %v325
        %v1021 = vunpack.c.h.b16 %v325
        %v1022 = vunpack.c.l.b16 %v326
        %v1023 = vunpack.c.h.b16 %v326
        %v1024 = vunpack.c.l.b16 %v327
        %v1025 = vunpack.c.h.b16 %v327
        %v1026 = vunpack.c.l.b16 %v328
        %v1027 = vunpack.c.h.b16 %v328
        %v1028 = vunpack.c.l.b16 %v329
        %v1029 = vunpack.c.h.b16 %v329
        %v1030 = vunpack.c.l.b16 %v330
        %v1031 = vunpack.c.h.b16 %v330
        %v1032 = vunpack.c.l.b16 %v331
        %v1033 = vunpack.c.h.b16 %v331
        %v1034 = vpack.c.b16 %v908, %v906
        %v1035 = vpack.c.b16 %v909, %v907
        %v1036 = vpack.c.b16 %v912, %v910
        %v1037 = vpack.c.b16 %v913, %v911
        %v1038 = vpack.c.b16 %v916, %v914
        %v1039 = vpack.c.b16 %v917, %v915
        %v1040 = vpack.c.b16 %v920, %v918
        %v1041 = vpack.c.b16 %v921, %v919
        %v1042 = vpack.c.b16 %v924, %v922
        %v1043 = vpack.c.b16 %v925, %v923
        %v1044 = vpack.c.b16 %v928, %v926
        %v1045 = vpack.c.b16 %v929, %v927
        %v1046 = vpack.c.b16 %v932, %v930
        %v1047 = vpack.c.b16 %v933, %v931
        %v1048 = vpack.c.b16 %v936, %v934
        %v1049 = vpack.c.b16 %v937, %v935
        %v1050 = vpack.c.b16 %v940, %v938
        %v1051 = vpack.c.b16 %v941, %v939
        %v1052 = vpack.c.b16 %v944, %v942
        %v1053 = vpack.c.b16 %v945, %v943
        %v1054 = vpack.c.b16 %v948, %v946
        %v1055 = vpack.c.b16 %v949, %v947
        %v1056 = vpack.c.b16 %v952, %v950
        %v1057 = vpack.c.b16 %v953, %v951
        %v1058 = vpack.c.b16 %v956, %v954
        %v1059 = vpack.c.b16 %v957, %v955
        %v1060 = vpack.c.b16 %v960, %v958
        %v1061 = vpack.c.b16 %v961, %v959
        %v1062 = vpack.c.b16 %v964, %v962
        %v1063 = vpack.c.b16 %v965, %v963
        %v1064 = vpack.c.b16 %v968, %v966
        %v1065 = vpack.c.b16 %v969, %v967
        %v1066 = vpack.c.b16 %v972, %v970
        %v1067 = vpack.c.b16 %v973, %v971
        %v1068 = vpack.c.b16 %v976, %v974
        %v1069 = vpack.c.b16 %v977, %v975
        %v1070 = vpack.c.b16 %v980, %v978
        %v1071 = vpack.c.b16 %v981, %v979
        %v1072 = vpack.c.b16 %v984, %v982
        %v1073 = vpack.c.b16 %v985, %v983
        %v1074 = vpack.c.b16 %v988, %v986
        %v1075 = vpack.c.b16 %v989, %v987
        %v1076 = vpack.c.b16 %v992, %v990
        %v1077 = vpack.c.b16 %v993, %v991
        %v1078 = vpack.c.b16 %v996, %v994
        %v1079 = vpack.c.b16 %v997, %v995
        %v1080 = vpack.c.b16 %v1000, %v998
        %v1081 = vpack.c.b16 %v1001, %v999
        %v1082 = vpack.c.b16 %v1004, %v1002
        %v1083 = vpack.c.b16 %v1005, %v1003
        %v1084 = vpack.c.b16 %v1008, %v1006
        %v1085 = vpack.c.b16 %v1009, %v1007
        %v1086 = vpack.c.b16 %v1012, %v1010
        %v1087 = vpack.c.b16 %v1013, %v1011
        %v1088 = vpack.c.b16 %v1016, %v1014
        %v1089 = vpack.c.b16 %v1017, %v1015
        %v1090 = vpack.c.b16 %v1020, %v1018
        %v1091 = vpack.c.b16 %v1021, %v1019
        %v1092 = vpack.c.b16 %v1024, %v1022
        %v1093 = vpack.c.b16 %v1025, %v1023
        %v1094 = vpack.c.b16 %v1028, %v1026
        %v1095 = vpack.c.b16 %v1029, %v1027
        %v1096 = vpack.c.b16 %v1032, %v1030
        %v1097 = vpack.c.b16 %v1033, %v1031
        %1162 = vmatpush.bf16.msra.mxu0 %v1048
        %1163 = vmatpush.bf16.msra.mxu0 %v1046
        %1164 = vmatpush.bf16.msra.mxu0 %v1044
        %1165 = vmatpush.bf16.msra.mxu0 %v1042
        %1166 = vmatpush.bf16.msra.mxu0 %v1040
        %1167 = vmatpush.bf16.msra.mxu0 %v1038
        %1168 = vmatpush.bf16.msra.mxu0 %v1036
        %1169 = vmatpush.bf16.msra.mxu0 %v1034
        %1170 = vmatmul.bf16.gmra.mxu0 %v834
        %v1171 = vpop.f32.mrf.mxu0
        %v1172 = vadd.f32 %v796, %v1171
        %v1173 = vpop.f32.mrf.mxu0
        %1174 = vdwg.mxu0
        %1175 = vmatpush.bf16.msra.mxu0 %v1064
        %1176 = vmatpush.bf16.msra.mxu0 %v1062
        %1177 = vmatpush.bf16.msra.mxu0 %v1060
        %1178 = vmatpush.bf16.msra.mxu0 %v1058
        %1179 = vmatpush.bf16.msra.mxu0 %v1056
        %1180 = vmatpush.bf16.msra.mxu0 %v1054
        %1181 = vmatpush.bf16.msra.mxu0 %v1052
        %1182 = vmatpush.bf16.msra.mxu0 %v1050
        %1183 = vmatmul.bf16.gmra.mxu0 %v835
        %v1184 = vpop.f32.mrf.mxu0
        %v1185 = vadd.f32 %v1172, %v1184
        %v1186 = vpop.f32.mrf.mxu0
        %1187 = vdwg.mxu0
        %1188 = vmatpush.bf16.msra.mxu0 %v1080
        %1189 = vmatpush.bf16.msra.mxu0 %v1078
        %1190 = vmatpush.bf16.msra.mxu0 %v1076
        %1191 = vmatpush.bf16.msra.mxu0 %v1074
        %1192 = vmatpush.bf16.msra.mxu0 %v1072
        %1193 = vmatpush.bf16.msra.mxu0 %v1070
        %1194 = vmatpush.bf16.msra.mxu0 %v1068
        %1195 = vmatpush.bf16.msra.mxu0 %v1066
        %1196 = vmatmul.bf16.gmra.mxu0 %v836
        %v1197 = vpop.f32.mrf.mxu0
        %v1198 = vadd.f32 %v1185, %v1197
        %v1199 = vpop.f32.mrf.mxu0
        %1200 = vdwg.mxu0
        %1201 = vmatpush.bf16.msra.mxu0 %v1096
        %1202 = vmatpush.bf16.msra.mxu0 %v1094
        %1203 = vmatpush.bf16.msra.mxu0 %v1092
        %1204 = vmatpush.bf16.msra.mxu0 %v1090
        %1205 = vmatpush.bf16.msra.mxu0 %v1088
        %1206 = vmatpush.bf16.msra.mxu0 %v1086
        %1207 = vmatpush.bf16.msra.mxu0 %v1084
        %1208 = vmatpush.bf16.msra.mxu0 %v1082
        %1209 = vmatmul.bf16.gmra.mxu0 %v837
        %v1210 = vpop.f32.mrf.mxu0
        %v1211 = vadd.f32 %v1198, %v1210
        %v1212 = vpop.f32.mrf.mxu0
        %1213 = vdwg.mxu0
        %1214 = vmatpush.bf16.msra.mxu0 %v1049
        %1215 = vmatpush.bf16.msra.mxu0 %v1047
        %1216 = vmatpush.bf16.msra.mxu0 %v1045
        %1217 = vmatpush.bf16.msra.mxu0 %v1043
        %1218 = vmatpush.bf16.msra.mxu0 %v1041
        %1219 = vmatpush.bf16.msra.mxu0 %v1039
        %1220 = vmatpush.bf16.msra.mxu0 %v1037
        %1221 = vmatpush.bf16.msra.mxu0 %v1035
        %1222 = vmatmul.bf16.gmra.mxu0 %v834
        %v1223 = vpop.f32.mrf.mxu0
        %v1224 = vadd.f32 %v797, %v1223
        %v1225 = vpop.f32.mrf.mxu0
        %1226 = vdwg.mxu0
        %1227 = vmatpush.bf16.msra.mxu0 %v1065
        %1228 = vmatpush.bf16.msra.mxu0 %v1063
        %1229 = vmatpush.bf16.msra.mxu0 %v1061
        %1230 = vmatpush.bf16.msra.mxu0 %v1059
        %1231 = vmatpush.bf16.msra.mxu0 %v1057
        %1232 = vmatpush.bf16.msra.mxu0 %v1055
        %1233 = vmatpush.bf16.msra.mxu0 %v1053
        %1234 = vmatpush.bf16.msra.mxu0 %v1051
        %1235 = vmatmul.bf16.gmra.mxu0 %v835
        %v1236 = vpop.f32.mrf.mxu0
        %v1237 = vadd.f32 %v1224, %v1236
        %v1238 = vpop.f32.mrf.mxu0
        %1239 = vdwg.mxu0
        %1240 = vmatpush.bf16.msra.mxu0 %v1081
        %1241 = vmatpush.bf16.msra.mxu0 %v1079
        %1242 = vmatpush.bf16.msra.mxu0 %v1077
        %1243 = vmatpush.bf16.msra.mxu0 %v1075
        %1244 = vmatpush.bf16.msra.mxu0 %v1073
        %1245 = vmatpush.bf16.msra.mxu0 %v1071
        %1246 = vmatpush.bf16.msra.mxu0 %v1069
        %1247 = vmatpush.bf16.msra.mxu0 %v1067
        %1248 = vmatmul.bf16.gmra.mxu0 %v836
        %v1249 = vpop.f32.mrf.mxu0
        %v1250 = vadd.f32 %v1237, %v1249
        %v1251 = vpop.f32.mrf.mxu0
        %1252 = vdwg.mxu0
        %1253 = vmatpush.bf16.msra.mxu0 %v1097
        %1254 = vmatpush.bf16.msra.mxu0 %v1095
        %1255 = vmatpush.bf16.msra.mxu0 %v1093
        %1256 = vmatpush.bf16.msra.mxu0 %v1091
        %1257 = vmatpush.bf16.msra.mxu0 %v1089
        %1258 = vmatpush.bf16.msra.mxu0 %v1087
        %1259 = vmatpush.bf16.msra.mxu0 %v1085
        %1260 = vmatpush.bf16.msra.mxu0 %v1083
        %1261 = vmatmul.bf16.gmra.mxu0 %v837
        %v1262 = vpop.f32.mrf.mxu0
        %v1263 = vadd.f32 %v1250, %v1262
        %v1264 = vpop.f32.mrf.mxu0
        %1265 = vdwg.mxu0
        %v1330 = vunpack.c.l.b16 %v332
        %v1331 = vunpack.c.h.b16 %v332
        %v1332 = vunpack.c.l.b16 %v333
        %v1333 = vunpack.c.h.b16 %v333
        %v1334 = vunpack.c.l.b16 %v334
        %v1335 = vunpack.c.h.b16 %v334
        %v1336 = vunpack.c.l.b16 %v335
        %v1337 = vunpack.c.h.b16 %v335
        %v1338 = vunpack.c.l.b16 %v336
        %v1339 = vunpack.c.h.b16 %v336
        %v1340 = vunpack.c.l.b16 %v337
        %v1341 = vunpack.c.h.b16 %v337
        %v1342 = vunpack.c.l.b16 %v338
        %v1343 = vunpack.c.h.b16 %v338
        %v1344 = vunpack.c.l.b16 %v339
        %v1345 = vunpack.c.h.b16 %v339
        %v1346 = vunpack.c.l.b16 %v340
        %v1347 = vunpack.c.h.b16 %v340
        %v1348 = vunpack.c.l.b16 %v341
        %v1349 = vunpack.c.h.b16 %v341
        %v1350 = vunpack.c.l.b16 %v342
        %v1351 = vunpack.c.h.b16 %v342
        %v1352 = vunpack.c.l.b16 %v343
        %v1353 = vunpack.c.h.b16 %v343
        %v1354 = vunpack.c.l.b16 %v344
        %v1355 = vunpack.c.h.b16 %v344
        %v1356 = vunpack.c.l.b16 %v345
        %v1357 = vunpack.c.h.b16 %v345
        %v1358 = vunpack.c.l.b16 %v346
        %v1359 = vunpack.c.h.b16 %v346
        %v1360 = vunpack.c.l.b16 %v347
        %v1361 = vunpack.c.h.b16 %v347
        %v1362 = vunpack.c.l.b16 %v348
        %v1363 = vunpack.c.h.b16 %v348
        %v1364 = vunpack.c.l.b16 %v349
        %v1365 = vunpack.c.h.b16 %v349
        %v1366 = vunpack.c.l.b16 %v350
        %v1367 = vunpack.c.h.b16 %v350
        %v1368 = vunpack.c.l.b16 %v351
        %v1369 = vunpack.c.h.b16 %v351
        %v1370 = vunpack.c.l.b16 %v352
        %v1371 = vunpack.c.h.b16 %v352
        %v1372 = vunpack.c.l.b16 %v353
        %v1373 = vunpack.c.h.b16 %v353
        %v1374 = vunpack.c.l.b16 %v354
        %v1375 = vunpack.c.h.b16 %v354
        %v1376 = vunpack.c.l.b16 %v355
        %v1377 = vunpack.c.h.b16 %v355
        %v1378 = vunpack.c.l.b16 %v356
        %v1379 = vunpack.c.h.b16 %v356
        %v1380 = vunpack.c.l.b16 %v357
        %v1381 = vunpack.c.h.b16 %v357
        %v1382 = vunpack.c.l.b16 %v358
        %v1383 = vunpack.c.h.b16 %v358
        %v1384 = vunpack.c.l.b16 %v359
        %v1385 = vunpack.c.h.b16 %v359
        %v1386 = vunpack.c.l.b16 %v360
        %v1387 = vunpack.c.h.b16 %v360
        %v1388 = vunpack.c.l.b16 %v361
        %v1389 = vunpack.c.h.b16 %v361
        %v1390 = vunpack.c.l.b16 %v362
        %v1391 = vunpack.c.h.b16 %v362
        %v1392 = vunpack.c.l.b16 %v363
        %v1393 = vunpack.c.h.b16 %v363
        %v1394 = vunpack.c.l.b16 %v364
        %v1395 = vunpack.c.h.b16 %v364
        %v1396 = vunpack.c.l.b16 %v365
        %v1397 = vunpack.c.h.b16 %v365
        %v1398 = vunpack.c.l.b16 %v366
        %v1399 = vunpack.c.h.b16 %v366
        %v1400 = vunpack.c.l.b16 %v367
        %v1401 = vunpack.c.h.b16 %v367
        %v1402 = vunpack.c.l.b16 %v368
        %v1403 = vunpack.c.h.b16 %v368
        %v1404 = vunpack.c.l.b16 %v369
        %v1405 = vunpack.c.h.b16 %v369
        %v1406 = vunpack.c.l.b16 %v370
        %v1407 = vunpack.c.h.b16 %v370
        %v1408 = vunpack.c.l.b16 %v371
        %v1409 = vunpack.c.h.b16 %v371
        %v1410 = vunpack.c.l.b16 %v372
        %v1411 = vunpack.c.h.b16 %v372
        %v1412 = vunpack.c.l.b16 %v373
        %v1413 = vunpack.c.h.b16 %v373
        %v1414 = vunpack.c.l.b16 %v374
        %v1415 = vunpack.c.h.b16 %v374
        %v1416 = vunpack.c.l.b16 %v375
        %v1417 = vunpack.c.h.b16 %v375
        %v1418 = vunpack.c.l.b16 %v376
        %v1419 = vunpack.c.h.b16 %v376
        %v1420 = vunpack.c.l.b16 %v377
        %v1421 = vunpack.c.h.b16 %v377
        %v1422 = vunpack.c.l.b16 %v378
        %v1423 = vunpack.c.h.b16 %v378
        %v1424 = vunpack.c.l.b16 %v379
        %v1425 = vunpack.c.h.b16 %v379
        %v1426 = vunpack.c.l.b16 %v380
        %v1427 = vunpack.c.h.b16 %v380
        %v1428 = vunpack.c.l.b16 %v381
        %v1429 = vunpack.c.h.b16 %v381
        %v1430 = vunpack.c.l.b16 %v382
        %v1431 = vunpack.c.h.b16 %v382
        %v1432 = vunpack.c.l.b16 %v383
        %v1433 = vunpack.c.h.b16 %v383
        %v1434 = vunpack.c.l.b16 %v384
        %v1435 = vunpack.c.h.b16 %v384
        %v1436 = vunpack.c.l.b16 %v385
        %v1437 = vunpack.c.h.b16 %v385
        %v1438 = vunpack.c.l.b16 %v386
        %v1439 = vunpack.c.h.b16 %v386
        %v1440 = vunpack.c.l.b16 %v387
        %v1441 = vunpack.c.h.b16 %v387
        %v1442 = vunpack.c.l.b16 %v388
        %v1443 = vunpack.c.h.b16 %v388
        %v1444 = vunpack.c.l.b16 %v389
        %v1445 = vunpack.c.h.b16 %v389
        %v1446 = vunpack.c.l.b16 %v390
        %v1447 = vunpack.c.h.b16 %v390
        %v1448 = vunpack.c.l.b16 %v391
        %v1449 = vunpack.c.h.b16 %v391
        %v1450 = vunpack.c.l.b16 %v392
        %v1451 = vunpack.c.h.b16 %v392
        %v1452 = vunpack.c.l.b16 %v393
        %v1453 = vunpack.c.h.b16 %v393
        %v1454 = vunpack.c.l.b16 %v394
        %v1455 = vunpack.c.h.b16 %v394
        %v1456 = vunpack.c.l.b16 %v395
        %v1457 = vunpack.c.h.b16 %v395
        %v1458 = vpack.c.b16 %v1332, %v1330
        %v1459 = vpack.c.b16 %v1333, %v1331
        %v1460 = vpack.c.b16 %v1336, %v1334
        %v1461 = vpack.c.b16 %v1337, %v1335
        %v1462 = vpack.c.b16 %v1340, %v1338
        %v1463 = vpack.c.b16 %v1341, %v1339
        %v1464 = vpack.c.b16 %v1344, %v1342
        %v1465 = vpack.c.b16 %v1345, %v1343
        %v1466 = vpack.c.b16 %v1348, %v1346
        %v1467 = vpack.c.b16 %v1349, %v1347
        %v1468 = vpack.c.b16 %v1352, %v1350
        %v1469 = vpack.c.b16 %v1353, %v1351
        %v1470 = vpack.c.b16 %v1356, %v1354
        %v1471 = vpack.c.b16 %v1357, %v1355
        %v1472 = vpack.c.b16 %v1360, %v1358
        %v1473 = vpack.c.b16 %v1361, %v1359
        %v1474 = vpack.c.b16 %v1364, %v1362
        %v1475 = vpack.c.b16 %v1365, %v1363
        %v1476 = vpack.c.b16 %v1368, %v1366
        %v1477 = vpack.c.b16 %v1369, %v1367
        %v1478 = vpack.c.b16 %v1372, %v1370
        %v1479 = vpack.c.b16 %v1373, %v1371
        %v1480 = vpack.c.b16 %v1376, %v1374
        %v1481 = vpack.c.b16 %v1377, %v1375
        %v1482 = vpack.c.b16 %v1380, %v1378
        %v1483 = vpack.c.b16 %v1381, %v1379
        %v1484 = vpack.c.b16 %v1384, %v1382
        %v1485 = vpack.c.b16 %v1385, %v1383
        %v1486 = vpack.c.b16 %v1388, %v1386
        %v1487 = vpack.c.b16 %v1389, %v1387
        %v1488 = vpack.c.b16 %v1392, %v1390
        %v1489 = vpack.c.b16 %v1393, %v1391
        %v1490 = vpack.c.b16 %v1396, %v1394
        %v1491 = vpack.c.b16 %v1397, %v1395
        %v1492 = vpack.c.b16 %v1400, %v1398
        %v1493 = vpack.c.b16 %v1401, %v1399
        %v1494 = vpack.c.b16 %v1404, %v1402
        %v1495 = vpack.c.b16 %v1405, %v1403
        %v1496 = vpack.c.b16 %v1408, %v1406
        %v1497 = vpack.c.b16 %v1409, %v1407
        %v1498 = vpack.c.b16 %v1412, %v1410
        %v1499 = vpack.c.b16 %v1413, %v1411
        %v1500 = vpack.c.b16 %v1416, %v1414
        %v1501 = vpack.c.b16 %v1417, %v1415
        %v1502 = vpack.c.b16 %v1420, %v1418
        %v1503 = vpack.c.b16 %v1421, %v1419
        %v1504 = vpack.c.b16 %v1424, %v1422
        %v1505 = vpack.c.b16 %v1425, %v1423
        %v1506 = vpack.c.b16 %v1428, %v1426
        %v1507 = vpack.c.b16 %v1429, %v1427
        %v1508 = vpack.c.b16 %v1432, %v1430
        %v1509 = vpack.c.b16 %v1433, %v1431
        %v1510 = vpack.c.b16 %v1436, %v1434
        %v1511 = vpack.c.b16 %v1437, %v1435
        %v1512 = vpack.c.b16 %v1440, %v1438
        %v1513 = vpack.c.b16 %v1441, %v1439
        %v1514 = vpack.c.b16 %v1444, %v1442
        %v1515 = vpack.c.b16 %v1445, %v1443
        %v1516 = vpack.c.b16 %v1448, %v1446
        %v1517 = vpack.c.b16 %v1449, %v1447
        %v1518 = vpack.c.b16 %v1452, %v1450
        %v1519 = vpack.c.b16 %v1453, %v1451
        %v1520 = vpack.c.b16 %v1456, %v1454
        %v1521 = vpack.c.b16 %v1457, %v1455
        %1586 = vmatpush.bf16.msra.mxu0 %v1472
        %1587 = vmatpush.bf16.msra.mxu0 %v1470
        %1588 = vmatpush.bf16.msra.mxu0 %v1468
        %1589 = vmatpush.bf16.msra.mxu0 %v1466
        %1590 = vmatpush.bf16.msra.mxu0 %v1464
        %1591 = vmatpush.bf16.msra.mxu0 %v1462
        %1592 = vmatpush.bf16.msra.mxu0 %v1460
        %1593 = vmatpush.bf16.msra.mxu0 %v1458
        %1594 = vmatmul.bf16.gmra.mxu0 %v834
        %v1595 = vpop.f32.mrf.mxu0
        %v1596 = vadd.f32 %v798, %v1595
        %v1597 = vpop.f32.mrf.mxu0
        %1598 = vdwg.mxu0
        %1599 = vmatpush.bf16.msra.mxu0 %v1488
        %1600 = vmatpush.bf16.msra.mxu0 %v1486
        %1601 = vmatpush.bf16.msra.mxu0 %v1484
        %1602 = vmatpush.bf16.msra.mxu0 %v1482
        %1603 = vmatpush.bf16.msra.mxu0 %v1480
        %1604 = vmatpush.bf16.msra.mxu0 %v1478
        %1605 = vmatpush.bf16.msra.mxu0 %v1476
        %1606 = vmatpush.bf16.msra.mxu0 %v1474
        %1607 = vmatmul.bf16.gmra.mxu0 %v835
        %v1608 = vpop.f32.mrf.mxu0
        %v1609 = vadd.f32 %v1596, %v1608
        %v1610 = vpop.f32.mrf.mxu0
        %1611 = vdwg.mxu0
        %1612 = vmatpush.bf16.msra.mxu0 %v1504
        %1613 = vmatpush.bf16.msra.mxu0 %v1502
        %1614 = vmatpush.bf16.msra.mxu0 %v1500
        %1615 = vmatpush.bf16.msra.mxu0 %v1498
        %1616 = vmatpush.bf16.msra.mxu0 %v1496
        %1617 = vmatpush.bf16.msra.mxu0 %v1494
        %1618 = vmatpush.bf16.msra.mxu0 %v1492
        %1619 = vmatpush.bf16.msra.mxu0 %v1490
        %1620 = vmatmul.bf16.gmra.mxu0 %v836
        %v1621 = vpop.f32.mrf.mxu0
        %v1622 = vadd.f32 %v1609, %v1621
        %v1623 = vpop.f32.mrf.mxu0
        %1624 = vdwg.mxu0
        %1625 = vmatpush.bf16.msra.mxu0 %v1520
        %1626 = vmatpush.bf16.msra.mxu0 %v1518
        %1627 = vmatpush.bf16.msra.mxu0 %v1516
        %1628 = vmatpush.bf16.msra.mxu0 %v1514
        %1629 = vmatpush.bf16.msra.mxu0 %v1512
        %1630 = vmatpush.bf16.msra.mxu0 %v1510
        %1631 = vmatpush.bf16.msra.mxu0 %v1508
        %1632 = vmatpush.bf16.msra.mxu0 %v1506
        %1633 = vmatmul.bf16.gmra.mxu0 %v837
        %v1634 = vpop.f32.mrf.mxu0
        %v1635 = vadd.f32 %v1622, %v1634
        %v1636 = vpop.f32.mrf.mxu0
        %1637 = vdwg.mxu0
        %1638 = vmatpush.bf16.msra.mxu0 %v1473
        %1639 = vmatpush.bf16.msra.mxu0 %v1471
        %1640 = vmatpush.bf16.msra.mxu0 %v1469
        %1641 = vmatpush.bf16.msra.mxu0 %v1467
        %1642 = vmatpush.bf16.msra.mxu0 %v1465
        %1643 = vmatpush.bf16.msra.mxu0 %v1463
        %1644 = vmatpush.bf16.msra.mxu0 %v1461
        %1645 = vmatpush.bf16.msra.mxu0 %v1459
        %1646 = vmatmul.bf16.gmra.mxu0 %v834
        %v1647 = vpop.f32.mrf.mxu0
        %v1648 = vadd.f32 %v799, %v1647
        %v1649 = vpop.f32.mrf.mxu0
        %1650 = vdwg.mxu0
        %1651 = vmatpush.bf16.msra.mxu0 %v1489
        %1652 = vmatpush.bf16.msra.mxu0 %v1487
        %1653 = vmatpush.bf16.msra.mxu0 %v1485
        %1654 = vmatpush.bf16.msra.mxu0 %v1483
        %1655 = vmatpush.bf16.msra.mxu0 %v1481
        %1656 = vmatpush.bf16.msra.mxu0 %v1479
        %1657 = vmatpush.bf16.msra.mxu0 %v1477
        %1658 = vmatpush.bf16.msra.mxu0 %v1475
        %1659 = vmatmul.bf16.gmra.mxu0 %v835
        %v1660 = vpop.f32.mrf.mxu0
        %v1661 = vadd.f32 %v1648, %v1660
        %v1662 = vpop.f32.mrf.mxu0
        %1663 = vdwg.mxu0
        %1664 = vmatpush.bf16.msra.mxu0 %v1505
        %1665 = vmatpush.bf16.msra.mxu0 %v1503
        %1666 = vmatpush.bf16.msra.mxu0 %v1501
        %1667 = vmatpush.bf16.msra.mxu0 %v1499
        %1668 = vmatpush.bf16.msra.mxu0 %v1497
        %1669 = vmatpush.bf16.msra.mxu0 %v1495
        %1670 = vmatpush.bf16.msra.mxu0 %v1493
        %1671 = vmatpush.bf16.msra.mxu0 %v1491
        %1672 = vmatmul.bf16.gmra.mxu0 %v836
        %v1673 = vpop.f32.mrf.mxu0
        %v1674 = vadd.f32 %v1661, %v1673
        %v1675 = vpop.f32.mrf.mxu0
        %1676 = vdwg.mxu0
        %1677 = vmatpush.bf16.msra.mxu0 %v1521
        %1678 = vmatpush.bf16.msra.mxu0 %v1519
        %1679 = vmatpush.bf16.msra.mxu0 %v1517
        %1680 = vmatpush.bf16.msra.mxu0 %v1515
        %1681 = vmatpush.bf16.msra.mxu0 %v1513
        %1682 = vmatpush.bf16.msra.mxu0 %v1511
        %1683 = vmatpush.bf16.msra.mxu0 %v1509
        %1684 = vmatpush.bf16.msra.mxu0 %v1507
        %1685 = vmatmul.bf16.gmra.mxu0 %v837
        %v1686 = vpop.f32.mrf.mxu0
        %v1687 = vadd.f32 %v1674, %v1686
        %v1688 = vpop.f32.mrf.mxu0
        %1689 = vdwg.mxu0
        %v1754 = vunpack.c.l.b16 %v396
        %v1755 = vunpack.c.h.b16 %v396
        %v1756 = vunpack.c.l.b16 %v397
        %v1757 = vunpack.c.h.b16 %v397
        %v1758 = vunpack.c.l.b16 %v398
        %v1759 = vunpack.c.h.b16 %v398
        %v1760 = vunpack.c.l.b16 %v399
        %v1761 = vunpack.c.h.b16 %v399
        %v1762 = vunpack.c.l.b16 %v400
        %v1763 = vunpack.c.h.b16 %v400
        %v1764 = vunpack.c.l.b16 %v401
        %v1765 = vunpack.c.h.b16 %v401
        %v1766 = vunpack.c.l.b16 %v402
        %v1767 = vunpack.c.h.b16 %v402
        %v1768 = vunpack.c.l.b16 %v403
        %v1769 = vunpack.c.h.b16 %v403
        %v1770 = vunpack.c.l.b16 %v404
        %v1771 = vunpack.c.h.b16 %v404
        %v1772 = vunpack.c.l.b16 %v405
        %v1773 = vunpack.c.h.b16 %v405
        %v1774 = vunpack.c.l.b16 %v406
        %v1775 = vunpack.c.h.b16 %v406
        %v1776 = vunpack.c.l.b16 %v407
        %v1777 = vunpack.c.h.b16 %v407
        %v1778 = vunpack.c.l.b16 %v408
        %v1779 = vunpack.c.h.b16 %v408
        %v1780 = vunpack.c.l.b16 %v409
        %v1781 = vunpack.c.h.b16 %v409
        %v1782 = vunpack.c.l.b16 %v410
        %v1783 = vunpack.c.h.b16 %v410
        %v1784 = vunpack.c.l.b16 %v411
        %v1785 = vunpack.c.h.b16 %v411
        %v1786 = vunpack.c.l.b16 %v412
        %v1787 = vunpack.c.h.b16 %v412
        %v1788 = vunpack.c.l.b16 %v413
        %v1789 = vunpack.c.h.b16 %v413
        %v1790 = vunpack.c.l.b16 %v414
        %v1791 = vunpack.c.h.b16 %v414
        %v1792 = vunpack.c.l.b16 %v415
        %v1793 = vunpack.c.h.b16 %v415
        %v1794 = vunpack.c.l.b16 %v416
        %v1795 = vunpack.c.h.b16 %v416
        %v1796 = vunpack.c.l.b16 %v417
        %v1797 = vunpack.c.h.b16 %v417
        %v1798 = vunpack.c.l.b16 %v418
        %v1799 = vunpack.c.h.b16 %v418
        %v1800 = vunpack.c.l.b16 %v419
        %v1801 = vunpack.c.h.b16 %v419
        %v1802 = vunpack.c.l.b16 %v420
        %v1803 = vunpack.c.h.b16 %v420
        %v1804 = vunpack.c.l.b16 %v421
        %v1805 = vunpack.c.h.b16 %v421
        %v1806 = vunpack.c.l.b16 %v422
        %v1807 = vunpack.c.h.b16 %v422
        %v1808 = vunpack.c.l.b16 %v423
        %v1809 = vunpack.c.h.b16 %v423
        %v1810 = vunpack.c.l.b16 %v424
        %v1811 = vunpack.c.h.b16 %v424
        %v1812 = vunpack.c.l.b16 %v425
        %v1813 = vunpack.c.h.b16 %v425
        %v1814 = vunpack.c.l.b16 %v426
        %v1815 = vunpack.c.h.b16 %v426
        %v1816 = vunpack.c.l.b16 %v427
        %v1817 = vunpack.c.h.b16 %v427
        %v1818 = vunpack.c.l.b16 %v428
        %v1819 = vunpack.c.h.b16 %v428
        %v1820 = vunpack.c.l.b16 %v429
        %v1821 = vunpack.c.h.b16 %v429
        %v1822 = vunpack.c.l.b16 %v430
        %v1823 = vunpack.c.h.b16 %v430
        %v1824 = vunpack.c.l.b16 %v431
        %v1825 = vunpack.c.h.b16 %v431
        %v1826 = vunpack.c.l.b16 %v432
        %v1827 = vunpack.c.h.b16 %v432
        %v1828 = vunpack.c.l.b16 %v433
        %v1829 = vunpack.c.h.b16 %v433
        %v1830 = vunpack.c.l.b16 %v434
        %v1831 = vunpack.c.h.b16 %v434
        %v1832 = vunpack.c.l.b16 %v435
        %v1833 = vunpack.c.h.b16 %v435
        %v1834 = vunpack.c.l.b16 %v436
        %v1835 = vunpack.c.h.b16 %v436
        %v1836 = vunpack.c.l.b16 %v437
        %v1837 = vunpack.c.h.b16 %v437
        %v1838 = vunpack.c.l.b16 %v438
        %v1839 = vunpack.c.h.b16 %v438
        %v1840 = vunpack.c.l.b16 %v439
        %v1841 = vunpack.c.h.b16 %v439
        %v1842 = vunpack.c.l.b16 %v440
        %v1843 = vunpack.c.h.b16 %v440
        %v1844 = vunpack.c.l.b16 %v441
        %v1845 = vunpack.c.h.b16 %v441
        %v1846 = vunpack.c.l.b16 %v442
        %v1847 = vunpack.c.h.b16 %v442
        %v1848 = vunpack.c.l.b16 %v443
        %v1849 = vunpack.c.h.b16 %v443
        %v1850 = vunpack.c.l.b16 %v444
        %v1851 = vunpack.c.h.b16 %v444
        %v1852 = vunpack.c.l.b16 %v445
        %v1853 = vunpack.c.h.b16 %v445
        %v1854 = vunpack.c.l.b16 %v446
        %v1855 = vunpack.c.h.b16 %v446
        %v1856 = vunpack.c.l.b16 %v447
        %v1857 = vunpack.c.h.b16 %v447
        %v1858 = vunpack.c.l.b16 %v448
        %v1859 = vunpack.c.h.b16 %v448
        %v1860 = vunpack.c.l.b16 %v449
        %v1861 = vunpack.c.h.b16 %v449
        %v1862 = vunpack.c.l.b16 %v450
        %v1863 = vunpack.c.h.b16 %v450
        %v1864 = vunpack.c.l.b16 %v451
        %v1865 = vunpack.c.h.b16 %v451
        %v1866 = vunpack.c.l.b16 %v452
        %v1867 = vunpack.c.h.b16 %v452
        %v1868 = vunpack.c.l.b16 %v453
        %v1869 = vunpack.c.h.b16 %v453
        %v1870 = vunpack.c.l.b16 %v454
        %v1871 = vunpack.c.h.b16 %v454
        %v1872 = vunpack.c.l.b16 %v455
        %v1873 = vunpack.c.h.b16 %v455
        %v1874 = vunpack.c.l.b16 %v456
        %v1875 = vunpack.c.h.b16 %v456
        %v1876 = vunpack.c.l.b16 %v457
        %v1877 = vunpack.c.h.b16 %v457
        %v1878 = vunpack.c.l.b16 %v458
        %v1879 = vunpack.c.h.b16 %v458
        %v1880 = vunpack.c.l.b16 %v459
        %v1881 = vunpack.c.h.b16 %v459
        %v1882 = vpack.c.b16 %v1756, %v1754
        %v1883 = vpack.c.b16 %v1757, %v1755
        %v1884 = vpack.c.b16 %v1760, %v1758
        %v1885 = vpack.c.b16 %v1761, %v1759
        %v1886 = vpack.c.b16 %v1764, %v1762
        %v1887 = vpack.c.b16 %v1765, %v1763
        %v1888 = vpack.c.b16 %v1768, %v1766
        %v1889 = vpack.c.b16 %v1769, %v1767
        %v1890 = vpack.c.b16 %v1772, %v1770
        %v1891 = vpack.c.b16 %v1773, %v1771
        %v1892 = vpack.c.b16 %v1776, %v1774
        %v1893 = vpack.c.b16 %v1777, %v1775
        %v1894 = vpack.c.b16 %v1780, %v1778
        %v1895 = vpack.c.b16 %v1781, %v1779
        %v1896 = vpack.c.b16 %v1784, %v1782
        %v1897 = vpack.c.b16 %v1785, %v1783
        %v1898 = vpack.c.b16 %v1788, %v1786
        %v1899 = vpack.c.b16 %v1789, %v1787
        %v1900 = vpack.c.b16 %v1792, %v1790
        %v1901 = vpack.c.b16 %v1793, %v1791
        %v1902 = vpack.c.b16 %v1796, %v1794
        %v1903 = vpack.c.b16 %v1797, %v1795
        %v1904 = vpack.c.b16 %v1800, %v1798
        %v1905 = vpack.c.b16 %v1801, %v1799
        %v1906 = vpack.c.b16 %v1804, %v1802
        %v1907 = vpack.c.b16 %v1805, %v1803
        %v1908 = vpack.c.b16 %v1808, %v1806
        %v1909 = vpack.c.b16 %v1809, %v1807
        %v1910 = vpack.c.b16 %v1812, %v1810
        %v1911 = vpack.c.b16 %v1813, %v1811
        %v1912 = vpack.c.b16 %v1816, %v1814
        %v1913 = vpack.c.b16 %v1817, %v1815
        %v1914 = vpack.c.b16 %v1820, %v1818
        %v1915 = vpack.c.b16 %v1821, %v1819
        %v1916 = vpack.c.b16 %v1824, %v1822
        %v1917 = vpack.c.b16 %v1825, %v1823
        %v1918 = vpack.c.b16 %v1828, %v1826
        %v1919 = vpack.c.b16 %v1829, %v1827
        %v1920 = vpack.c.b16 %v1832, %v1830
        %v1921 = vpack.c.b16 %v1833, %v1831
        %v1922 = vpack.c.b16 %v1836, %v1834
        %v1923 = vpack.c.b16 %v1837, %v1835
        %v1924 = vpack.c.b16 %v1840, %v1838
        %v1925 = vpack.c.b16 %v1841, %v1839
        %v1926 = vpack.c.b16 %v1844, %v1842
        %v1927 = vpack.c.b16 %v1845, %v1843
        %v1928 = vpack.c.b16 %v1848, %v1846
        %v1929 = vpack.c.b16 %v1849, %v1847
        %v1930 = vpack.c.b16 %v1852, %v1850
        %v1931 = vpack.c.b16 %v1853, %v1851
        %v1932 = vpack.c.b16 %v1856, %v1854
        %v1933 = vpack.c.b16 %v1857, %v1855
        %v1934 = vpack.c.b16 %v1860, %v1858
        %v1935 = vpack.c.b16 %v1861, %v1859
        %v1936 = vpack.c.b16 %v1864, %v1862
        %v1937 = vpack.c.b16 %v1865, %v1863
        %v1938 = vpack.c.b16 %v1868, %v1866
        %v1939 = vpack.c.b16 %v1869, %v1867
        %v1940 = vpack.c.b16 %v1872, %v1870
        %v1941 = vpack.c.b16 %v1873, %v1871
        %v1942 = vpack.c.b16 %v1876, %v1874
        %v1943 = vpack.c.b16 %v1877, %v1875
        %v1944 = vpack.c.b16 %v1880, %v1878
        %v1945 = vpack.c.b16 %v1881, %v1879
        %2010 = vmatpush.bf16.msra.mxu0 %v1896
        %2011 = vmatpush.bf16.msra.mxu0 %v1894
        %2012 = vmatpush.bf16.msra.mxu0 %v1892
        %2013 = vmatpush.bf16.msra.mxu0 %v1890
        %2014 = vmatpush.bf16.msra.mxu0 %v1888
        %2015 = vmatpush.bf16.msra.mxu0 %v1886
        %2016 = vmatpush.bf16.msra.mxu0 %v1884
        %2017 = vmatpush.bf16.msra.mxu0 %v1882
        %2018 = vmatmul.bf16.gmra.mxu0 %v834
        %v2019 = vpop.f32.mrf.mxu0
        %v2020 = vadd.f32 %v800, %v2019
        %v2021 = vpop.f32.mrf.mxu0
        %2022 = vdwg.mxu0
        %2023 = vmatpush.bf16.msra.mxu0 %v1912
        %2024 = vmatpush.bf16.msra.mxu0 %v1910
        %2025 = vmatpush.bf16.msra.mxu0 %v1908
        %2026 = vmatpush.bf16.msra.mxu0 %v1906
        %2027 = vmatpush.bf16.msra.mxu0 %v1904
        %2028 = vmatpush.bf16.msra.mxu0 %v1902
        %2029 = vmatpush.bf16.msra.mxu0 %v1900
        %2030 = vmatpush.bf16.msra.mxu0 %v1898
        %2031 = vmatmul.bf16.gmra.mxu0 %v835
        %v2032 = vpop.f32.mrf.mxu0
        %v2033 = vadd.f32 %v2020, %v2032
        %v2034 = vpop.f32.mrf.mxu0
        %2035 = vdwg.mxu0
        %2036 = vmatpush.bf16.msra.mxu0 %v1928
        %2037 = vmatpush.bf16.msra.mxu0 %v1926
        %2038 = vmatpush.bf16.msra.mxu0 %v1924
        %2039 = vmatpush.bf16.msra.mxu0 %v1922
        %2040 = vmatpush.bf16.msra.mxu0 %v1920
        %2041 = vmatpush.bf16.msra.mxu0 %v1918
        %2042 = vmatpush.bf16.msra.mxu0 %v1916
        %2043 = vmatpush.bf16.msra.mxu0 %v1914
        %2044 = vmatmul.bf16.gmra.mxu0 %v836
        %v2045 = vpop.f32.mrf.mxu0
        %v2046 = vadd.f32 %v2033, %v2045
        %v2047 = vpop.f32.mrf.mxu0
        %2048 = vdwg.mxu0
        %2049 = vmatpush.bf16.msra.mxu0 %v1944
        %2050 = vmatpush.bf16.msra.mxu0 %v1942
        %2051 = vmatpush.bf16.msra.mxu0 %v1940
        %2052 = vmatpush.bf16.msra.mxu0 %v1938
        %2053 = vmatpush.bf16.msra.mxu0 %v1936
        %2054 = vmatpush.bf16.msra.mxu0 %v1934
        %2055 = vmatpush.bf16.msra.mxu0 %v1932
        %2056 = vmatpush.bf16.msra.mxu0 %v1930
        %2057 = vmatmul.bf16.gmra.mxu0 %v837
        %v2058 = vpop.f32.mrf.mxu0
        %v2059 = vadd.f32 %v2046, %v2058
        %v2060 = vpop.f32.mrf.mxu0
        %2061 = vdwg.mxu0
        %2062 = vmatpush.bf16.msra.mxu0 %v1897
        %2063 = vmatpush.bf16.msra.mxu0 %v1895
        %2064 = vmatpush.bf16.msra.mxu0 %v1893
        %2065 = vmatpush.bf16.msra.mxu0 %v1891
        %2066 = vmatpush.bf16.msra.mxu0 %v1889
        %2067 = vmatpush.bf16.msra.mxu0 %v1887
        %2068 = vmatpush.bf16.msra.mxu0 %v1885
        %2069 = vmatpush.bf16.msra.mxu0 %v1883
        %2070 = vmatmul.bf16.gmra.mxu0 %v834
        %v2071 = vpop.f32.mrf.mxu0
        %v2072 = vadd.f32 %v801, %v2071
        %v2073 = vpop.f32.mrf.mxu0
        %2074 = vdwg.mxu0
        %2075 = vmatpush.bf16.msra.mxu0 %v1913
        %2076 = vmatpush.bf16.msra.mxu0 %v1911
        %2077 = vmatpush.bf16.msra.mxu0 %v1909
        %2078 = vmatpush.bf16.msra.mxu0 %v1907
        %2079 = vmatpush.bf16.msra.mxu0 %v1905
        %2080 = vmatpush.bf16.msra.mxu0 %v1903
        %2081 = vmatpush.bf16.msra.mxu0 %v1901
        %2082 = vmatpush.bf16.msra.mxu0 %v1899
        %2083 = vmatmul.bf16.gmra.mxu0 %v835
        %v2084 = vpop.f32.mrf.mxu0
        %v2085 = vadd.f32 %v2072, %v2084
        %v2086 = vpop.f32.mrf.mxu0
        %2087 = vdwg.mxu0
        %2088 = vmatpush.bf16.msra.mxu0 %v1929
        %2089 = vmatpush.bf16.msra.mxu0 %v1927
        %2090 = vmatpush.bf16.msra.mxu0 %v1925
        %2091 = vmatpush.bf16.msra.mxu0 %v1923
        %2092 = vmatpush.bf16.msra.mxu0 %v1921
        %2093 = vmatpush.bf16.msra.mxu0 %v1919
        %2094 = vmatpush.bf16.msra.mxu0 %v1917
        %2095 = vmatpush.bf16.msra.mxu0 %v1915
        %2096 = vmatmul.bf16.gmra.mxu0 %v836
        %v2097 = vpop.f32.mrf.mxu0
        %v2098 = vadd.f32 %v2085, %v2097
        %v2099 = vpop.f32.mrf.mxu0
        %2100 = vdwg.mxu0
        %2101 = vmatpush.bf16.msra.mxu0 %v1945
        %2102 = vmatpush.bf16.msra.mxu0 %v1943
        %2103 = vmatpush.bf16.msra.mxu0 %v1941
        %2104 = vmatpush.bf16.msra.mxu0 %v1939
        %2105 = vmatpush.bf16.msra.mxu0 %v1937
        %2106 = vmatpush.bf16.msra.mxu0 %v1935
        %2107 = vmatpush.bf16.msra.mxu0 %v1933
        %2108 = vmatpush.bf16.msra.mxu0 %v1931
        %2109 = vmatmul.bf16.gmra.mxu0 %v837
        %v2110 = vpop.f32.mrf.mxu0
        %v2111 = vadd.f32 %v2098, %v2110
        %v2112 = vpop.f32.mrf.mxu0
        %2113 = vdwg.mxu0
        %v2178 = vunpack.c.l.b16 %v460
        %v2179 = vunpack.c.h.b16 %v460
        %v2180 = vunpack.c.l.b16 %v461
        %v2181 = vunpack.c.h.b16 %v461
        %v2182 = vunpack.c.l.b16 %v462
        %v2183 = vunpack.c.h.b16 %v462
        %v2184 = vunpack.c.l.b16 %v463
        %v2185 = vunpack.c.h.b16 %v463
        %v2186 = vunpack.c.l.b16 %v464
        %v2187 = vunpack.c.h.b16 %v464
        %v2188 = vunpack.c.l.b16 %v465
        %v2189 = vunpack.c.h.b16 %v465
        %v2190 = vunpack.c.l.b16 %v466
        %v2191 = vunpack.c.h.b16 %v466
        %v2192 = vunpack.c.l.b16 %v467
        %v2193 = vunpack.c.h.b16 %v467
        %v2194 = vunpack.c.l.b16 %v468
        %v2195 = vunpack.c.h.b16 %v468
        %v2196 = vunpack.c.l.b16 %v469
        %v2197 = vunpack.c.h.b16 %v469
        %v2198 = vunpack.c.l.b16 %v470
        %v2199 = vunpack.c.h.b16 %v470
        %v2200 = vunpack.c.l.b16 %v471
        %v2201 = vunpack.c.h.b16 %v471
        %v2202 = vunpack.c.l.b16 %v472
        %v2203 = vunpack.c.h.b16 %v472
        %v2204 = vunpack.c.l.b16 %v473
        %v2205 = vunpack.c.h.b16 %v473
        %v2206 = vunpack.c.l.b16 %v474
        %v2207 = vunpack.c.h.b16 %v474
        %v2208 = vunpack.c.l.b16 %v475
        %v2209 = vunpack.c.h.b16 %v475
        %v2210 = vunpack.c.l.b16 %v476
        %v2211 = vunpack.c.h.b16 %v476
        %v2212 = vunpack.c.l.b16 %v477
        %v2213 = vunpack.c.h.b16 %v477
        %v2214 = vunpack.c.l.b16 %v478
        %v2215 = vunpack.c.h.b16 %v478
        %v2216 = vunpack.c.l.b16 %v479
        %v2217 = vunpack.c.h.b16 %v479
        %v2218 = vunpack.c.l.b16 %v480
        %v2219 = vunpack.c.h.b16 %v480
        %v2220 = vunpack.c.l.b16 %v481
        %v2221 = vunpack.c.h.b16 %v481
        %v2222 = vunpack.c.l.b16 %v482
        %v2223 = vunpack.c.h.b16 %v482
        %v2224 = vunpack.c.l.b16 %v483
        %v2225 = vunpack.c.h.b16 %v483
        %v2226 = vunpack.c.l.b16 %v484
        %v2227 = vunpack.c.h.b16 %v484
        %v2228 = vunpack.c.l.b16 %v485
        %v2229 = vunpack.c.h.b16 %v485
        %v2230 = vunpack.c.l.b16 %v486
        %v2231 = vunpack.c.h.b16 %v486
        %v2232 = vunpack.c.l.b16 %v487
        %v2233 = vunpack.c.h.b16 %v487
        %v2234 = vunpack.c.l.b16 %v488
        %v2235 = vunpack.c.h.b16 %v488
        %v2236 = vunpack.c.l.b16 %v489
        %v2237 = vunpack.c.h.b16 %v489
        %v2238 = vunpack.c.l.b16 %v490
        %v2239 = vunpack.c.h.b16 %v490
        %v2240 = vunpack.c.l.b16 %v491
        %v2241 = vunpack.c.h.b16 %v491
        %v2242 = vunpack.c.l.b16 %v492
        %v2243 = vunpack.c.h.b16 %v492
        %v2244 = vunpack.c.l.b16 %v493
        %v2245 = vunpack.c.h.b16 %v493
        %v2246 = vunpack.c.l.b16 %v494
        %v2247 = vunpack.c.h.b16 %v494
        %v2248 = vunpack.c.l.b16 %v495
        %v2249 = vunpack.c.h.b16 %v495
        %v2250 = vunpack.c.l.b16 %v496
        %v2251 = vunpack.c.h.b16 %v496
        %v2252 = vunpack.c.l.b16 %v497
        %v2253 = vunpack.c.h.b16 %v497
        %v2254 = vunpack.c.l.b16 %v498
        %v2255 = vunpack.c.h.b16 %v498
        %v2256 = vunpack.c.l.b16 %v499
        %v2257 = vunpack.c.h.b16 %v499
        %v2258 = vunpack.c.l.b16 %v500
        %v2259 = vunpack.c.h.b16 %v500
        %v2260 = vunpack.c.l.b16 %v501
        %v2261 = vunpack.c.h.b16 %v501
        %v2262 = vunpack.c.l.b16 %v502
        %v2263 = vunpack.c.h.b16 %v502
        %v2264 = vunpack.c.l.b16 %v503
        %v2265 = vunpack.c.h.b16 %v503
        %v2266 = vunpack.c.l.b16 %v504
        %v2267 = vunpack.c.h.b16 %v504
        %v2268 = vunpack.c.l.b16 %v505
        %v2269 = vunpack.c.h.b16 %v505
        %v2270 = vunpack.c.l.b16 %v506
        %v2271 = vunpack.c.h.b16 %v506
        %v2272 = vunpack.c.l.b16 %v507
        %v2273 = vunpack.c.h.b16 %v507
        %v2274 = vunpack.c.l.b16 %v508
        %v2275 = vunpack.c.h.b16 %v508
        %v2276 = vunpack.c.l.b16 %v509
        %v2277 = vunpack.c.h.b16 %v509
        %v2278 = vunpack.c.l.b16 %v510
        %v2279 = vunpack.c.h.b16 %v510
        %v2280 = vunpack.c.l.b16 %v511
        %v2281 = vunpack.c.h.b16 %v511
        %v2282 = vunpack.c.l.b16 %v512
        %v2283 = vunpack.c.h.b16 %v512
        %v2284 = vunpack.c.l.b16 %v513
        %v2285 = vunpack.c.h.b16 %v513
        %v2286 = vunpack.c.l.b16 %v514
        %v2287 = vunpack.c.h.b16 %v514
        %v2288 = vunpack.c.l.b16 %v515
        %v2289 = vunpack.c.h.b16 %v515
        %v2290 = vunpack.c.l.b16 %v516
        %v2291 = vunpack.c.h.b16 %v516
        %v2292 = vunpack.c.l.b16 %v517
        %v2293 = vunpack.c.h.b16 %v517
        %v2294 = vunpack.c.l.b16 %v518
        %v2295 = vunpack.c.h.b16 %v518
        %v2296 = vunpack.c.l.b16 %v519
        %v2297 = vunpack.c.h.b16 %v519
        %v2298 = vunpack.c.l.b16 %v520
        %v2299 = vunpack.c.h.b16 %v520
        %v2300 = vunpack.c.l.b16 %v521
        %v2301 = vunpack.c.h.b16 %v521
        %v2302 = vunpack.c.l.b16 %v522
        %v2303 = vunpack.c.h.b16 %v522
        %v2304 = vunpack.c.l.b16 %v523
        %v2305 = vunpack.c.h.b16 %v523
        %v2306 = vpack.c.b16 %v2180, %v2178
        %v2307 = vpack.c.b16 %v2181, %v2179
        %v2308 = vpack.c.b16 %v2184, %v2182
        %v2309 = vpack.c.b16 %v2185, %v2183
        %v2310 = vpack.c.b16 %v2188, %v2186
        %v2311 = vpack.c.b16 %v2189, %v2187
        %v2312 = vpack.c.b16 %v2192, %v2190
        %v2313 = vpack.c.b16 %v2193, %v2191
        %v2314 = vpack.c.b16 %v2196, %v2194
        %v2315 = vpack.c.b16 %v2197, %v2195
        %v2316 = vpack.c.b16 %v2200, %v2198
        %v2317 = vpack.c.b16 %v2201, %v2199
        %v2318 = vpack.c.b16 %v2204, %v2202
        %v2319 = vpack.c.b16 %v2205, %v2203
        %v2320 = vpack.c.b16 %v2208, %v2206
        %v2321 = vpack.c.b16 %v2209, %v2207
        %v2322 = vpack.c.b16 %v2212, %v2210
        %v2323 = vpack.c.b16 %v2213, %v2211
        %v2324 = vpack.c.b16 %v2216, %v2214
        %v2325 = vpack.c.b16 %v2217, %v2215
        %v2326 = vpack.c.b16 %v2220, %v2218
        %v2327 = vpack.c.b16 %v2221, %v2219
        %v2328 = vpack.c.b16 %v2224, %v2222
        %v2329 = vpack.c.b16 %v2225, %v2223
        %v2330 = vpack.c.b16 %v2228, %v2226
        %v2331 = vpack.c.b16 %v2229, %v2227
        %v2332 = vpack.c.b16 %v2232, %v2230
        %v2333 = vpack.c.b16 %v2233, %v2231
        %v2334 = vpack.c.b16 %v2236, %v2234
        %v2335 = vpack.c.b16 %v2237, %v2235
        %v2336 = vpack.c.b16 %v2240, %v2238
        %v2337 = vpack.c.b16 %v2241, %v2239
        %v2338 = vpack.c.b16 %v2244, %v2242
        %v2339 = vpack.c.b16 %v2245, %v2243
        %v2340 = vpack.c.b16 %v2248, %v2246
        %v2341 = vpack.c.b16 %v2249, %v2247
        %v2342 = vpack.c.b16 %v2252, %v2250
        %v2343 = vpack.c.b16 %v2253, %v2251
        %v2344 = vpack.c.b16 %v2256, %v2254
        %v2345 = vpack.c.b16 %v2257, %v2255
        %v2346 = vpack.c.b16 %v2260, %v2258
        %v2347 = vpack.c.b16 %v2261, %v2259
        %v2348 = vpack.c.b16 %v2264, %v2262
        %v2349 = vpack.c.b16 %v2265, %v2263
        %v2350 = vpack.c.b16 %v2268, %v2266
        %v2351 = vpack.c.b16 %v2269, %v2267
        %v2352 = vpack.c.b16 %v2272, %v2270
        %v2353 = vpack.c.b16 %v2273, %v2271
        %v2354 = vpack.c.b16 %v2276, %v2274
        %v2355 = vpack.c.b16 %v2277, %v2275
        %v2356 = vpack.c.b16 %v2280, %v2278
        %v2357 = vpack.c.b16 %v2281, %v2279
        %v2358 = vpack.c.b16 %v2284, %v2282
        %v2359 = vpack.c.b16 %v2285, %v2283
        %v2360 = vpack.c.b16 %v2288, %v2286
        %v2361 = vpack.c.b16 %v2289, %v2287
        %v2362 = vpack.c.b16 %v2292, %v2290
        %v2363 = vpack.c.b16 %v2293, %v2291
        %v2364 = vpack.c.b16 %v2296, %v2294
        %v2365 = vpack.c.b16 %v2297, %v2295
        %v2366 = vpack.c.b16 %v2300, %v2298
        %v2367 = vpack.c.b16 %v2301, %v2299
        %v2368 = vpack.c.b16 %v2304, %v2302
        %v2369 = vpack.c.b16 %v2305, %v2303
        %2434 = vmatpush.bf16.msra.mxu0 %v2320
        %2435 = vmatpush.bf16.msra.mxu0 %v2318
        %2436 = vmatpush.bf16.msra.mxu0 %v2316
        %2437 = vmatpush.bf16.msra.mxu0 %v2314
        %2438 = vmatpush.bf16.msra.mxu0 %v2312
        %2439 = vmatpush.bf16.msra.mxu0 %v2310
        %2440 = vmatpush.bf16.msra.mxu0 %v2308
        %2441 = vmatpush.bf16.msra.mxu0 %v2306
        %2442 = vmatmul.bf16.gmra.mxu0 %v834
        %v2443 = vpop.f32.mrf.mxu0
        %v2444 = vadd.f32 %v802, %v2443
        %v2445 = vpop.f32.mrf.mxu0
        %2446 = vdwg.mxu0
        %2447 = vmatpush.bf16.msra.mxu0 %v2336
        %2448 = vmatpush.bf16.msra.mxu0 %v2334
        %2449 = vmatpush.bf16.msra.mxu0 %v2332
        %2450 = vmatpush.bf16.msra.mxu0 %v2330
        %2451 = vmatpush.bf16.msra.mxu0 %v2328
        %2452 = vmatpush.bf16.msra.mxu0 %v2326
        %2453 = vmatpush.bf16.msra.mxu0 %v2324
        %2454 = vmatpush.bf16.msra.mxu0 %v2322
        %2455 = vmatmul.bf16.gmra.mxu0 %v835
        %v2456 = vpop.f32.mrf.mxu0
        %v2457 = vadd.f32 %v2444, %v2456
        %v2458 = vpop.f32.mrf.mxu0
        %2459 = vdwg.mxu0
        %2460 = vmatpush.bf16.msra.mxu0 %v2352
        %2461 = vmatpush.bf16.msra.mxu0 %v2350
        %2462 = vmatpush.bf16.msra.mxu0 %v2348
        %2463 = vmatpush.bf16.msra.mxu0 %v2346
        %2464 = vmatpush.bf16.msra.mxu0 %v2344
        %2465 = vmatpush.bf16.msra.mxu0 %v2342
        %2466 = vmatpush.bf16.msra.mxu0 %v2340
        %2467 = vmatpush.bf16.msra.mxu0 %v2338
        %2468 = vmatmul.bf16.gmra.mxu0 %v836
        %v2469 = vpop.f32.mrf.mxu0
        %v2470 = vadd.f32 %v2457, %v2469
        %v2471 = vpop.f32.mrf.mxu0
        %2472 = vdwg.mxu0
        %2473 = vmatpush.bf16.msra.mxu0 %v2368
        %2474 = vmatpush.bf16.msra.mxu0 %v2366
        %2475 = vmatpush.bf16.msra.mxu0 %v2364
        %2476 = vmatpush.bf16.msra.mxu0 %v2362
        %2477 = vmatpush.bf16.msra.mxu0 %v2360
        %2478 = vmatpush.bf16.msra.mxu0 %v2358
        %2479 = vmatpush.bf16.msra.mxu0 %v2356
        %2480 = vmatpush.bf16.msra.mxu0 %v2354
        %2481 = vmatmul.bf16.gmra.mxu0 %v837
        %v2482 = vpop.f32.mrf.mxu0
        %v2483 = vadd.f32 %v2470, %v2482
        %v2484 = vpop.f32.mrf.mxu0
        %2485 = vdwg.mxu0
        %2486 = vmatpush.bf16.msra.mxu0 %v2321
        %2487 = vmatpush.bf16.msra.mxu0 %v2319
        %2488 = vmatpush.bf16.msra.mxu0 %v2317
        %2489 = vmatpush.bf16.msra.mxu0 %v2315
        %2490 = vmatpush.bf16.msra.mxu0 %v2313
        %2491 = vmatpush.bf16.msra.mxu0 %v2311
        %2492 = vmatpush.bf16.msra.mxu0 %v2309
        %2493 = vmatpush.bf16.msra.mxu0 %v2307
        %2494 = vmatmul.bf16.gmra.mxu0 %v834
        %v2495 = vpop.f32.mrf.mxu0
        %v2496 = vadd.f32 %v803, %v2495
        %v2497 = vpop.f32.mrf.mxu0
        %2498 = vdwg.mxu0
        %2499 = vmatpush.bf16.msra.mxu0 %v2337
        %2500 = vmatpush.bf16.msra.mxu0 %v2335
        %2501 = vmatpush.bf16.msra.mxu0 %v2333
        %2502 = vmatpush.bf16.msra.mxu0 %v2331
        %2503 = vmatpush.bf16.msra.mxu0 %v2329
        %2504 = vmatpush.bf16.msra.mxu0 %v2327
        %2505 = vmatpush.bf16.msra.mxu0 %v2325
        %2506 = vmatpush.bf16.msra.mxu0 %v2323
        %2507 = vmatmul.bf16.gmra.mxu0 %v835
        %v2508 = vpop.f32.mrf.mxu0
        %v2509 = vadd.f32 %v2496, %v2508
        %v2510 = vpop.f32.mrf.mxu0
        %2511 = vdwg.mxu0
        %2512 = vmatpush.bf16.msra.mxu0 %v2353
        %2513 = vmatpush.bf16.msra.mxu0 %v2351
        %2514 = vmatpush.bf16.msra.mxu0 %v2349
        %2515 = vmatpush.bf16.msra.mxu0 %v2347
        %2516 = vmatpush.bf16.msra.mxu0 %v2345
        %2517 = vmatpush.bf16.msra.mxu0 %v2343
        %2518 = vmatpush.bf16.msra.mxu0 %v2341
        %2519 = vmatpush.bf16.msra.mxu0 %v2339
        %2520 = vmatmul.bf16.gmra.mxu0 %v836
        %v2521 = vpop.f32.mrf.mxu0
        %v2522 = vadd.f32 %v2509, %v2521
        %v2523 = vpop.f32.mrf.mxu0
        %2524 = vdwg.mxu0
        %2525 = vmatpush.bf16.msra.mxu0 %v2369
        %2526 = vmatpush.bf16.msra.mxu0 %v2367
        %2527 = vmatpush.bf16.msra.mxu0 %v2365
        %2528 = vmatpush.bf16.msra.mxu0 %v2363
        %2529 = vmatpush.bf16.msra.mxu0 %v2361
        %2530 = vmatpush.bf16.msra.mxu0 %v2359
        %2531 = vmatpush.bf16.msra.mxu0 %v2357
        %2532 = vmatpush.bf16.msra.mxu0 %v2355
        %2533 = vmatmul.bf16.gmra.mxu0 %v837
        %v2534 = vpop.f32.mrf.mxu0
        %v2535 = vadd.f32 %v2522, %v2534
        %v2536 = vpop.f32.mrf.mxu0
        %2537 = vdwg.mxu0
        %v2602 = vunpack.c.l.b16 %v524
        %v2603 = vunpack.c.h.b16 %v524
        %v2604 = vunpack.c.l.b16 %v525
        %v2605 = vunpack.c.h.b16 %v525
        %v2606 = vunpack.c.l.b16 %v526
        %v2607 = vunpack.c.h.b16 %v526
        %v2608 = vunpack.c.l.b16 %v527
        %v2609 = vunpack.c.h.b16 %v527
        %v2610 = vunpack.c.l.b16 %v528
        %v2611 = vunpack.c.h.b16 %v528
        %v2612 = vunpack.c.l.b16 %v529
        %v2613 = vunpack.c.h.b16 %v529
        %v2614 = vunpack.c.l.b16 %v530
        %v2615 = vunpack.c.h.b16 %v530
        %v2616 = vunpack.c.l.b16 %v531
        %v2617 = vunpack.c.h.b16 %v531
        %v2618 = vunpack.c.l.b16 %v532
        %v2619 = vunpack.c.h.b16 %v532
        %v2620 = vunpack.c.l.b16 %v533
        %v2621 = vunpack.c.h.b16 %v533
        %v2622 = vunpack.c.l.b16 %v534
        %v2623 = vunpack.c.h.b16 %v534
        %v2624 = vunpack.c.l.b16 %v535
        %v2625 = vunpack.c.h.b16 %v535
        %v2626 = vunpack.c.l.b16 %v536
        %v2627 = vunpack.c.h.b16 %v536
        %v2628 = vunpack.c.l.b16 %v537
        %v2629 = vunpack.c.h.b16 %v537
        %v2630 = vunpack.c.l.b16 %v538
        %v2631 = vunpack.c.h.b16 %v538
        %v2632 = vunpack.c.l.b16 %v539
        %v2633 = vunpack.c.h.b16 %v539
        %v2634 = vunpack.c.l.b16 %v540
        %v2635 = vunpack.c.h.b16 %v540
        %v2636 = vunpack.c.l.b16 %v541
        %v2637 = vunpack.c.h.b16 %v541
        %v2638 = vunpack.c.l.b16 %v542
        %v2639 = vunpack.c.h.b16 %v542
        %v2640 = vunpack.c.l.b16 %v543
        %v2641 = vunpack.c.h.b16 %v543
        %v2642 = vunpack.c.l.b16 %v544
        %v2643 = vunpack.c.h.b16 %v544
        %v2644 = vunpack.c.l.b16 %v545
        %v2645 = vunpack.c.h.b16 %v545
        %v2646 = vunpack.c.l.b16 %v546
        %v2647 = vunpack.c.h.b16 %v546
        %v2648 = vunpack.c.l.b16 %v547
        %v2649 = vunpack.c.h.b16 %v547
        %v2650 = vunpack.c.l.b16 %v548
        %v2651 = vunpack.c.h.b16 %v548
        %v2652 = vunpack.c.l.b16 %v549
        %v2653 = vunpack.c.h.b16 %v549
        %v2654 = vunpack.c.l.b16 %v550
        %v2655 = vunpack.c.h.b16 %v550
        %v2656 = vunpack.c.l.b16 %v551
        %v2657 = vunpack.c.h.b16 %v551
        %v2658 = vunpack.c.l.b16 %v552
        %v2659 = vunpack.c.h.b16 %v552
        %v2660 = vunpack.c.l.b16 %v553
        %v2661 = vunpack.c.h.b16 %v553
        %v2662 = vunpack.c.l.b16 %v554
        %v2663 = vunpack.c.h.b16 %v554
        %v2664 = vunpack.c.l.b16 %v555
        %v2665 = vunpack.c.h.b16 %v555
        %v2666 = vunpack.c.l.b16 %v556
        %v2667 = vunpack.c.h.b16 %v556
        %v2668 = vunpack.c.l.b16 %v557
        %v2669 = vunpack.c.h.b16 %v557
        %v2670 = vunpack.c.l.b16 %v558
        %v2671 = vunpack.c.h.b16 %v558
        %v2672 = vunpack.c.l.b16 %v559
        %v2673 = vunpack.c.h.b16 %v559
        %v2674 = vunpack.c.l.b16 %v560
        %v2675 = vunpack.c.h.b16 %v560
        %v2676 = vunpack.c.l.b16 %v561
        %v2677 = vunpack.c.h.b16 %v561
        %v2678 = vunpack.c.l.b16 %v562
        %v2679 = vunpack.c.h.b16 %v562
        %v2680 = vunpack.c.l.b16 %v563
        %v2681 = vunpack.c.h.b16 %v563
        %v2682 = vunpack.c.l.b16 %v564
        %v2683 = vunpack.c.h.b16 %v564
        %v2684 = vunpack.c.l.b16 %v565
        %v2685 = vunpack.c.h.b16 %v565
        %v2686 = vunpack.c.l.b16 %v566
        %v2687 = vunpack.c.h.b16 %v566
        %v2688 = vunpack.c.l.b16 %v567
        %v2689 = vunpack.c.h.b16 %v567
        %v2690 = vunpack.c.l.b16 %v568
        %v2691 = vunpack.c.h.b16 %v568
        %v2692 = vunpack.c.l.b16 %v569
        %v2693 = vunpack.c.h.b16 %v569
        %v2694 = vunpack.c.l.b16 %v570
        %v2695 = vunpack.c.h.b16 %v570
        %v2696 = vunpack.c.l.b16 %v571
        %v2697 = vunpack.c.h.b16 %v571
        %v2698 = vunpack.c.l.b16 %v572
        %v2699 = vunpack.c.h.b16 %v572
        %v2700 = vunpack.c.l.b16 %v573
        %v2701 = vunpack.c.h.b16 %v573
        %v2702 = vunpack.c.l.b16 %v574
        %v2703 = vunpack.c.h.b16 %v574
        %v2704 = vunpack.c.l.b16 %v575
        %v2705 = vunpack.c.h.b16 %v575
        %v2706 = vunpack.c.l.b16 %v576
        %v2707 = vunpack.c.h.b16 %v576
        %v2708 = vunpack.c.l.b16 %v577
        %v2709 = vunpack.c.h.b16 %v577
        %v2710 = vunpack.c.l.b16 %v578
        %v2711 = vunpack.c.h.b16 %v578
        %v2712 = vunpack.c.l.b16 %v579
        %v2713 = vunpack.c.h.b16 %v579
        %v2714 = vunpack.c.l.b16 %v580
        %v2715 = vunpack.c.h.b16 %v580
        %v2716 = vunpack.c.l.b16 %v581
        %v2717 = vunpack.c.h.b16 %v581
        %v2718 = vunpack.c.l.b16 %v582
        %v2719 = vunpack.c.h.b16 %v582
        %v2720 = vunpack.c.l.b16 %v583
        %v2721 = vunpack.c.h.b16 %v583
        %v2722 = vunpack.c.l.b16 %v584
        %v2723 = vunpack.c.h.b16 %v584
        %v2724 = vunpack.c.l.b16 %v585
        %v2725 = vunpack.c.h.b16 %v585
        %v2726 = vunpack.c.l.b16 %v586
        %v2727 = vunpack.c.h.b16 %v586
        %v2728 = vunpack.c.l.b16 %v587
        %v2729 = vunpack.c.h.b16 %v587
        %v2730 = vpack.c.b16 %v2604, %v2602
        %v2731 = vpack.c.b16 %v2605, %v2603
        %v2732 = vpack.c.b16 %v2608, %v2606
        %v2733 = vpack.c.b16 %v2609, %v2607
        %v2734 = vpack.c.b16 %v2612, %v2610
        %v2735 = vpack.c.b16 %v2613, %v2611
        %v2736 = vpack.c.b16 %v2616, %v2614
        %v2737 = vpack.c.b16 %v2617, %v2615
        %v2738 = vpack.c.b16 %v2620, %v2618
        %v2739 = vpack.c.b16 %v2621, %v2619
        %v2740 = vpack.c.b16 %v2624, %v2622
        %v2741 = vpack.c.b16 %v2625, %v2623
        %v2742 = vpack.c.b16 %v2628, %v2626
        %v2743 = vpack.c.b16 %v2629, %v2627
        %v2744 = vpack.c.b16 %v2632, %v2630
        %v2745 = vpack.c.b16 %v2633, %v2631
        %v2746 = vpack.c.b16 %v2636, %v2634
        %v2747 = vpack.c.b16 %v2637, %v2635
        %v2748 = vpack.c.b16 %v2640, %v2638
        %v2749 = vpack.c.b16 %v2641, %v2639
        %v2750 = vpack.c.b16 %v2644, %v2642
        %v2751 = vpack.c.b16 %v2645, %v2643
        %v2752 = vpack.c.b16 %v2648, %v2646
        %v2753 = vpack.c.b16 %v2649, %v2647
        %v2754 = vpack.c.b16 %v2652, %v2650
        %v2755 = vpack.c.b16 %v2653, %v2651
        %v2756 = vpack.c.b16 %v2656, %v2654
        %v2757 = vpack.c.b16 %v2657, %v2655
        %v2758 = vpack.c.b16 %v2660, %v2658
        %v2759 = vpack.c.b16 %v2661, %v2659
        %v2760 = vpack.c.b16 %v2664, %v2662
        %v2761 = vpack.c.b16 %v2665, %v2663
        %v2762 = vpack.c.b16 %v2668, %v2666
        %v2763 = vpack.c.b16 %v2669, %v2667
        %v2764 = vpack.c.b16 %v2672, %v2670
        %v2765 = vpack.c.b16 %v2673, %v2671
        %v2766 = vpack.c.b16 %v2676, %v2674
        %v2767 = vpack.c.b16 %v2677, %v2675
        %v2768 = vpack.c.b16 %v2680, %v2678
        %v2769 = vpack.c.b16 %v2681, %v2679
        %v2770 = vpack.c.b16 %v2684, %v2682
        %v2771 = vpack.c.b16 %v2685, %v2683
        %v2772 = vpack.c.b16 %v2688, %v2686
        %v2773 = vpack.c.b16 %v2689, %v2687
        %v2774 = vpack.c.b16 %v2692, %v2690
        %v2775 = vpack.c.b16 %v2693, %v2691
        %v2776 = vpack.c.b16 %v2696, %v2694
        %v2777 = vpack.c.b16 %v2697, %v2695
        %v2778 = vpack.c.b16 %v2700, %v2698
        %v2779 = vpack.c.b16 %v2701, %v2699
        %v2780 = vpack.c.b16 %v2704, %v2702
        %v2781 = vpack.c.b16 %v2705, %v2703
        %v2782 = vpack.c.b16 %v2708, %v2706
        %v2783 = vpack.c.b16 %v2709, %v2707
        %v2784 = vpack.c.b16 %v2712, %v2710
        %v2785 = vpack.c.b16 %v2713, %v2711
        %v2786 = vpack.c.b16 %v2716, %v2714
        %v2787 = vpack.c.b16 %v2717, %v2715
        %v2788 = vpack.c.b16 %v2720, %v2718
        %v2789 = vpack.c.b16 %v2721, %v2719
        %v2790 = vpack.c.b16 %v2724, %v2722
        %v2791 = vpack.c.b16 %v2725, %v2723
        %v2792 = vpack.c.b16 %v2728, %v2726
        %v2793 = vpack.c.b16 %v2729, %v2727
        %2858 = vmatpush.bf16.msra.mxu0 %v2744
        %2859 = vmatpush.bf16.msra.mxu0 %v2742
        %2860 = vmatpush.bf16.msra.mxu0 %v2740
        %2861 = vmatpush.bf16.msra.mxu0 %v2738
        %2862 = vmatpush.bf16.msra.mxu0 %v2736
        %2863 = vmatpush.bf16.msra.mxu0 %v2734
        %2864 = vmatpush.bf16.msra.mxu0 %v2732
        %2865 = vmatpush.bf16.msra.mxu0 %v2730
        %2866 = vmatmul.bf16.gmra.mxu0 %v834
        %v2867 = vpop.f32.mrf.mxu0
        %v2868 = vadd.f32 %v804, %v2867
        %v2869 = vpop.f32.mrf.mxu0
        %2870 = vdwg.mxu0
        %2871 = vmatpush.bf16.msra.mxu0 %v2760
        %2872 = vmatpush.bf16.msra.mxu0 %v2758
        %2873 = vmatpush.bf16.msra.mxu0 %v2756
        %2874 = vmatpush.bf16.msra.mxu0 %v2754
        %2875 = vmatpush.bf16.msra.mxu0 %v2752
        %2876 = vmatpush.bf16.msra.mxu0 %v2750
        %2877 = vmatpush.bf16.msra.mxu0 %v2748
        %2878 = vmatpush.bf16.msra.mxu0 %v2746
        %2879 = vmatmul.bf16.gmra.mxu0 %v835
        %v2880 = vpop.f32.mrf.mxu0
        %v2881 = vadd.f32 %v2868, %v2880
        %v2882 = vpop.f32.mrf.mxu0
        %2883 = vdwg.mxu0
        %2884 = vmatpush.bf16.msra.mxu0 %v2776
        %2885 = vmatpush.bf16.msra.mxu0 %v2774
        %2886 = vmatpush.bf16.msra.mxu0 %v2772
        %2887 = vmatpush.bf16.msra.mxu0 %v2770
        %2888 = vmatpush.bf16.msra.mxu0 %v2768
        %2889 = vmatpush.bf16.msra.mxu0 %v2766
        %2890 = vmatpush.bf16.msra.mxu0 %v2764
        %2891 = vmatpush.bf16.msra.mxu0 %v2762
        %2892 = vmatmul.bf16.gmra.mxu0 %v836
        %v2893 = vpop.f32.mrf.mxu0
        %v2894 = vadd.f32 %v2881, %v2893
        %v2895 = vpop.f32.mrf.mxu0
        %2896 = vdwg.mxu0
        %2897 = vmatpush.bf16.msra.mxu0 %v2792
        %2898 = vmatpush.bf16.msra.mxu0 %v2790
        %2899 = vmatpush.bf16.msra.mxu0 %v2788
        %2900 = vmatpush.bf16.msra.mxu0 %v2786
        %2901 = vmatpush.bf16.msra.mxu0 %v2784
        %2902 = vmatpush.bf16.msra.mxu0 %v2782
        %2903 = vmatpush.bf16.msra.mxu0 %v2780
        %2904 = vmatpush.bf16.msra.mxu0 %v2778
        %2905 = vmatmul.bf16.gmra.mxu0 %v837
        %v2906 = vpop.f32.mrf.mxu0
        %v2907 = vadd.f32 %v2894, %v2906
        %v2908 = vpop.f32.mrf.mxu0
        %2909 = vdwg.mxu0
        %2910 = vmatpush.bf16.msra.mxu0 %v2745
        %2911 = vmatpush.bf16.msra.mxu0 %v2743
        %2912 = vmatpush.bf16.msra.mxu0 %v2741
        %2913 = vmatpush.bf16.msra.mxu0 %v2739
        %2914 = vmatpush.bf16.msra.mxu0 %v2737
        %2915 = vmatpush.bf16.msra.mxu0 %v2735
        %2916 = vmatpush.bf16.msra.mxu0 %v2733
        %2917 = vmatpush.bf16.msra.mxu0 %v2731
        %2918 = vmatmul.bf16.gmra.mxu0 %v834
        %v2919 = vpop.f32.mrf.mxu0
        %v2920 = vadd.f32 %v805, %v2919
        %v2921 = vpop.f32.mrf.mxu0
        %2922 = vdwg.mxu0
        %2923 = vmatpush.bf16.msra.mxu0 %v2761
        %2924 = vmatpush.bf16.msra.mxu0 %v2759
        %2925 = vmatpush.bf16.msra.mxu0 %v2757
        %2926 = vmatpush.bf16.msra.mxu0 %v2755
        %2927 = vmatpush.bf16.msra.mxu0 %v2753
        %2928 = vmatpush.bf16.msra.mxu0 %v2751
        %2929 = vmatpush.bf16.msra.mxu0 %v2749
        %2930 = vmatpush.bf16.msra.mxu0 %v2747
        %2931 = vmatmul.bf16.gmra.mxu0 %v835
        %v2932 = vpop.f32.mrf.mxu0
        %v2933 = vadd.f32 %v2920, %v2932
        %v2934 = vpop.f32.mrf.mxu0
        %2935 = vdwg.mxu0
        %2936 = vmatpush.bf16.msra.mxu0 %v2777
        %2937 = vmatpush.bf16.msra.mxu0 %v2775
        %2938 = vmatpush.bf16.msra.mxu0 %v2773
        %2939 = vmatpush.bf16.msra.mxu0 %v2771
        %2940 = vmatpush.bf16.msra.mxu0 %v2769
        %2941 = vmatpush.bf16.msra.mxu0 %v2767
        %2942 = vmatpush.bf16.msra.mxu0 %v2765
        %2943 = vmatpush.bf16.msra.mxu0 %v2763
        %2944 = vmatmul.bf16.gmra.mxu0 %v836
        %v2945 = vpop.f32.mrf.mxu0
        %v2946 = vadd.f32 %v2933, %v2945
        %v2947 = vpop.f32.mrf.mxu0
        %2948 = vdwg.mxu0
        %2949 = vmatpush.bf16.msra.mxu0 %v2793
        %2950 = vmatpush.bf16.msra.mxu0 %v2791
        %2951 = vmatpush.bf16.msra.mxu0 %v2789
        %2952 = vmatpush.bf16.msra.mxu0 %v2787
        %2953 = vmatpush.bf16.msra.mxu0 %v2785
        %2954 = vmatpush.bf16.msra.mxu0 %v2783
        %2955 = vmatpush.bf16.msra.mxu0 %v2781
        %2956 = vmatpush.bf16.msra.mxu0 %v2779
        %2957 = vmatmul.bf16.gmra.mxu0 %v837
        %v2958 = vpop.f32.mrf.mxu0
        %v2959 = vadd.f32 %v2946, %v2958
        %v2960 = vpop.f32.mrf.mxu0
        %2961 = vdwg.mxu0
        %v3026 = vunpack.c.l.b16 %v588
        %v3027 = vunpack.c.h.b16 %v588
        %v3028 = vunpack.c.l.b16 %v589
        %v3029 = vunpack.c.h.b16 %v589
        %v3030 = vunpack.c.l.b16 %v590
        %v3031 = vunpack.c.h.b16 %v590
        %v3032 = vunpack.c.l.b16 %v591
        %v3033 = vunpack.c.h.b16 %v591
        %v3034 = vunpack.c.l.b16 %v592
        %v3035 = vunpack.c.h.b16 %v592
        %v3036 = vunpack.c.l.b16 %v593
        %v3037 = vunpack.c.h.b16 %v593
        %v3038 = vunpack.c.l.b16 %v594
        %v3039 = vunpack.c.h.b16 %v594
        %v3040 = vunpack.c.l.b16 %v595
        %v3041 = vunpack.c.h.b16 %v595
        %v3042 = vunpack.c.l.b16 %v596
        %v3043 = vunpack.c.h.b16 %v596
        %v3044 = vunpack.c.l.b16 %v597
        %v3045 = vunpack.c.h.b16 %v597
        %v3046 = vunpack.c.l.b16 %v598
        %v3047 = vunpack.c.h.b16 %v598
        %v3048 = vunpack.c.l.b16 %v599
        %v3049 = vunpack.c.h.b16 %v599
        %v3050 = vunpack.c.l.b16 %v600
        %v3051 = vunpack.c.h.b16 %v600
        %v3052 = vunpack.c.l.b16 %v601
        %v3053 = vunpack.c.h.b16 %v601
        %v3054 = vunpack.c.l.b16 %v602
        %v3055 = vunpack.c.h.b16 %v602
        %v3056 = vunpack.c.l.b16 %v603
        %v3057 = vunpack.c.h.b16 %v603
        %v3058 = vunpack.c.l.b16 %v604
        %v3059 = vunpack.c.h.b16 %v604
        %v3060 = vunpack.c.l.b16 %v605
        %v3061 = vunpack.c.h.b16 %v605
        %v3062 = vunpack.c.l.b16 %v606
        %v3063 = vunpack.c.h.b16 %v606
        %v3064 = vunpack.c.l.b16 %v607
        %v3065 = vunpack.c.h.b16 %v607
        %v3066 = vunpack.c.l.b16 %v608
        %v3067 = vunpack.c.h.b16 %v608
        %v3068 = vunpack.c.l.b16 %v609
        %v3069 = vunpack.c.h.b16 %v609
        %v3070 = vunpack.c.l.b16 %v610
        %v3071 = vunpack.c.h.b16 %v610
        %v3072 = vunpack.c.l.b16 %v611
        %v3073 = vunpack.c.h.b16 %v611
        %v3074 = vunpack.c.l.b16 %v612
        %v3075 = vunpack.c.h.b16 %v612
        %v3076 = vunpack.c.l.b16 %v613
        %v3077 = vunpack.c.h.b16 %v613
        %v3078 = vunpack.c.l.b16 %v614
        %v3079 = vunpack.c.h.b16 %v614
        %v3080 = vunpack.c.l.b16 %v615
        %v3081 = vunpack.c.h.b16 %v615
        %v3082 = vunpack.c.l.b16 %v616
        %v3083 = vunpack.c.h.b16 %v616
        %v3084 = vunpack.c.l.b16 %v617
        %v3085 = vunpack.c.h.b16 %v617
        %v3086 = vunpack.c.l.b16 %v618
        %v3087 = vunpack.c.h.b16 %v618
        %v3088 = vunpack.c.l.b16 %v619
        %v3089 = vunpack.c.h.b16 %v619
        %v3090 = vunpack.c.l.b16 %v620
        %v3091 = vunpack.c.h.b16 %v620
        %v3092 = vunpack.c.l.b16 %v621
        %v3093 = vunpack.c.h.b16 %v621
        %v3094 = vunpack.c.l.b16 %v622
        %v3095 = vunpack.c.h.b16 %v622
        %v3096 = vunpack.c.l.b16 %v623
        %v3097 = vunpack.c.h.b16 %v623
        %v3098 = vunpack.c.l.b16 %v624
        %v3099 = vunpack.c.h.b16 %v624
        %v3100 = vunpack.c.l.b16 %v625
        %v3101 = vunpack.c.h.b16 %v625
        %v3102 = vunpack.c.l.b16 %v626
        %v3103 = vunpack.c.h.b16 %v626
        %v3104 = vunpack.c.l.b16 %v627
        %v3105 = vunpack.c.h.b16 %v627
        %v3106 = vunpack.c.l.b16 %v628
        %v3107 = vunpack.c.h.b16 %v628
        %v3108 = vunpack.c.l.b16 %v629
        %v3109 = vunpack.c.h.b16 %v629
        %v3110 = vunpack.c.l.b16 %v630
        %v3111 = vunpack.c.h.b16 %v630
        %v3112 = vunpack.c.l.b16 %v631
        %v3113 = vunpack.c.h.b16 %v631
        %v3114 = vunpack.c.l.b16 %v632
        %v3115 = vunpack.c.h.b16 %v632
        %v3116 = vunpack.c.l.b16 %v633
        %v3117 = vunpack.c.h.b16 %v633
        %v3118 = vunpack.c.l.b16 %v634
        %v3119 = vunpack.c.h.b16 %v634
        %v3120 = vunpack.c.l.b16 %v635
        %v3121 = vunpack.c.h.b16 %v635
        %v3122 = vunpack.c.l.b16 %v636
        %v3123 = vunpack.c.h.b16 %v636
        %v3124 = vunpack.c.l.b16 %v637
        %v3125 = vunpack.c.h.b16 %v637
        %v3126 = vunpack.c.l.b16 %v638
        %v3127 = vunpack.c.h.b16 %v638
        %v3128 = vunpack.c.l.b16 %v639
        %v3129 = vunpack.c.h.b16 %v639
        %v3130 = vunpack.c.l.b16 %v640
        %v3131 = vunpack.c.h.b16 %v640
        %v3132 = vunpack.c.l.b16 %v641
        %v3133 = vunpack.c.h.b16 %v641
        %v3134 = vunpack.c.l.b16 %v642
        %v3135 = vunpack.c.h.b16 %v642
        %v3136 = vunpack.c.l.b16 %v643
        %v3137 = vunpack.c.h.b16 %v643
        %v3138 = vunpack.c.l.b16 %v644
        %v3139 = vunpack.c.h.b16 %v644
        %v3140 = vunpack.c.l.b16 %v645
        %v3141 = vunpack.c.h.b16 %v645
        %v3142 = vunpack.c.l.b16 %v646
        %v3143 = vunpack.c.h.b16 %v646
        %v3144 = vunpack.c.l.b16 %v647
        %v3145 = vunpack.c.h.b16 %v647
        %v3146 = vunpack.c.l.b16 %v648
        %v3147 = vunpack.c.h.b16 %v648
        %v3148 = vunpack.c.l.b16 %v649
        %v3149 = vunpack.c.h.b16 %v649
        %v3150 = vunpack.c.l.b16 %v650
        %v3151 = vunpack.c.h.b16 %v650
        %v3152 = vunpack.c.l.b16 %v651
        %v3153 = vunpack.c.h.b16 %v651
        %v3154 = vpack.c.b16 %v3028, %v3026
        %v3155 = vpack.c.b16 %v3029, %v3027
        %v3156 = vpack.c.b16 %v3032, %v3030
        %v3157 = vpack.c.b16 %v3033, %v3031
        %v3158 = vpack.c.b16 %v3036, %v3034
        %v3159 = vpack.c.b16 %v3037, %v3035
        %v3160 = vpack.c.b16 %v3040, %v3038
        %v3161 = vpack.c.b16 %v3041, %v3039
        %v3162 = vpack.c.b16 %v3044, %v3042
        %v3163 = vpack.c.b16 %v3045, %v3043
        %v3164 = vpack.c.b16 %v3048, %v3046
        %v3165 = vpack.c.b16 %v3049, %v3047
        %v3166 = vpack.c.b16 %v3052, %v3050
        %v3167 = vpack.c.b16 %v3053, %v3051
        %v3168 = vpack.c.b16 %v3056, %v3054
        %v3169 = vpack.c.b16 %v3057, %v3055
        %v3170 = vpack.c.b16 %v3060, %v3058
        %v3171 = vpack.c.b16 %v3061, %v3059
        %v3172 = vpack.c.b16 %v3064, %v3062
        %v3173 = vpack.c.b16 %v3065, %v3063
        %v3174 = vpack.c.b16 %v3068, %v3066
        %v3175 = vpack.c.b16 %v3069, %v3067
        %v3176 = vpack.c.b16 %v3072, %v3070
        %v3177 = vpack.c.b16 %v3073, %v3071
        %v3178 = vpack.c.b16 %v3076, %v3074
        %v3179 = vpack.c.b16 %v3077, %v3075
        %v3180 = vpack.c.b16 %v3080, %v3078
        %v3181 = vpack.c.b16 %v3081, %v3079
        %v3182 = vpack.c.b16 %v3084, %v3082
        %v3183 = vpack.c.b16 %v3085, %v3083
        %v3184 = vpack.c.b16 %v3088, %v3086
        %v3185 = vpack.c.b16 %v3089, %v3087
        %v3186 = vpack.c.b16 %v3092, %v3090
        %v3187 = vpack.c.b16 %v3093, %v3091
        %v3188 = vpack.c.b16 %v3096, %v3094
        %v3189 = vpack.c.b16 %v3097, %v3095
        %v3190 = vpack.c.b16 %v3100, %v3098
        %v3191 = vpack.c.b16 %v3101, %v3099
        %v3192 = vpack.c.b16 %v3104, %v3102
        %v3193 = vpack.c.b16 %v3105, %v3103
        %v3194 = vpack.c.b16 %v3108, %v3106
        %v3195 = vpack.c.b16 %v3109, %v3107
        %v3196 = vpack.c.b16 %v3112, %v3110
        %v3197 = vpack.c.b16 %v3113, %v3111
        %v3198 = vpack.c.b16 %v3116, %v3114
        %v3199 = vpack.c.b16 %v3117, %v3115
        %v3200 = vpack.c.b16 %v3120, %v3118
        %v3201 = vpack.c.b16 %v3121, %v3119
        %v3202 = vpack.c.b16 %v3124, %v3122
        %v3203 = vpack.c.b16 %v3125, %v3123
        %v3204 = vpack.c.b16 %v3128, %v3126
        %v3205 = vpack.c.b16 %v3129, %v3127
        %v3206 = vpack.c.b16 %v3132, %v3130
        %v3207 = vpack.c.b16 %v3133, %v3131
        %v3208 = vpack.c.b16 %v3136, %v3134
        %v3209 = vpack.c.b16 %v3137, %v3135
        %v3210 = vpack.c.b16 %v3140, %v3138
        %v3211 = vpack.c.b16 %v3141, %v3139
        %v3212 = vpack.c.b16 %v3144, %v3142
        %v3213 = vpack.c.b16 %v3145, %v3143
        %v3214 = vpack.c.b16 %v3148, %v3146
        %v3215 = vpack.c.b16 %v3149, %v3147
        %v3216 = vpack.c.b16 %v3152, %v3150
        %v3217 = vpack.c.b16 %v3153, %v3151
        %3282 = vmatpush.bf16.msra.mxu0 %v3168
        %3283 = vmatpush.bf16.msra.mxu0 %v3166
        %3284 = vmatpush.bf16.msra.mxu0 %v3164
        %3285 = vmatpush.bf16.msra.mxu0 %v3162
        %3286 = vmatpush.bf16.msra.mxu0 %v3160
        %3287 = vmatpush.bf16.msra.mxu0 %v3158
        %3288 = vmatpush.bf16.msra.mxu0 %v3156
        %3289 = vmatpush.bf16.msra.mxu0 %v3154
        %3290 = vmatmul.bf16.gmra.mxu0 %v834
        %v3291 = vpop.f32.mrf.mxu0
        %v3292 = vadd.f32 %v806, %v3291
        %v3293 = vpop.f32.mrf.mxu0
        %3294 = vdwg.mxu0
        %3295 = vmatpush.bf16.msra.mxu0 %v3184
        %3296 = vmatpush.bf16.msra.mxu0 %v3182
        %3297 = vmatpush.bf16.msra.mxu0 %v3180
        %3298 = vmatpush.bf16.msra.mxu0 %v3178
        %3299 = vmatpush.bf16.msra.mxu0 %v3176
        %3300 = vmatpush.bf16.msra.mxu0 %v3174
        %3301 = vmatpush.bf16.msra.mxu0 %v3172
        %3302 = vmatpush.bf16.msra.mxu0 %v3170
        %3303 = vmatmul.bf16.gmra.mxu0 %v835
        %v3304 = vpop.f32.mrf.mxu0
        %v3305 = vadd.f32 %v3292, %v3304
        %v3306 = vpop.f32.mrf.mxu0
        %3307 = vdwg.mxu0
        %3308 = vmatpush.bf16.msra.mxu0 %v3200
        %3309 = vmatpush.bf16.msra.mxu0 %v3198
        %3310 = vmatpush.bf16.msra.mxu0 %v3196
        %3311 = vmatpush.bf16.msra.mxu0 %v3194
        %3312 = vmatpush.bf16.msra.mxu0 %v3192
        %3313 = vmatpush.bf16.msra.mxu0 %v3190
        %3314 = vmatpush.bf16.msra.mxu0 %v3188
        %3315 = vmatpush.bf16.msra.mxu0 %v3186
        %3316 = vmatmul.bf16.gmra.mxu0 %v836
        %v3317 = vpop.f32.mrf.mxu0
        %v3318 = vadd.f32 %v3305, %v3317
        %v3319 = vpop.f32.mrf.mxu0
        %3320 = vdwg.mxu0
        %3321 = vmatpush.bf16.msra.mxu0 %v3216
        %3322 = vmatpush.bf16.msra.mxu0 %v3214
        %3323 = vmatpush.bf16.msra.mxu0 %v3212
        %3324 = vmatpush.bf16.msra.mxu0 %v3210
        %3325 = vmatpush.bf16.msra.mxu0 %v3208
        %3326 = vmatpush.bf16.msra.mxu0 %v3206
        %3327 = vmatpush.bf16.msra.mxu0 %v3204
        %3328 = vmatpush.bf16.msra.mxu0 %v3202
        %3329 = vmatmul.bf16.gmra.mxu0 %v837
        %v3330 = vpop.f32.mrf.mxu0
        %v3331 = vadd.f32 %v3318, %v3330
        %v3332 = vpop.f32.mrf.mxu0
        %3333 = vdwg.mxu0
        %3334 = vmatpush.bf16.msra.mxu0 %v3169
        %3335 = vmatpush.bf16.msra.mxu0 %v3167
        %3336 = vmatpush.bf16.msra.mxu0 %v3165
        %3337 = vmatpush.bf16.msra.mxu0 %v3163
        %3338 = vmatpush.bf16.msra.mxu0 %v3161
        %3339 = vmatpush.bf16.msra.mxu0 %v3159
        %3340 = vmatpush.bf16.msra.mxu0 %v3157
        %3341 = vmatpush.bf16.msra.mxu0 %v3155
        %3342 = vmatmul.bf16.gmra.mxu0 %v834
        %v3343 = vpop.f32.mrf.mxu0
        %v3344 = vadd.f32 %v807, %v3343
        %v3345 = vpop.f32.mrf.mxu0
        %3346 = vdwg.mxu0
        %3347 = vmatpush.bf16.msra.mxu0 %v3185
        %3348 = vmatpush.bf16.msra.mxu0 %v3183
        %3349 = vmatpush.bf16.msra.mxu0 %v3181
        %3350 = vmatpush.bf16.msra.mxu0 %v3179
        %3351 = vmatpush.bf16.msra.mxu0 %v3177
        %3352 = vmatpush.bf16.msra.mxu0 %v3175
        %3353 = vmatpush.bf16.msra.mxu0 %v3173
        %3354 = vmatpush.bf16.msra.mxu0 %v3171
        %3355 = vmatmul.bf16.gmra.mxu0 %v835
        %v3356 = vpop.f32.mrf.mxu0
        %v3357 = vadd.f32 %v3344, %v3356
        %v3358 = vpop.f32.mrf.mxu0
        %3359 = vdwg.mxu0
        %3360 = vmatpush.bf16.msra.mxu0 %v3201
        %3361 = vmatpush.bf16.msra.mxu0 %v3199
        %3362 = vmatpush.bf16.msra.mxu0 %v3197
        %3363 = vmatpush.bf16.msra.mxu0 %v3195
        %3364 = vmatpush.bf16.msra.mxu0 %v3193
        %3365 = vmatpush.bf16.msra.mxu0 %v3191
        %3366 = vmatpush.bf16.msra.mxu0 %v3189
        %3367 = vmatpush.bf16.msra.mxu0 %v3187
        %3368 = vmatmul.bf16.gmra.mxu0 %v836
        %v3369 = vpop.f32.mrf.mxu0
        %v3370 = vadd.f32 %v3357, %v3369
        %v3371 = vpop.f32.mrf.mxu0
        %3372 = vdwg.mxu0
        %3373 = vmatpush.bf16.msra.mxu0 %v3217
        %3374 = vmatpush.bf16.msra.mxu0 %v3215
        %3375 = vmatpush.bf16.msra.mxu0 %v3213
        %3376 = vmatpush.bf16.msra.mxu0 %v3211
        %3377 = vmatpush.bf16.msra.mxu0 %v3209
        %3378 = vmatpush.bf16.msra.mxu0 %v3207
        %3379 = vmatpush.bf16.msra.mxu0 %v3205
        %3380 = vmatpush.bf16.msra.mxu0 %v3203
        %3381 = vmatmul.bf16.gmra.mxu0 %v837
        %v3382 = vpop.f32.mrf.mxu0
        %v3383 = vadd.f32 %v3370, %v3382
        %v3384 = vpop.f32.mrf.mxu0
        %3385 = vdwg.mxu0
        %v3450 = vunpack.c.l.b16 %v652
        %v3451 = vunpack.c.h.b16 %v652
        %v3452 = vunpack.c.l.b16 %v653
        %v3453 = vunpack.c.h.b16 %v653
        %v3454 = vunpack.c.l.b16 %v654
        %v3455 = vunpack.c.h.b16 %v654
        %v3456 = vunpack.c.l.b16 %v655
        %v3457 = vunpack.c.h.b16 %v655
        %v3458 = vunpack.c.l.b16 %v656
        %v3459 = vunpack.c.h.b16 %v656
        %v3460 = vunpack.c.l.b16 %v657
        %v3461 = vunpack.c.h.b16 %v657
        %v3462 = vunpack.c.l.b16 %v658
        %v3463 = vunpack.c.h.b16 %v658
        %v3464 = vunpack.c.l.b16 %v659
        %v3465 = vunpack.c.h.b16 %v659
        %v3466 = vunpack.c.l.b16 %v660
        %v3467 = vunpack.c.h.b16 %v660
        %v3468 = vunpack.c.l.b16 %v661
        %v3469 = vunpack.c.h.b16 %v661
        %v3470 = vunpack.c.l.b16 %v662
        %v3471 = vunpack.c.h.b16 %v662
        %v3472 = vunpack.c.l.b16 %v663
        %v3473 = vunpack.c.h.b16 %v663
        %v3474 = vunpack.c.l.b16 %v664
        %v3475 = vunpack.c.h.b16 %v664
        %v3476 = vunpack.c.l.b16 %v665
        %v3477 = vunpack.c.h.b16 %v665
        %v3478 = vunpack.c.l.b16 %v666
        %v3479 = vunpack.c.h.b16 %v666
        %v3480 = vunpack.c.l.b16 %v667
        %v3481 = vunpack.c.h.b16 %v667
        %v3482 = vunpack.c.l.b16 %v668
        %v3483 = vunpack.c.h.b16 %v668
        %v3484 = vunpack.c.l.b16 %v669
        %v3485 = vunpack.c.h.b16 %v669
        %v3486 = vunpack.c.l.b16 %v670
        %v3487 = vunpack.c.h.b16 %v670
        %v3488 = vunpack.c.l.b16 %v671
        %v3489 = vunpack.c.h.b16 %v671
        %v3490 = vunpack.c.l.b16 %v672
        %v3491 = vunpack.c.h.b16 %v672
        %v3492 = vunpack.c.l.b16 %v673
        %v3493 = vunpack.c.h.b16 %v673
        %v3494 = vunpack.c.l.b16 %v674
        %v3495 = vunpack.c.h.b16 %v674
        %v3496 = vunpack.c.l.b16 %v675
        %v3497 = vunpack.c.h.b16 %v675
        %v3498 = vunpack.c.l.b16 %v676
        %v3499 = vunpack.c.h.b16 %v676
        %v3500 = vunpack.c.l.b16 %v677
        %v3501 = vunpack.c.h.b16 %v677
        %v3502 = vunpack.c.l.b16 %v678
        %v3503 = vunpack.c.h.b16 %v678
        %v3504 = vunpack.c.l.b16 %v679
        %v3505 = vunpack.c.h.b16 %v679
        %v3506 = vunpack.c.l.b16 %v680
        %v3507 = vunpack.c.h.b16 %v680
        %v3508 = vunpack.c.l.b16 %v681
        %v3509 = vunpack.c.h.b16 %v681
        %v3510 = vunpack.c.l.b16 %v682
        %v3511 = vunpack.c.h.b16 %v682
        %v3512 = vunpack.c.l.b16 %v683
        %v3513 = vunpack.c.h.b16 %v683
        %v3514 = vunpack.c.l.b16 %v684
        %v3515 = vunpack.c.h.b16 %v684
        %v3516 = vunpack.c.l.b16 %v685
        %v3517 = vunpack.c.h.b16 %v685
        %v3518 = vunpack.c.l.b16 %v686
        %v3519 = vunpack.c.h.b16 %v686
        %v3520 = vunpack.c.l.b16 %v687
        %v3521 = vunpack.c.h.b16 %v687
        %v3522 = vunpack.c.l.b16 %v688
        %v3523 = vunpack.c.h.b16 %v688
        %v3524 = vunpack.c.l.b16 %v689
        %v3525 = vunpack.c.h.b16 %v689
        %v3526 = vunpack.c.l.b16 %v690
        %v3527 = vunpack.c.h.b16 %v690
        %v3528 = vunpack.c.l.b16 %v691
        %v3529 = vunpack.c.h.b16 %v691
        %v3530 = vunpack.c.l.b16 %v692
        %v3531 = vunpack.c.h.b16 %v692
        %v3532 = vunpack.c.l.b16 %v693
        %v3533 = vunpack.c.h.b16 %v693
        %v3534 = vunpack.c.l.b16 %v694
        %v3535 = vunpack.c.h.b16 %v694
        %v3536 = vunpack.c.l.b16 %v695
        %v3537 = vunpack.c.h.b16 %v695
        %v3538 = vunpack.c.l.b16 %v696
        %v3539 = vunpack.c.h.b16 %v696
        %v3540 = vunpack.c.l.b16 %v697
        %v3541 = vunpack.c.h.b16 %v697
        %v3542 = vunpack.c.l.b16 %v698
        %v3543 = vunpack.c.h.b16 %v698
        %v3544 = vunpack.c.l.b16 %v699
        %v3545 = vunpack.c.h.b16 %v699
        %v3546 = vunpack.c.l.b16 %v700
        %v3547 = vunpack.c.h.b16 %v700
        %v3548 = vunpack.c.l.b16 %v701
        %v3549 = vunpack.c.h.b16 %v701
        %v3550 = vunpack.c.l.b16 %v702
        %v3551 = vunpack.c.h.b16 %v702
        %v3552 = vunpack.c.l.b16 %v703
        %v3553 = vunpack.c.h.b16 %v703
        %v3554 = vunpack.c.l.b16 %v704
        %v3555 = vunpack.c.h.b16 %v704
        %v3556 = vunpack.c.l.b16 %v705
        %v3557 = vunpack.c.h.b16 %v705
        %v3558 = vunpack.c.l.b16 %v706
        %v3559 = vunpack.c.h.b16 %v706
        %v3560 = vunpack.c.l.b16 %v707
        %v3561 = vunpack.c.h.b16 %v707
        %v3562 = vunpack.c.l.b16 %v708
        %v3563 = vunpack.c.h.b16 %v708
        %v3564 = vunpack.c.l.b16 %v709
        %v3565 = vunpack.c.h.b16 %v709
        %v3566 = vunpack.c.l.b16 %v710
        %v3567 = vunpack.c.h.b16 %v710
        %v3568 = vunpack.c.l.b16 %v711
        %v3569 = vunpack.c.h.b16 %v711
        %v3570 = vunpack.c.l.b16 %v712
        %v3571 = vunpack.c.h.b16 %v712
        %v3572 = vunpack.c.l.b16 %v713
        %v3573 = vunpack.c.h.b16 %v713
        %v3574 = vunpack.c.l.b16 %v714
        %v3575 = vunpack.c.h.b16 %v714
        %v3576 = vunpack.c.l.b16 %v715
        %v3577 = vunpack.c.h.b16 %v715
        %v3578 = vpack.c.b16 %v3452, %v3450
        %v3579 = vpack.c.b16 %v3453, %v3451
        %v3580 = vpack.c.b16 %v3456, %v3454
        %v3581 = vpack.c.b16 %v3457, %v3455
        %v3582 = vpack.c.b16 %v3460, %v3458
        %v3583 = vpack.c.b16 %v3461, %v3459
        %v3584 = vpack.c.b16 %v3464, %v3462
        %v3585 = vpack.c.b16 %v3465, %v3463
        %v3586 = vpack.c.b16 %v3468, %v3466
        %v3587 = vpack.c.b16 %v3469, %v3467
        %v3588 = vpack.c.b16 %v3472, %v3470
        %v3589 = vpack.c.b16 %v3473, %v3471
        %v3590 = vpack.c.b16 %v3476, %v3474
        %v3591 = vpack.c.b16 %v3477, %v3475
        %v3592 = vpack.c.b16 %v3480, %v3478
        %v3593 = vpack.c.b16 %v3481, %v3479
        %v3594 = vpack.c.b16 %v3484, %v3482
        %v3595 = vpack.c.b16 %v3485, %v3483
        %v3596 = vpack.c.b16 %v3488, %v3486
        %v3597 = vpack.c.b16 %v3489, %v3487
        %v3598 = vpack.c.b16 %v3492, %v3490
        %v3599 = vpack.c.b16 %v3493, %v3491
        %v3600 = vpack.c.b16 %v3496, %v3494
        %v3601 = vpack.c.b16 %v3497, %v3495
        %v3602 = vpack.c.b16 %v3500, %v3498
        %v3603 = vpack.c.b16 %v3501, %v3499
        %v3604 = vpack.c.b16 %v3504, %v3502
        %v3605 = vpack.c.b16 %v3505, %v3503
        %v3606 = vpack.c.b16 %v3508, %v3506
        %v3607 = vpack.c.b16 %v3509, %v3507
        %v3608 = vpack.c.b16 %v3512, %v3510
        %v3609 = vpack.c.b16 %v3513, %v3511
        %v3610 = vpack.c.b16 %v3516, %v3514
        %v3611 = vpack.c.b16 %v3517, %v3515
        %v3612 = vpack.c.b16 %v3520, %v3518
        %v3613 = vpack.c.b16 %v3521, %v3519
        %v3614 = vpack.c.b16 %v3524, %v3522
        %v3615 = vpack.c.b16 %v3525, %v3523
        %v3616 = vpack.c.b16 %v3528, %v3526
        %v3617 = vpack.c.b16 %v3529, %v3527
        %v3618 = vpack.c.b16 %v3532, %v3530
        %v3619 = vpack.c.b16 %v3533, %v3531
        %v3620 = vpack.c.b16 %v3536, %v3534
        %v3621 = vpack.c.b16 %v3537, %v3535
        %v3622 = vpack.c.b16 %v3540, %v3538
        %v3623 = vpack.c.b16 %v3541, %v3539
        %v3624 = vpack.c.b16 %v3544, %v3542
        %v3625 = vpack.c.b16 %v3545, %v3543
        %v3626 = vpack.c.b16 %v3548, %v3546
        %v3627 = vpack.c.b16 %v3549, %v3547
        %v3628 = vpack.c.b16 %v3552, %v3550
        %v3629 = vpack.c.b16 %v3553, %v3551
        %v3630 = vpack.c.b16 %v3556, %v3554
        %v3631 = vpack.c.b16 %v3557, %v3555
        %v3632 = vpack.c.b16 %v3560, %v3558
        %v3633 = vpack.c.b16 %v3561, %v3559
        %v3634 = vpack.c.b16 %v3564, %v3562
        %v3635 = vpack.c.b16 %v3565, %v3563
        %v3636 = vpack.c.b16 %v3568, %v3566
        %v3637 = vpack.c.b16 %v3569, %v3567
        %v3638 = vpack.c.b16 %v3572, %v3570
        %v3639 = vpack.c.b16 %v3573, %v3571
        %v3640 = vpack.c.b16 %v3576, %v3574
        %v3641 = vpack.c.b16 %v3577, %v3575
        %3706 = vmatpush.bf16.msra.mxu0 %v3592
        %3707 = vmatpush.bf16.msra.mxu0 %v3590
        %3708 = vmatpush.bf16.msra.mxu0 %v3588
        %3709 = vmatpush.bf16.msra.mxu0 %v3586
        %3710 = vmatpush.bf16.msra.mxu0 %v3584
        %3711 = vmatpush.bf16.msra.mxu0 %v3582
        %3712 = vmatpush.bf16.msra.mxu0 %v3580
        %3713 = vmatpush.bf16.msra.mxu0 %v3578
        %3714 = vmatmul.bf16.gmra.mxu0 %v834
        %v3715 = vpop.f32.mrf.mxu0
        %v3716 = vadd.f32 %v808, %v3715
        %v3717 = vpop.f32.mrf.mxu0
        %3718 = vdwg.mxu0
        %3719 = vmatpush.bf16.msra.mxu0 %v3608
        %3720 = vmatpush.bf16.msra.mxu0 %v3606
        %3721 = vmatpush.bf16.msra.mxu0 %v3604
        %3722 = vmatpush.bf16.msra.mxu0 %v3602
        %3723 = vmatpush.bf16.msra.mxu0 %v3600
        %3724 = vmatpush.bf16.msra.mxu0 %v3598
        %3725 = vmatpush.bf16.msra.mxu0 %v3596
        %3726 = vmatpush.bf16.msra.mxu0 %v3594
        %3727 = vmatmul.bf16.gmra.mxu0 %v835
        %v3728 = vpop.f32.mrf.mxu0
        %v3729 = vadd.f32 %v3716, %v3728
        %v3730 = vpop.f32.mrf.mxu0
        %3731 = vdwg.mxu0
        %3732 = vmatpush.bf16.msra.mxu0 %v3624
        %3733 = vmatpush.bf16.msra.mxu0 %v3622
        %3734 = vmatpush.bf16.msra.mxu0 %v3620
        %3735 = vmatpush.bf16.msra.mxu0 %v3618
        %3736 = vmatpush.bf16.msra.mxu0 %v3616
        %3737 = vmatpush.bf16.msra.mxu0 %v3614
        %3738 = vmatpush.bf16.msra.mxu0 %v3612
        %3739 = vmatpush.bf16.msra.mxu0 %v3610
        %3740 = vmatmul.bf16.gmra.mxu0 %v836
        %v3741 = vpop.f32.mrf.mxu0
        %v3742 = vadd.f32 %v3729, %v3741
        %v3743 = vpop.f32.mrf.mxu0
        %3744 = vdwg.mxu0
        %3745 = vmatpush.bf16.msra.mxu0 %v3640
        %3746 = vmatpush.bf16.msra.mxu0 %v3638
        %3747 = vmatpush.bf16.msra.mxu0 %v3636
        %3748 = vmatpush.bf16.msra.mxu0 %v3634
        %3749 = vmatpush.bf16.msra.mxu0 %v3632
        %3750 = vmatpush.bf16.msra.mxu0 %v3630
        %3751 = vmatpush.bf16.msra.mxu0 %v3628
        %3752 = vmatpush.bf16.msra.mxu0 %v3626
        %3753 = vmatmul.bf16.gmra.mxu0 %v837
        %v3754 = vpop.f32.mrf.mxu0
        %v3755 = vadd.f32 %v3742, %v3754
        %v3756 = vpop.f32.mrf.mxu0
        %3757 = vdwg.mxu0
        %3758 = vmatpush.bf16.msra.mxu0 %v3593
        %3759 = vmatpush.bf16.msra.mxu0 %v3591
        %3760 = vmatpush.bf16.msra.mxu0 %v3589
        %3761 = vmatpush.bf16.msra.mxu0 %v3587
        %3762 = vmatpush.bf16.msra.mxu0 %v3585
        %3763 = vmatpush.bf16.msra.mxu0 %v3583
        %3764 = vmatpush.bf16.msra.mxu0 %v3581
        %3765 = vmatpush.bf16.msra.mxu0 %v3579
        %3766 = vmatmul.bf16.gmra.mxu0 %v834
        %v3767 = vpop.f32.mrf.mxu0
        %v3768 = vadd.f32 %v809, %v3767
        %v3769 = vpop.f32.mrf.mxu0
        %3770 = vdwg.mxu0
        %3771 = vmatpush.bf16.msra.mxu0 %v3609
        %3772 = vmatpush.bf16.msra.mxu0 %v3607
        %3773 = vmatpush.bf16.msra.mxu0 %v3605
        %3774 = vmatpush.bf16.msra.mxu0 %v3603
        %3775 = vmatpush.bf16.msra.mxu0 %v3601
        %3776 = vmatpush.bf16.msra.mxu0 %v3599
        %3777 = vmatpush.bf16.msra.mxu0 %v3597
        %3778 = vmatpush.bf16.msra.mxu0 %v3595
        %3779 = vmatmul.bf16.gmra.mxu0 %v835
        %v3780 = vpop.f32.mrf.mxu0
        %v3781 = vadd.f32 %v3768, %v3780
        %v3782 = vpop.f32.mrf.mxu0
        %3783 = vdwg.mxu0
        %3784 = vmatpush.bf16.msra.mxu0 %v3625
        %3785 = vmatpush.bf16.msra.mxu0 %v3623
        %3786 = vmatpush.bf16.msra.mxu0 %v3621
        %3787 = vmatpush.bf16.msra.mxu0 %v3619
        %3788 = vmatpush.bf16.msra.mxu0 %v3617
        %3789 = vmatpush.bf16.msra.mxu0 %v3615
        %3790 = vmatpush.bf16.msra.mxu0 %v3613
        %3791 = vmatpush.bf16.msra.mxu0 %v3611
        %3792 = vmatmul.bf16.gmra.mxu0 %v836
        %v3793 = vpop.f32.mrf.mxu0
        %v3794 = vadd.f32 %v3781, %v3793
        %v3795 = vpop.f32.mrf.mxu0
        %3796 = vdwg.mxu0
        %3797 = vmatpush.bf16.msra.mxu0 %v3641
        %3798 = vmatpush.bf16.msra.mxu0 %v3639
        %3799 = vmatpush.bf16.msra.mxu0 %v3637
        %3800 = vmatpush.bf16.msra.mxu0 %v3635
        %3801 = vmatpush.bf16.msra.mxu0 %v3633
        %3802 = vmatpush.bf16.msra.mxu0 %v3631
        %3803 = vmatpush.bf16.msra.mxu0 %v3629
        %3804 = vmatpush.bf16.msra.mxu0 %v3627
        %3805 = vmatmul.bf16.gmra.mxu0 %v837
        %v3806 = vpop.f32.mrf.mxu0
        %v3807 = vadd.f32 %v3794, %v3806
        %v3808 = vpop.f32.mrf.mxu0
        %3809 = vdwg.mxu0
        %v3874 = vunpack.c.l.b16 %v716
        %v3875 = vunpack.c.h.b16 %v716
        %v3876 = vunpack.c.l.b16 %v717
        %v3877 = vunpack.c.h.b16 %v717
        %v3878 = vunpack.c.l.b16 %v718
        %v3879 = vunpack.c.h.b16 %v718
        %v3880 = vunpack.c.l.b16 %v719
        %v3881 = vunpack.c.h.b16 %v719
        %v3882 = vunpack.c.l.b16 %v720
        %v3883 = vunpack.c.h.b16 %v720
        %v3884 = vunpack.c.l.b16 %v721
        %v3885 = vunpack.c.h.b16 %v721
        %v3886 = vunpack.c.l.b16 %v722
        %v3887 = vunpack.c.h.b16 %v722
        %v3888 = vunpack.c.l.b16 %v723
        %v3889 = vunpack.c.h.b16 %v723
        %v3890 = vunpack.c.l.b16 %v724
        %v3891 = vunpack.c.h.b16 %v724
        %v3892 = vunpack.c.l.b16 %v725
        %v3893 = vunpack.c.h.b16 %v725
        %v3894 = vunpack.c.l.b16 %v726
        %v3895 = vunpack.c.h.b16 %v726
        %v3896 = vunpack.c.l.b16 %v727
        %v3897 = vunpack.c.h.b16 %v727
        %v3898 = vunpack.c.l.b16 %v728
        %v3899 = vunpack.c.h.b16 %v728
        %v3900 = vunpack.c.l.b16 %v729
        %v3901 = vunpack.c.h.b16 %v729
        %v3902 = vunpack.c.l.b16 %v730
        %v3903 = vunpack.c.h.b16 %v730
        %v3904 = vunpack.c.l.b16 %v731
        %v3905 = vunpack.c.h.b16 %v731
        %v3906 = vunpack.c.l.b16 %v732
        %v3907 = vunpack.c.h.b16 %v732
        %v3908 = vunpack.c.l.b16 %v733
        %v3909 = vunpack.c.h.b16 %v733
        %v3910 = vunpack.c.l.b16 %v734
        %v3911 = vunpack.c.h.b16 %v734
        %v3912 = vunpack.c.l.b16 %v735
        %v3913 = vunpack.c.h.b16 %v735
        %v3914 = vunpack.c.l.b16 %v736
        %v3915 = vunpack.c.h.b16 %v736
        %v3916 = vunpack.c.l.b16 %v737
        %v3917 = vunpack.c.h.b16 %v737
        %v3918 = vunpack.c.l.b16 %v738
        %v3919 = vunpack.c.h.b16 %v738
        %v3920 = vunpack.c.l.b16 %v739
        %v3921 = vunpack.c.h.b16 %v739
        %v3922 = vunpack.c.l.b16 %v740
        %v3923 = vunpack.c.h.b16 %v740
        %v3924 = vunpack.c.l.b16 %v741
        %v3925 = vunpack.c.h.b16 %v741
        %v3926 = vunpack.c.l.b16 %v742
        %v3927 = vunpack.c.h.b16 %v742
        %v3928 = vunpack.c.l.b16 %v743
        %v3929 = vunpack.c.h.b16 %v743
        %v3930 = vunpack.c.l.b16 %v744
        %v3931 = vunpack.c.h.b16 %v744
        %v3932 = vunpack.c.l.b16 %v745
        %v3933 = vunpack.c.h.b16 %v745
        %v3934 = vunpack.c.l.b16 %v746
        %v3935 = vunpack.c.h.b16 %v746
        %v3936 = vunpack.c.l.b16 %v747
        %v3937 = vunpack.c.h.b16 %v747
        %v3938 = vunpack.c.l.b16 %v748
        %v3939 = vunpack.c.h.b16 %v748
        %v3940 = vunpack.c.l.b16 %v749
        %v3941 = vunpack.c.h.b16 %v749
        %v3942 = vunpack.c.l.b16 %v750
        %v3943 = vunpack.c.h.b16 %v750
        %v3944 = vunpack.c.l.b16 %v751
        %v3945 = vunpack.c.h.b16 %v751
        %v3946 = vunpack.c.l.b16 %v752
        %v3947 = vunpack.c.h.b16 %v752
        %v3948 = vunpack.c.l.b16 %v753
        %v3949 = vunpack.c.h.b16 %v753
        %v3950 = vunpack.c.l.b16 %v754
        %v3951 = vunpack.c.h.b16 %v754
        %v3952 = vunpack.c.l.b16 %v755
        %v3953 = vunpack.c.h.b16 %v755
        %v3954 = vunpack.c.l.b16 %v756
        %v3955 = vunpack.c.h.b16 %v756
        %v3956 = vunpack.c.l.b16 %v757
        %v3957 = vunpack.c.h.b16 %v757
        %v3958 = vunpack.c.l.b16 %v758
        %v3959 = vunpack.c.h.b16 %v758
        %v3960 = vunpack.c.l.b16 %v759
        %v3961 = vunpack.c.h.b16 %v759
        %v3962 = vunpack.c.l.b16 %v760
        %v3963 = vunpack.c.h.b16 %v760
        %v3964 = vunpack.c.l.b16 %v761
        %v3965 = vunpack.c.h.b16 %v761
        %v3966 = vunpack.c.l.b16 %v762
        %v3967 = vunpack.c.h.b16 %v762
        %v3968 = vunpack.c.l.b16 %v763
        %v3969 = vunpack.c.h.b16 %v763
        %v3970 = vunpack.c.l.b16 %v764
        %v3971 = vunpack.c.h.b16 %v764
        %v3972 = vunpack.c.l.b16 %v765
        %v3973 = vunpack.c.h.b16 %v765
        %v3974 = vunpack.c.l.b16 %v766
        %v3975 = vunpack.c.h.b16 %v766
        %v3976 = vunpack.c.l.b16 %v767
        %v3977 = vunpack.c.h.b16 %v767
        %v3978 = vunpack.c.l.b16 %v768
        %v3979 = vunpack.c.h.b16 %v768
        %v3980 = vunpack.c.l.b16 %v769
        %v3981 = vunpack.c.h.b16 %v769
        %v3982 = vunpack.c.l.b16 %v770
        %v3983 = vunpack.c.h.b16 %v770
        %v3984 = vunpack.c.l.b16 %v771
        %v3985 = vunpack.c.h.b16 %v771
        %v3986 = vunpack.c.l.b16 %v772
        %v3987 = vunpack.c.h.b16 %v772
        %v3988 = vunpack.c.l.b16 %v773
        %v3989 = vunpack.c.h.b16 %v773
        %v3990 = vunpack.c.l.b16 %v774
        %v3991 = vunpack.c.h.b16 %v774
        %v3992 = vunpack.c.l.b16 %v775
        %v3993 = vunpack.c.h.b16 %v775
        %v3994 = vunpack.c.l.b16 %v776
        %v3995 = vunpack.c.h.b16 %v776
        %v3996 = vunpack.c.l.b16 %v777
        %v3997 = vunpack.c.h.b16 %v777
        %v3998 = vunpack.c.l.b16 %v778
        %v3999 = vunpack.c.h.b16 %v778
        %v4000 = vunpack.c.l.b16 %v779
        %v4001 = vunpack.c.h.b16 %v779
        %v4002 = vpack.c.b16 %v3876, %v3874
        %v4003 = vpack.c.b16 %v3877, %v3875
        %v4004 = vpack.c.b16 %v3880, %v3878
        %v4005 = vpack.c.b16 %v3881, %v3879
        %v4006 = vpack.c.b16 %v3884, %v3882
        %v4007 = vpack.c.b16 %v3885, %v3883
        %v4008 = vpack.c.b16 %v3888, %v3886
        %v4009 = vpack.c.b16 %v3889, %v3887
        %v4010 = vpack.c.b16 %v3892, %v3890
        %v4011 = vpack.c.b16 %v3893, %v3891
        %v4012 = vpack.c.b16 %v3896, %v3894
        %v4013 = vpack.c.b16 %v3897, %v3895
        %v4014 = vpack.c.b16 %v3900, %v3898
        %v4015 = vpack.c.b16 %v3901, %v3899
        %v4016 = vpack.c.b16 %v3904, %v3902
        %v4017 = vpack.c.b16 %v3905, %v3903
        %v4018 = vpack.c.b16 %v3908, %v3906
        %v4019 = vpack.c.b16 %v3909, %v3907
        %v4020 = vpack.c.b16 %v3912, %v3910
        %v4021 = vpack.c.b16 %v3913, %v3911
        %v4022 = vpack.c.b16 %v3916, %v3914
        %v4023 = vpack.c.b16 %v3917, %v3915
        %v4024 = vpack.c.b16 %v3920, %v3918
        %v4025 = vpack.c.b16 %v3921, %v3919
        %v4026 = vpack.c.b16 %v3924, %v3922
        %v4027 = vpack.c.b16 %v3925, %v3923
        %v4028 = vpack.c.b16 %v3928, %v3926
        %v4029 = vpack.c.b16 %v3929, %v3927
        %v4030 = vpack.c.b16 %v3932, %v3930
        %v4031 = vpack.c.b16 %v3933, %v3931
        %v4032 = vpack.c.b16 %v3936, %v3934
        %v4033 = vpack.c.b16 %v3937, %v3935
        %v4034 = vpack.c.b16 %v3940, %v3938
        %v4035 = vpack.c.b16 %v3941, %v3939
        %v4036 = vpack.c.b16 %v3944, %v3942
        %v4037 = vpack.c.b16 %v3945, %v3943
        %v4038 = vpack.c.b16 %v3948, %v3946
        %v4039 = vpack.c.b16 %v3949, %v3947
        %v4040 = vpack.c.b16 %v3952, %v3950
        %v4041 = vpack.c.b16 %v3953, %v3951
        %v4042 = vpack.c.b16 %v3956, %v3954
        %v4043 = vpack.c.b16 %v3957, %v3955
        %v4044 = vpack.c.b16 %v3960, %v3958
        %v4045 = vpack.c.b16 %v3961, %v3959
        %v4046 = vpack.c.b16 %v3964, %v3962
        %v4047 = vpack.c.b16 %v3965, %v3963
        %v4048 = vpack.c.b16 %v3968, %v3966
        %v4049 = vpack.c.b16 %v3969, %v3967
        %v4050 = vpack.c.b16 %v3972, %v3970
        %v4051 = vpack.c.b16 %v3973, %v3971
        %v4052 = vpack.c.b16 %v3976, %v3974
        %v4053 = vpack.c.b16 %v3977, %v3975
        %v4054 = vpack.c.b16 %v3980, %v3978
        %v4055 = vpack.c.b16 %v3981, %v3979
        %v4056 = vpack.c.b16 %v3984, %v3982
        %v4057 = vpack.c.b16 %v3985, %v3983
        %v4058 = vpack.c.b16 %v3988, %v3986
        %v4059 = vpack.c.b16 %v3989, %v3987
        %v4060 = vpack.c.b16 %v3992, %v3990
        %v4061 = vpack.c.b16 %v3993, %v3991
        %v4062 = vpack.c.b16 %v3996, %v3994
        %v4063 = vpack.c.b16 %v3997, %v3995
        %v4064 = vpack.c.b16 %v4000, %v3998
        %v4065 = vpack.c.b16 %v4001, %v3999
        %4130 = vmatpush.bf16.msra.mxu0 %v4016
        %4131 = vmatpush.bf16.msra.mxu0 %v4014
        %4132 = vmatpush.bf16.msra.mxu0 %v4012
        %4133 = vmatpush.bf16.msra.mxu0 %v4010
        %4134 = vmatpush.bf16.msra.mxu0 %v4008
        %4135 = vmatpush.bf16.msra.mxu0 %v4006
        %4136 = vmatpush.bf16.msra.mxu0 %v4004
        %4137 = vmatpush.bf16.msra.mxu0 %v4002
        %4138 = vmatmul.bf16.gmra.mxu0 %v834
        %v4139 = vpop.f32.mrf.mxu0
        %v4140 = vadd.f32 %v810, %v4139
        %v4141 = vpop.f32.mrf.mxu0
        %4142 = vdwg.mxu0
        %4143 = vmatpush.bf16.msra.mxu0 %v4032
        %4144 = vmatpush.bf16.msra.mxu0 %v4030
        %4145 = vmatpush.bf16.msra.mxu0 %v4028
        %4146 = vmatpush.bf16.msra.mxu0 %v4026
        %4147 = vmatpush.bf16.msra.mxu0 %v4024
        %4148 = vmatpush.bf16.msra.mxu0 %v4022
        %4149 = vmatpush.bf16.msra.mxu0 %v4020
        %4150 = vmatpush.bf16.msra.mxu0 %v4018
        %4151 = vmatmul.bf16.gmra.mxu0 %v835
        %v4152 = vpop.f32.mrf.mxu0
        %v4153 = vadd.f32 %v4140, %v4152
        %v4154 = vpop.f32.mrf.mxu0
        %4155 = vdwg.mxu0
        %4156 = vmatpush.bf16.msra.mxu0 %v4048
        %4157 = vmatpush.bf16.msra.mxu0 %v4046
        %4158 = vmatpush.bf16.msra.mxu0 %v4044
        %4159 = vmatpush.bf16.msra.mxu0 %v4042
        %4160 = vmatpush.bf16.msra.mxu0 %v4040
        %4161 = vmatpush.bf16.msra.mxu0 %v4038
        %4162 = vmatpush.bf16.msra.mxu0 %v4036
        %4163 = vmatpush.bf16.msra.mxu0 %v4034
        %4164 = vmatmul.bf16.gmra.mxu0 %v836
        %v4165 = vpop.f32.mrf.mxu0
        %v4166 = vadd.f32 %v4153, %v4165
        %v4167 = vpop.f32.mrf.mxu0
        %4168 = vdwg.mxu0
        %4169 = vmatpush.bf16.msra.mxu0 %v4064
        %4170 = vmatpush.bf16.msra.mxu0 %v4062
        %4171 = vmatpush.bf16.msra.mxu0 %v4060
        %4172 = vmatpush.bf16.msra.mxu0 %v4058
        %4173 = vmatpush.bf16.msra.mxu0 %v4056
        %4174 = vmatpush.bf16.msra.mxu0 %v4054
        %4175 = vmatpush.bf16.msra.mxu0 %v4052
        %4176 = vmatpush.bf16.msra.mxu0 %v4050
        %4177 = vmatmul.bf16.gmra.mxu0 %v837
        %v4178 = vpop.f32.mrf.mxu0
        %v4179 = vadd.f32 %v4166, %v4178
        %v4180 = vpop.f32.mrf.mxu0
        %4181 = vdwg.mxu0
        %4182 = vmatpush.bf16.msra.mxu0 %v4017
        %4183 = vmatpush.bf16.msra.mxu0 %v4015
        %4184 = vmatpush.bf16.msra.mxu0 %v4013
        %4185 = vmatpush.bf16.msra.mxu0 %v4011
        %4186 = vmatpush.bf16.msra.mxu0 %v4009
        %4187 = vmatpush.bf16.msra.mxu0 %v4007
        %4188 = vmatpush.bf16.msra.mxu0 %v4005
        %4189 = vmatpush.bf16.msra.mxu0 %v4003
        %4190 = vmatmul.bf16.gmra.mxu0 %v834
        %v4191 = vpop.f32.mrf.mxu0
        %v4192 = vadd.f32 %v811, %v4191
        %v4193 = vpop.f32.mrf.mxu0
        %4194 = vdwg.mxu0
        %4195 = vmatpush.bf16.msra.mxu0 %v4033
        %4196 = vmatpush.bf16.msra.mxu0 %v4031
        %4197 = vmatpush.bf16.msra.mxu0 %v4029
        %4198 = vmatpush.bf16.msra.mxu0 %v4027
        %4199 = vmatpush.bf16.msra.mxu0 %v4025
        %4200 = vmatpush.bf16.msra.mxu0 %v4023
        %4201 = vmatpush.bf16.msra.mxu0 %v4021
        %4202 = vmatpush.bf16.msra.mxu0 %v4019
        %4203 = vmatmul.bf16.gmra.mxu0 %v835
        %v4204 = vpop.f32.mrf.mxu0
        %v4205 = vadd.f32 %v4192, %v4204
        %v4206 = vpop.f32.mrf.mxu0
        %4207 = vdwg.mxu0
        %4208 = vmatpush.bf16.msra.mxu0 %v4049
        %4209 = vmatpush.bf16.msra.mxu0 %v4047
        %4210 = vmatpush.bf16.msra.mxu0 %v4045
        %4211 = vmatpush.bf16.msra.mxu0 %v4043
        %4212 = vmatpush.bf16.msra.mxu0 %v4041
        %4213 = vmatpush.bf16.msra.mxu0 %v4039
        %4214 = vmatpush.bf16.msra.mxu0 %v4037
        %4215 = vmatpush.bf16.msra.mxu0 %v4035
        %4216 = vmatmul.bf16.gmra.mxu0 %v836
        %v4217 = vpop.f32.mrf.mxu0
        %v4218 = vadd.f32 %v4205, %v4217
        %v4219 = vpop.f32.mrf.mxu0
        %4220 = vdwg.mxu0
        %4221 = vmatpush.bf16.msra.mxu0 %v4065
        %4222 = vmatpush.bf16.msra.mxu0 %v4063
        %4223 = vmatpush.bf16.msra.mxu0 %v4061
        %4224 = vmatpush.bf16.msra.mxu0 %v4059
        %4225 = vmatpush.bf16.msra.mxu0 %v4057
        %4226 = vmatpush.bf16.msra.mxu0 %v4055
        %4227 = vmatpush.bf16.msra.mxu0 %v4053
        %4228 = vmatpush.bf16.msra.mxu0 %v4051
        %4229 = vmatmul.bf16.gmra.mxu0 %v837
        %v4230 = vpop.f32.mrf.mxu0
        %v4231 = vadd.f32 %v4218, %v4230
        %v4232 = vpop.f32.mrf.mxu0
        %4233 = vdwg.mxu0
        %v4234 = vpack.c.bf16 %v1211, %v1211
        %v4235 = vpack.c.bf16 %v1635, %v1635
        %v4236 = vpack.c.bf16 %v2059, %v2059
        %v4237 = vpack.c.bf16 %v2483, %v2483
        %v4238 = vpack.c.bf16 %v2907, %v2907
        %v4239 = vpack.c.bf16 %v3331, %v3331
        %v4240 = vpack.c.bf16 %v3755, %v3755
        %v4241 = vpack.c.bf16 %v4179, %v4179
        %v4243 = vunpack.c.l.b16 %v4234
        %v4244 = vpack.c.b16 %v4243, %v4243
        %4245 = vrot.lane.b32.xlu0 %v4244, 64
        %v4246 = vpop.permute.xlu0 %4245
        %vm4247 = vcmask 523264
        %v4249 = vsel %vm4247, %v4234, 0
        %v4252 = vsel %vm4247, %v4246, 0
        %4254 = vmatpush.bf16.xpose.msra.mxu0 0
        %4255 = vmatpush.bf16.xpose.msra.mxu0 0
        %4256 = vmatpush.bf16.xpose.msra.mxu0 0
        %4257 = vmatpush.bf16.xpose.msra.mxu0 0
        %4258 = vmatpush.bf16.xpose.msra.mxu0 0
        %4259 = vmatpush.bf16.xpose.msra.mxu0 0
        %4260 = vmatpush.bf16.xpose.msra.mxu0 0
        %4261 = vmatpush.bf16.xpose.msra.mxu0 %v4252
        %4262 = vmatmul.bf16.gmra.mxu0 %v4249
        %v4263 = vpop.f32.mrf.mxu0
        %v4264 = vadd.f32 0.0, %v4263
        %v4265 = vpop.f32.mrf.mxu0
        %4266 = vdwg.mxu0
        %v4268 = vunpack.c.l.b16 %v4235
        %v4269 = vpack.c.b16 %v4268, %v4268
        %4270 = vrot.lane.b32.xlu0 %v4269, 64
        %v4271 = vpop.permute.xlu0 %4270
        %v4273 = vsel %vm4247, %v4235, 0
        %v4276 = vsel %vm4247, %v4271, 0
        %4278 = vmatpush.bf16.xpose.msra.mxu0 0
        %4279 = vmatpush.bf16.xpose.msra.mxu0 0
        %4280 = vmatpush.bf16.xpose.msra.mxu0 0
        %4281 = vmatpush.bf16.xpose.msra.mxu0 0
        %4282 = vmatpush.bf16.xpose.msra.mxu0 0
        %4283 = vmatpush.bf16.xpose.msra.mxu0 0
        %4284 = vmatpush.bf16.xpose.msra.mxu0 0
        %4285 = vmatpush.bf16.xpose.msra.mxu0 %v4276
        %4286 = vmatmul.bf16.gmra.mxu0 %v4273
        %v4287 = vpop.f32.mrf.mxu0
        %v4288 = vadd.f32 0.0, %v4287
        %v4289 = vpop.f32.mrf.mxu0
        %4290 = vdwg.mxu0
        %v4292 = vunpack.c.l.b16 %v4236
        %v4293 = vpack.c.b16 %v4292, %v4292
        %4294 = vrot.lane.b32.xlu0 %v4293, 64
        %v4295 = vpop.permute.xlu0 %4294
        %v4297 = vsel %vm4247, %v4236, 0
        %v4300 = vsel %vm4247, %v4295, 0
        %4302 = vmatpush.bf16.xpose.msra.mxu0 0
        %4303 = vmatpush.bf16.xpose.msra.mxu0 0
        %4304 = vmatpush.bf16.xpose.msra.mxu0 0
        %4305 = vmatpush.bf16.xpose.msra.mxu0 0
        %4306 = vmatpush.bf16.xpose.msra.mxu0 0
        %4307 = vmatpush.bf16.xpose.msra.mxu0 0
        %4308 = vmatpush.bf16.xpose.msra.mxu0 0
        %4309 = vmatpush.bf16.xpose.msra.mxu0 %v4300
        %4310 = vmatmul.bf16.gmra.mxu0 %v4297
        %v4311 = vpop.f32.mrf.mxu0
        %v4312 = vadd.f32 0.0, %v4311
        %v4313 = vpop.f32.mrf.mxu0
        %4314 = vdwg.mxu0
        %v4316 = vunpack.c.l.b16 %v4237
        %v4317 = vpack.c.b16 %v4316, %v4316
        %4318 = vrot.lane.b32.xlu0 %v4317, 64
        %v4319 = vpop.permute.xlu0 %4318
        %v4321 = vsel %vm4247, %v4237, 0
        %v4324 = vsel %vm4247, %v4319, 0
        %4326 = vmatpush.bf16.xpose.msra.mxu0 0
        %4327 = vmatpush.bf16.xpose.msra.mxu0 0
        %4328 = vmatpush.bf16.xpose.msra.mxu0 0
        %4329 = vmatpush.bf16.xpose.msra.mxu0 0
        %4330 = vmatpush.bf16.xpose.msra.mxu0 0
        %4331 = vmatpush.bf16.xpose.msra.mxu0 0
        %4332 = vmatpush.bf16.xpose.msra.mxu0 0
        %4333 = vmatpush.bf16.xpose.msra.mxu0 %v4324
        %4334 = vmatmul.bf16.gmra.mxu0 %v4321
        %v4335 = vpop.f32.mrf.mxu0
        %v4336 = vadd.f32 0.0, %v4335
        %v4337 = vpop.f32.mrf.mxu0
        %4338 = vdwg.mxu0
        %v4340 = vunpack.c.l.b16 %v4238
        %v4341 = vpack.c.b16 %v4340, %v4340
        %4342 = vrot.lane.b32.xlu0 %v4341, 64
        %v4343 = vpop.permute.xlu0 %4342
        %v4345 = vsel %vm4247, %v4238, 0
        %v4348 = vsel %vm4247, %v4343, 0
        %4350 = vmatpush.bf16.xpose.msra.mxu0 0
        %4351 = vmatpush.bf16.xpose.msra.mxu0 0
        %4352 = vmatpush.bf16.xpose.msra.mxu0 0
        %4353 = vmatpush.bf16.xpose.msra.mxu0 0
        %4354 = vmatpush.bf16.xpose.msra.mxu0 0
        %4355 = vmatpush.bf16.xpose.msra.mxu0 0
        %4356 = vmatpush.bf16.xpose.msra.mxu0 0
        %4357 = vmatpush.bf16.xpose.msra.mxu0 %v4348
        %4358 = vmatmul.bf16.gmra.mxu0 %v4345
        %v4359 = vpop.f32.mrf.mxu0
        %v4360 = vadd.f32 0.0, %v4359
        %v4361 = vpop.f32.mrf.mxu0
        %4362 = vdwg.mxu0
        %v4364 = vunpack.c.l.b16 %v4239
        %v4365 = vpack.c.b16 %v4364, %v4364
        %4366 = vrot.lane.b32.xlu0 %v4365, 64
        %v4367 = vpop.permute.xlu0 %4366
        %v4369 = vsel %vm4247, %v4239, 0
        %v4372 = vsel %vm4247, %v4367, 0
        %4374 = vmatpush.bf16.xpose.msra.mxu0 0
        %4375 = vmatpush.bf16.xpose.msra.mxu0 0
        %4376 = vmatpush.bf16.xpose.msra.mxu0 0
        %4377 = vmatpush.bf16.xpose.msra.mxu0 0
        %4378 = vmatpush.bf16.xpose.msra.mxu0 0
        %4379 = vmatpush.bf16.xpose.msra.mxu0 0
        %4380 = vmatpush.bf16.xpose.msra.mxu0 0
        %4381 = vmatpush.bf16.xpose.msra.mxu0 %v4372
        %4382 = vmatmul.bf16.gmra.mxu0 %v4369
        %v4383 = vpop.f32.mrf.mxu0
        %v4384 = vadd.f32 0.0, %v4383
        %v4385 = vpop.f32.mrf.mxu0
        %4386 = vdwg.mxu0
        %v4388 = vunpack.c.l.b16 %v4240
        %v4389 = vpack.c.b16 %v4388, %v4388
        %4390 = vrot.lane.b32.xlu0 %v4389, 64
        %v4391 = vpop.permute.xlu0 %4390
        %v4393 = vsel %vm4247, %v4240, 0
        %v4396 = vsel %vm4247, %v4391, 0
        %4398 = vmatpush.bf16.xpose.msra.mxu0 0
        %4399 = vmatpush.bf16.xpose.msra.mxu0 0
        %4400 = vmatpush.bf16.xpose.msra.mxu0 0
        %4401 = vmatpush.bf16.xpose.msra.mxu0 0
        %4402 = vmatpush.bf16.xpose.msra.mxu0 0
        %4403 = vmatpush.bf16.xpose.msra.mxu0 0
        %4404 = vmatpush.bf16.xpose.msra.mxu0 0
        %4405 = vmatpush.bf16.xpose.msra.mxu0 %v4396
        %4406 = vmatmul.bf16.gmra.mxu0 %v4393
        %v4407 = vpop.f32.mrf.mxu0
        %v4408 = vadd.f32 0.0, %v4407
        %v4409 = vpop.f32.mrf.mxu0
        %4410 = vdwg.mxu0
        %v4412 = vunpack.c.l.b16 %v4241
        %v4413 = vpack.c.b16 %v4412, %v4412
        %4414 = vrot.lane.b32.xlu0 %v4413, 64
        %v4415 = vpop.permute.xlu0 %4414
        %v4417 = vsel %vm4247, %v4241, 0
        %v4420 = vsel %vm4247, %v4415, 0
        %4422 = vmatpush.bf16.xpose.msra.mxu0 0
        %4423 = vmatpush.bf16.xpose.msra.mxu0 0
        %4424 = vmatpush.bf16.xpose.msra.mxu0 0
        %4425 = vmatpush.bf16.xpose.msra.mxu0 0
        %4426 = vmatpush.bf16.xpose.msra.mxu0 0
        %4427 = vmatpush.bf16.xpose.msra.mxu0 0
        %4428 = vmatpush.bf16.xpose.msra.mxu0 0
        %4429 = vmatpush.bf16.xpose.msra.mxu0 %v4420
        %4430 = vmatmul.bf16.gmra.mxu0 %v4417
        %v4431 = vpop.f32.mrf.mxu0
        %v4432 = vadd.f32 0.0, %v4431
        %v4433 = vpop.f32.mrf.mxu0
        %4434 = vdwg.mxu0
        %v4435 = vld [vmem:[%s5] sm:$0xf]
        %v4436 = vld [vmem:[%s5 + $0x4] sm:$0xf]
        %v4437 = vld [vmem:[%s5 + $0x8] sm:$0xf]
        %v4438 = vld [vmem:[%s5 + $0xc] sm:$0xf]
        %v4439 = vld [vmem:[%s5 + $0x10] sm:$0xf]
        %v4440 = vld [vmem:[%s5 + $0x14] sm:$0xf]
        %v4441 = vld [vmem:[%s5 + $0x18] sm:$0xf]
        %v4442 = vld [vmem:[%s5 + $0x1c] sm:$0xf]
        %vm4443 = vcmp.eq.f32.partialorder %v4435, 0.0
        %vm4444 = vcmp.eq.f32.partialorder %v4436, 0.0
        %vm4445 = vcmp.eq.f32.partialorder %v4437, 0.0
        %vm4446 = vcmp.eq.f32.partialorder %v4438, 0.0
        %vm4447 = vcmp.eq.f32.partialorder %v4439, 0.0
        %vm4448 = vcmp.eq.f32.partialorder %v4440, 0.0
        %vm4449 = vcmp.eq.f32.partialorder %v4441, 0.0
        %vm4450 = vcmp.eq.f32.partialorder %v4442, 0.0
        %v4451 = vsel %vm4443, -1e+09, %v4264
        %v4452 = vsel %vm4444, -1e+09, %v4288
        %v4453 = vsel %vm4445, -1e+09, %v4312
        %v4454 = vsel %vm4446, -1e+09, %v4336
        %v4455 = vsel %vm4447, -1e+09, %v4360
        %v4456 = vsel %vm4448, -1e+09, %v4384
        %v4457 = vsel %vm4449, -1e+09, %v4408
        %v4458 = vsel %vm4450, -1e+09, %v4432
        %vm4459 = vcmask 27648
        %v4460 = vsel %vm4459, %v4451, -inf
        %4461 = vmax.xlane.f32.xlu0 %v4460
        %v4462 = vpop.xlane.xlu0 %4461
        %v4463 = vsel %vm4459, %v4452, -inf
        %4464 = vmax.xlane.f32.xlu0 %v4463
        %v4465 = vpop.xlane.xlu0 %4464
        %v4466 = vsel %vm4459, %v4453, -inf
        %4467 = vmax.xlane.f32.xlu0 %v4466
        %v4468 = vpop.xlane.xlu0 %4467
        %v4469 = vsel %vm4459, %v4454, -inf
        %4470 = vmax.xlane.f32.xlu0 %v4469
        %v4471 = vpop.xlane.xlu0 %4470
        %v4472 = vsel %vm4459, %v4455, -inf
        %4473 = vmax.xlane.f32.xlu0 %v4472
        %v4474 = vpop.xlane.xlu0 %4473
        %v4475 = vsel %vm4459, %v4456, -inf
        %4476 = vmax.xlane.f32.xlu0 %v4475
        %v4477 = vpop.xlane.xlu0 %4476
        %v4478 = vsel %vm4459, %v4457, -inf
        %4479 = vmax.xlane.f32.xlu0 %v4478
        %v4480 = vpop.xlane.xlu0 %4479
        %v4481 = vsel %vm4459, %v4458, -inf
        %4482 = vmax.xlane.f32.xlu0 %v4481
        %v4483 = vpop.xlane.xlu0 %4482
        %v4484 = vsub.f32 %v4451, %v4462
        %v4485 = vsub.f32 %v4452, %v4465
        %v4486 = vsub.f32 %v4453, %v4468
        %v4487 = vsub.f32 %v4454, %v4471
        %v4488 = vsub.f32 %v4455, %v4474
        %v4489 = vsub.f32 %v4456, %v4477
        %v4490 = vsub.f32 %v4457, %v4480
        %v4491 = vsub.f32 %v4458, %v4483
        %v4492 = vmul.f32 %v4484, 1.442695
        %v4493 = vpow.pop %v4492
        %v4494 = vmul.f32 %v4485, 1.442695
        %v4495 = vpow.pop %v4494
        %v4496 = vmul.f32 %v4486, 1.442695
        %v4497 = vpow.pop %v4496
        %v4498 = vmul.f32 %v4487, 1.442695
        %v4499 = vpow.pop %v4498
        %v4500 = vmul.f32 %v4488, 1.442695
        %v4501 = vpow.pop %v4500
        %v4502 = vmul.f32 %v4489, 1.442695
        %v4503 = vpow.pop %v4502
        %v4504 = vmul.f32 %v4490, 1.442695
        %v4505 = vpow.pop %v4504
        %v4506 = vmul.f32 %v4491, 1.442695
        %v4507 = vpow.pop %v4506
        %v4508 = vsel %vm4459, %v4493, 0.0
        %4509 = vadd.xlane.f32.xlu0 %v4508
        %v4510 = vpop.xlane.xlu0 %4509
        %v4511 = vsel %vm4459, %v4495, 0.0
        %4512 = vadd.xlane.f32.xlu0 %v4511
        %v4513 = vpop.xlane.xlu0 %4512
        %v4514 = vsel %vm4459, %v4497, 0.0
        %4515 = vadd.xlane.f32.xlu0 %v4514
        %v4516 = vpop.xlane.xlu0 %4515
        %v4517 = vsel %vm4459, %v4499, 0.0
        %4518 = vadd.xlane.f32.xlu0 %v4517
        %v4519 = vpop.xlane.xlu0 %4518
        %v4520 = vsel %vm4459, %v4501, 0.0
        %4521 = vadd.xlane.f32.xlu0 %v4520
        %v4522 = vpop.xlane.xlu0 %4521
        %v4523 = vsel %vm4459, %v4503, 0.0
        %4524 = vadd.xlane.f32.xlu0 %v4523
        %v4525 = vpop.xlane.xlu0 %4524
        %v4526 = vsel %vm4459, %v4505, 0.0
        %4527 = vadd.xlane.f32.xlu0 %v4526
        %v4528 = vpop.xlane.xlu0 %4527
        %v4529 = vsel %vm4459, %v4507, 0.0
        %4530 = vadd.xlane.f32.xlu0 %v4529
        %v4531 = vpop.xlane.xlu0 %4530
        %v4532 = vrcp.pop %v4510
        %v4533 = vrcp.pop %v4513
        %v4534 = vrcp.pop %v4516
        %v4535 = vrcp.pop %v4519
        %v4536 = vrcp.pop %v4522
        %v4537 = vrcp.pop %v4525
        %v4538 = vrcp.pop %v4528
        %v4539 = vrcp.pop %v4531
        %v4540 = vmul.f32 %v4493, %v4532
        %v4541 = vmul.f32 %v4495, %v4533
        %v4542 = vmul.f32 %v4497, %v4534
        %v4543 = vmul.f32 %v4499, %v4535
        %v4544 = vmul.f32 %v4501, %v4536
        %v4545 = vmul.f32 %v4503, %v4537
        %v4546 = vmul.f32 %v4505, %v4538
        %v4547 = vmul.f32 %v4507, %v4539
        %v4548 = vpack.c.bf16 %v4540, %v4540
        %v4549 = vpack.c.bf16 %v4541, %v4541
        %v4550 = vpack.c.bf16 %v4542, %v4542
        %v4551 = vpack.c.bf16 %v4543, %v4543
        %v4552 = vpack.c.bf16 %v4544, %v4544
        %v4553 = vpack.c.bf16 %v4545, %v4545
        %v4554 = vpack.c.bf16 %v4546, %v4546
        %v4555 = vpack.c.bf16 %v4547, %v4547
        %v4556 = vpack.c.bf16 %v1263, %v1263
        %v4557 = vpack.c.bf16 %v1687, %v1687
        %v4558 = vpack.c.bf16 %v2111, %v2111
        %v4559 = vpack.c.bf16 %v2535, %v2535
        %v4560 = vpack.c.bf16 %v2959, %v2959
        %v4561 = vpack.c.bf16 %v3383, %v3383
        %v4562 = vpack.c.bf16 %v3807, %v3807
        %v4563 = vpack.c.bf16 %v4231, %v4231
        %vm4564 = vcmask 31744
        %v4566 = vsel %vm4564, %v4548, 0
        %vm4568 = vcmask 1041408
        %v4570 = vsel %vm4568, %v4556, 0
        %4572 = vmatpush.bf16.msra.mxu0 0
        %4573 = vmatpush.bf16.msra.mxu0 0
        %4574 = vmatpush.bf16.msra.mxu0 0
        %4575 = vmatpush.bf16.msra.mxu0 0
        %4576 = vmatpush.bf16.msra.mxu0 0
        %4577 = vmatpush.bf16.msra.mxu0 0
        %4578 = vmatpush.bf16.msra.mxu0 0
        %4579 = vmatpush.bf16.msra.mxu0 %v4570
        %4580 = vmatmul.bf16.gmra.mxu0 %v4566
        %v4581 = vpop.f32.mrf.mxu0
        %v4582 = vadd.f32 0.0, %v4581
        %v4583 = vpop.f32.mrf.mxu0
        %4584 = vdwg.mxu0
        %v4586 = vsel %vm4564, %v4549, 0
        %v4589 = vsel %vm4568, %v4557, 0
        %4591 = vmatpush.bf16.msra.mxu0 0
        %4592 = vmatpush.bf16.msra.mxu0 0
        %4593 = vmatpush.bf16.msra.mxu0 0
        %4594 = vmatpush.bf16.msra.mxu0 0
        %4595 = vmatpush.bf16.msra.mxu0 0
        %4596 = vmatpush.bf16.msra.mxu0 0
        %4597 = vmatpush.bf16.msra.mxu0 0
        %4598 = vmatpush.bf16.msra.mxu0 %v4589
        %4599 = vmatmul.bf16.gmra.mxu0 %v4586
        %v4600 = vpop.f32.mrf.mxu0
        %v4601 = vadd.f32 0.0, %v4600
        %v4602 = vpop.f32.mrf.mxu0
        %4603 = vdwg.mxu0
        %v4605 = vsel %vm4564, %v4550, 0
        %v4608 = vsel %vm4568, %v4558, 0
        %4610 = vmatpush.bf16.msra.mxu0 0
        %4611 = vmatpush.bf16.msra.mxu0 0
        %4612 = vmatpush.bf16.msra.mxu0 0
        %4613 = vmatpush.bf16.msra.mxu0 0
        %4614 = vmatpush.bf16.msra.mxu0 0
        %4615 = vmatpush.bf16.msra.mxu0 0
        %4616 = vmatpush.bf16.msra.mxu0 0
        %4617 = vmatpush.bf16.msra.mxu0 %v4608
        %4618 = vmatmul.bf16.gmra.mxu0 %v4605
        %v4619 = vpop.f32.mrf.mxu0
        %v4620 = vadd.f32 0.0, %v4619
        %v4621 = vpop.f32.mrf.mxu0
        %4622 = vdwg.mxu0
        %v4624 = vsel %vm4564, %v4551, 0
        %v4627 = vsel %vm4568, %v4559, 0
        %4629 = vmatpush.bf16.msra.mxu0 0
        %4630 = vmatpush.bf16.msra.mxu0 0
        %4631 = vmatpush.bf16.msra.mxu0 0
        %4632 = vmatpush.bf16.msra.mxu0 0
        %4633 = vmatpush.bf16.msra.mxu0 0
        %4634 = vmatpush.bf16.msra.mxu0 0
        %4635 = vmatpush.bf16.msra.mxu0 0
        %4636 = vmatpush.bf16.msra.mxu0 %v4627
        %4637 = vmatmul.bf16.gmra.mxu0 %v4624
        %v4638 = vpop.f32.mrf.mxu0
        %v4639 = vadd.f32 0.0, %v4638
        %v4640 = vpop.f32.mrf.mxu0
        %4641 = vdwg.mxu0
        %v4643 = vsel %vm4564, %v4552, 0
        %v4646 = vsel %vm4568, %v4560, 0
        %4648 = vmatpush.bf16.msra.mxu0 0
        %4649 = vmatpush.bf16.msra.mxu0 0
        %4650 = vmatpush.bf16.msra.mxu0 0
        %4651 = vmatpush.bf16.msra.mxu0 0
        %4652 = vmatpush.bf16.msra.mxu0 0
        %4653 = vmatpush.bf16.msra.mxu0 0
        %4654 = vmatpush.bf16.msra.mxu0 0
        %4655 = vmatpush.bf16.msra.mxu0 %v4646
        %4656 = vmatmul.bf16.gmra.mxu0 %v4643
        %v4657 = vpop.f32.mrf.mxu0
        %v4658 = vadd.f32 0.0, %v4657
        %v4659 = vpop.f32.mrf.mxu0
        %4660 = vdwg.mxu0
        %v4662 = vsel %vm4564, %v4553, 0
        %v4665 = vsel %vm4568, %v4561, 0
        %4667 = vmatpush.bf16.msra.mxu0 0
        %4668 = vmatpush.bf16.msra.mxu0 0
        %4669 = vmatpush.bf16.msra.mxu0 0
        %4670 = vmatpush.bf16.msra.mxu0 0
        %4671 = vmatpush.bf16.msra.mxu0 0
        %4672 = vmatpush.bf16.msra.mxu0 0
        %4673 = vmatpush.bf16.msra.mxu0 0
        %4674 = vmatpush.bf16.msra.mxu0 %v4665
        %4675 = vmatmul.bf16.gmra.mxu0 %v4662
        %v4676 = vpop.f32.mrf.mxu0
        %v4677 = vadd.f32 0.0, %v4676
        %v4678 = vpop.f32.mrf.mxu0
        %4679 = vdwg.mxu0
        %v4681 = vsel %vm4564, %v4554, 0
        %v4684 = vsel %vm4568, %v4562, 0
        %4686 = vmatpush.bf16.msra.mxu0 0
        %4687 = vmatpush.bf16.msra.mxu0 0
        %4688 = vmatpush.bf16.msra.mxu0 0
        %4689 = vmatpush.bf16.msra.mxu0 0
        %4690 = vmatpush.bf16.msra.mxu0 0
        %4691 = vmatpush.bf16.msra.mxu0 0
        %4692 = vmatpush.bf16.msra.mxu0 0
        %4693 = vmatpush.bf16.msra.mxu0 %v4684
        %4694 = vmatmul.bf16.gmra.mxu0 %v4681
        %v4695 = vpop.f32.mrf.mxu0
        %v4696 = vadd.f32 0.0, %v4695
        %v4697 = vpop.f32.mrf.mxu0
        %4698 = vdwg.mxu0
        %v4700 = vsel %vm4564, %v4555, 0
        %v4703 = vsel %vm4568, %v4563, 0
        %4705 = vmatpush.bf16.msra.mxu0 0
        %4706 = vmatpush.bf16.msra.mxu0 0
        %4707 = vmatpush.bf16.msra.mxu0 0
        %4708 = vmatpush.bf16.msra.mxu0 0
        %4709 = vmatpush.bf16.msra.mxu0 0
        %4710 = vmatpush.bf16.msra.mxu0 0
        %4711 = vmatpush.bf16.msra.mxu0 0
        %4712 = vmatpush.bf16.msra.mxu0 %v4703
        %4713 = vmatmul.bf16.gmra.mxu0 %v4700
        %v4714 = vpop.f32.mrf.mxu0
        %v4715 = vadd.f32 0.0, %v4714
        %v4716 = vpop.f32.mrf.mxu0
        %4717 = vdwg.mxu0
        %v4718 = vpack.c.bf16 %v4582, %v4582
        %v4719 = vpack.c.bf16 %v4601, %v4601
        %v4720 = vpack.c.bf16 %v4620, %v4620
        %v4721 = vpack.c.bf16 %v4639, %v4639
        %v4722 = vpack.c.bf16 %v4658, %v4658
        %v4723 = vpack.c.bf16 %v4677, %v4677
        %v4724 = vpack.c.bf16 %v4696, %v4696
        %v4725 = vpack.c.bf16 %v4715, %v4715
        %v4726 = vld [vmem:[%s3] sm:$0xff]
        %v4727 = vld [vmem:[%s3 + $0x8] sm:$0xff]
        %v4728 = vld [vmem:[%s3 + $0x10] sm:$0xff]
        %v4729 = vld [vmem:[%s3 + $0x18] sm:$0xff]
        %v4730 = vld [vmem:[%s3 + $0x20] sm:$0xff]
        %v4731 = vld [vmem:[%s3 + $0x28] sm:$0xff]
        %v4732 = vld [vmem:[%s3 + $0x30] sm:$0xff]
        %v4733 = vld [vmem:[%s3 + $0x38] sm:$0xff]
        %v4734 = vld [vmem:[%s3 + $0x40] sm:$0xff]
        %v4735 = vld [vmem:[%s3 + $0x48] sm:$0xff]
        %v4736 = vld [vmem:[%s3 + $0x50] sm:$0xff]
        %v4737 = vld [vmem:[%s3 + $0x58] sm:$0xff]
        %v4738 = vld [vmem:[%s3 + $0x60] sm:$0xff]
        %v4739 = vld [vmem:[%s3 + $0x68] sm:$0xff]
        %v4740 = vld [vmem:[%s3 + $0x70] sm:$0xff]
        %v4741 = vld [vmem:[%s3 + $0x78] sm:$0xff]
        %v4742 = vld [vmem:[%s3 + $0x80] sm:$0xff]
        %v4743 = vld [vmem:[%s3 + $0x88] sm:$0xff]
        %v4744 = vld [vmem:[%s3 + $0x90] sm:$0xff]
        %v4745 = vld [vmem:[%s3 + $0x98] sm:$0xff]
        %v4746 = vld [vmem:[%s3 + $0xa0] sm:$0xff]
        %v4747 = vld [vmem:[%s3 + $0xa8] sm:$0xff]
        %v4748 = vld [vmem:[%s3 + $0xb0] sm:$0xff]
        %v4749 = vld [vmem:[%s3 + $0xb8] sm:$0xff]
        %v4750 = vld [vmem:[%s3 + $0xc0] sm:$0xff]
        %v4751 = vld [vmem:[%s3 + $0xc8] sm:$0xff]
        %v4752 = vld [vmem:[%s3 + $0xd0] sm:$0xff]
        %v4753 = vld [vmem:[%s3 + $0xd8] sm:$0xff]
        %v4754 = vld [vmem:[%s3 + $0xe0] sm:$0xff]
        %v4755 = vld [vmem:[%s3 + $0xe8] sm:$0xff]
        %v4756 = vld [vmem:[%s3 + $0xf0] sm:$0xff]
        %v4757 = vld [vmem:[%s3 + $0xf8] sm:$0xff]
        %v4758 = vld [vmem:[%s3 + $0x100] sm:$0xff]
        %v4759 = vld [vmem:[%s3 + $0x108] sm:$0xff]
        %v4760 = vld [vmem:[%s3 + $0x110] sm:$0xff]
        %v4761 = vld [vmem:[%s3 + $0x118] sm:$0xff]
        %v4762 = vld [vmem:[%s3 + $0x120] sm:$0xff]
        %v4763 = vld [vmem:[%s3 + $0x128] sm:$0xff]
        %v4764 = vld [vmem:[%s3 + $0x130] sm:$0xff]
        %v4765 = vld [vmem:[%s3 + $0x138] sm:$0xff]
        %v4766 = vld [vmem:[%s3 + $0x140] sm:$0xff]
        %v4767 = vld [vmem:[%s3 + $0x148] sm:$0xff]
        %v4768 = vld [vmem:[%s3 + $0x150] sm:$0xff]
        %v4769 = vld [vmem:[%s3 + $0x158] sm:$0xff]
        %v4770 = vld [vmem:[%s3 + $0x160] sm:$0xff]
        %v4771 = vld [vmem:[%s3 + $0x168] sm:$0xff]
        %v4772 = vld [vmem:[%s3 + $0x170] sm:$0xff]
        %v4773 = vld [vmem:[%s3 + $0x178] sm:$0xff]
        %v4774 = vld [vmem:[%s3 + $0x180] sm:$0xff]
        %v4775 = vld [vmem:[%s3 + $0x188] sm:$0xff]
        %v4776 = vld [vmem:[%s3 + $0x190] sm:$0xff]
        %v4777 = vld [vmem:[%s3 + $0x198] sm:$0xff]
        %v4778 = vld [vmem:[%s3 + $0x1a0] sm:$0xff]
        %v4779 = vld [vmem:[%s3 + $0x1a8] sm:$0xff]
        %v4780 = vld [vmem:[%s3 + $0x1b0] sm:$0xff]
        %v4781 = vld [vmem:[%s3 + $0x1b8] sm:$0xff]
        %v4782 = vld [vmem:[%s3 + $0x1c0] sm:$0xff]
        %v4783 = vld [vmem:[%s3 + $0x1c8] sm:$0xff]
        %v4784 = vld [vmem:[%s3 + $0x1d0] sm:$0xff]
        %v4785 = vld [vmem:[%s3 + $0x1d8] sm:$0xff]
        %v4786 = vld [vmem:[%s3 + $0x1e0] sm:$0xff]
        %v4787 = vld [vmem:[%s3 + $0x1e8] sm:$0xff]
        %v4788 = vld [vmem:[%s3 + $0x1f0] sm:$0xff]
        %v4789 = vld [vmem:[%s3 + $0x1f8] sm:$0xff]
        %v4790 = vld [vmem:[%s3 + $0x200] sm:$0xff]
        %v4791 = vld [vmem:[%s3 + $0x208] sm:$0xff]
        %v4792 = vld [vmem:[%s3 + $0x210] sm:$0xff]
        %v4793 = vld [vmem:[%s3 + $0x218] sm:$0xff]
        %v4794 = vld [vmem:[%s3 + $0x220] sm:$0xff]
        %v4795 = vld [vmem:[%s3 + $0x228] sm:$0xff]
        %v4796 = vld [vmem:[%s3 + $0x230] sm:$0xff]
        %v4797 = vld [vmem:[%s3 + $0x238] sm:$0xff]
        %v4798 = vld [vmem:[%s3 + $0x240] sm:$0xff]
        %v4799 = vld [vmem:[%s3 + $0x248] sm:$0xff]
        %v4800 = vld [vmem:[%s3 + $0x250] sm:$0xff]
        %v4801 = vld [vmem:[%s3 + $0x258] sm:$0xff]
        %v4802 = vld [vmem:[%s3 + $0x260] sm:$0xff]
        %v4803 = vld [vmem:[%s3 + $0x268] sm:$0xff]
        %v4804 = vld [vmem:[%s3 + $0x270] sm:$0xff]
        %v4805 = vld [vmem:[%s3 + $0x278] sm:$0xff]
        %v4806 = vld [vmem:[%s3 + $0x280] sm:$0xff]
        %v4807 = vld [vmem:[%s3 + $0x288] sm:$0xff]
        %v4808 = vld [vmem:[%s3 + $0x290] sm:$0xff]
        %v4809 = vld [vmem:[%s3 + $0x298] sm:$0xff]
        %v4810 = vld [vmem:[%s3 + $0x2a0] sm:$0xff]
        %v4811 = vld [vmem:[%s3 + $0x2a8] sm:$0xff]
        %v4812 = vld [vmem:[%s3 + $0x2b0] sm:$0xff]
        %v4813 = vld [vmem:[%s3 + $0x2b8] sm:$0xff]
        %v4814 = vld [vmem:[%s3 + $0x2c0] sm:$0xff]
        %v4815 = vld [vmem:[%s3 + $0x2c8] sm:$0xff]
        %v4816 = vld [vmem:[%s3 + $0x2d0] sm:$0xff]
        %v4817 = vld [vmem:[%s3 + $0x2d8] sm:$0xff]
        %v4818 = vld [vmem:[%s3 + $0x2e0] sm:$0xff]
        %v4819 = vld [vmem:[%s3 + $0x2e8] sm:$0xff]
        %v4820 = vld [vmem:[%s3 + $0x2f0] sm:$0xff]
        %v4821 = vld [vmem:[%s3 + $0x2f8] sm:$0xff]
        %v4822 = vld [vmem:[%s3 + $0x300] sm:$0xff]
        %v4823 = vld [vmem:[%s3 + $0x308] sm:$0xff]
        %v4824 = vld [vmem:[%s3 + $0x310] sm:$0xff]
        %v4825 = vld [vmem:[%s3 + $0x318] sm:$0xff]
        %v4826 = vld [vmem:[%s3 + $0x320] sm:$0xff]
        %v4827 = vld [vmem:[%s3 + $0x328] sm:$0xff]
        %v4828 = vld [vmem:[%s3 + $0x330] sm:$0xff]
        %v4829 = vld [vmem:[%s3 + $0x338] sm:$0xff]
        %v4830 = vld [vmem:[%s3 + $0x340] sm:$0xff]
        %v4831 = vld [vmem:[%s3 + $0x348] sm:$0xff]
        %v4832 = vld [vmem:[%s3 + $0x350] sm:$0xff]
        %v4833 = vld [vmem:[%s3 + $0x358] sm:$0xff]
        %v4834 = vld [vmem:[%s3 + $0x360] sm:$0xff]
        %v4835 = vld [vmem:[%s3 + $0x368] sm:$0xff]
        %v4836 = vld [vmem:[%s3 + $0x370] sm:$0xff]
        %v4837 = vld [vmem:[%s3 + $0x378] sm:$0xff]
        %v4838 = vld [vmem:[%s3 + $0x380] sm:$0xff]
        %v4839 = vld [vmem:[%s3 + $0x388] sm:$0xff]
        %v4840 = vld [vmem:[%s3 + $0x390] sm:$0xff]
        %v4841 = vld [vmem:[%s3 + $0x398] sm:$0xff]
        %v4842 = vld [vmem:[%s3 + $0x3a0] sm:$0xff]
        %v4843 = vld [vmem:[%s3 + $0x3a8] sm:$0xff]
        %v4844 = vld [vmem:[%s3 + $0x3b0] sm:$0xff]
        %v4845 = vld [vmem:[%s3 + $0x3b8] sm:$0xff]
        %v4846 = vld [vmem:[%s3 + $0x3c0] sm:$0xff]
        %v4847 = vld [vmem:[%s3 + $0x3c8] sm:$0xff]
        %v4848 = vld [vmem:[%s3 + $0x3d0] sm:$0xff]
        %v4849 = vld [vmem:[%s3 + $0x3d8] sm:$0xff]
        %v4850 = vld [vmem:[%s3 + $0x3e0] sm:$0xff]
        %v4851 = vld [vmem:[%s3 + $0x3e8] sm:$0xff]
        %v4852 = vld [vmem:[%s3 + $0x3f0] sm:$0xff]
        %v4853 = vld [vmem:[%s3 + $0x3f8] sm:$0xff]
        %v4870 = vunpack.c.l.b16 %v4726
        %v4871 = vunpack.c.h.b16 %v4726
        %v4872 = vunpack.c.l.b16 %v4727
        %v4873 = vunpack.c.h.b16 %v4727
        %v4874 = vunpack.c.l.b16 %v4728
        %v4875 = vunpack.c.h.b16 %v4728
        %v4876 = vunpack.c.l.b16 %v4729
        %v4877 = vunpack.c.h.b16 %v4729
        %v4878 = vunpack.c.l.b16 %v4730
        %v4879 = vunpack.c.h.b16 %v4730
        %v4880 = vunpack.c.l.b16 %v4731
        %v4881 = vunpack.c.h.b16 %v4731
        %v4882 = vunpack.c.l.b16 %v4732
        %v4883 = vunpack.c.h.b16 %v4732
        %v4884 = vunpack.c.l.b16 %v4733
        %v4885 = vunpack.c.h.b16 %v4733
        %v4886 = vunpack.c.l.b16 %v4734
        %v4887 = vunpack.c.h.b16 %v4734
        %v4888 = vunpack.c.l.b16 %v4735
        %v4889 = vunpack.c.h.b16 %v4735
        %v4890 = vunpack.c.l.b16 %v4736
        %v4891 = vunpack.c.h.b16 %v4736
        %v4892 = vunpack.c.l.b16 %v4737
        %v4893 = vunpack.c.h.b16 %v4737
        %v4894 = vunpack.c.l.b16 %v4738
        %v4895 = vunpack.c.h.b16 %v4738
        %v4896 = vunpack.c.l.b16 %v4739
        %v4897 = vunpack.c.h.b16 %v4739
        %v4898 = vunpack.c.l.b16 %v4740
        %v4899 = vunpack.c.h.b16 %v4740
        %v4900 = vunpack.c.l.b16 %v4741
        %v4901 = vunpack.c.h.b16 %v4741
        %v4902 = vpack.c.b16 %v4874, %v4870
        %v4903 = vpack.c.b16 %v4875, %v4871
        %v4904 = vpack.c.b16 %v4876, %v4872
        %v4905 = vpack.c.b16 %v4877, %v4873
        %v4906 = vpack.c.b16 %v4882, %v4878
        %v4907 = vpack.c.b16 %v4883, %v4879
        %v4908 = vpack.c.b16 %v4884, %v4880
        %v4909 = vpack.c.b16 %v4885, %v4881
        %v4910 = vpack.c.b16 %v4890, %v4886
        %v4911 = vpack.c.b16 %v4891, %v4887
        %v4912 = vpack.c.b16 %v4892, %v4888
        %v4913 = vpack.c.b16 %v4893, %v4889
        %v4914 = vpack.c.b16 %v4898, %v4894
        %v4915 = vpack.c.b16 %v4899, %v4895
        %v4916 = vpack.c.b16 %v4900, %v4896
        %v4917 = vpack.c.b16 %v4901, %v4897
        %v4935 = vsel %vm4247, %v4718, 0
        %4937 = vmatpush.bf16.msra.mxu0 0
        %4938 = vmatpush.bf16.msra.mxu0 0
        %4939 = vmatpush.bf16.msra.mxu0 0
        %4940 = vmatpush.bf16.msra.mxu0 0
        %4941 = vmatpush.bf16.msra.mxu0 %v4914
        %4942 = vmatpush.bf16.msra.mxu0 %v4910
        %4943 = vmatpush.bf16.msra.mxu0 %v4906
        %4944 = vmatpush.bf16.msra.mxu0 %v4902
        %4945 = vmatmul.bf16.gmra.mxu0 %v4935
        %v4946 = vpop.f32.mrf.mxu0
        %v4947 = vadd.f32 0.0, %v4946
        %v4948 = vpop.f32.mrf.mxu0
        %4949 = vdwg.mxu0
        %4950 = vmatpush.bf16.msra.mxu0 0
        %4951 = vmatpush.bf16.msra.mxu0 0
        %4952 = vmatpush.bf16.msra.mxu0 0
        %4953 = vmatpush.bf16.msra.mxu0 0
        %4954 = vmatpush.bf16.msra.mxu0 %v4915
        %4955 = vmatpush.bf16.msra.mxu0 %v4911
        %4956 = vmatpush.bf16.msra.mxu0 %v4907
        %4957 = vmatpush.bf16.msra.mxu0 %v4903
        %4958 = vmatmul.bf16.gmra.mxu0 %v4935
        %v4959 = vpop.f32.mrf.mxu0
        %v4960 = vadd.f32 0.0, %v4959
        %v4961 = vpop.f32.mrf.mxu0
        %4962 = vdwg.mxu0
        %4963 = vmatpush.bf16.msra.mxu0 0
        %4964 = vmatpush.bf16.msra.mxu0 0
        %4965 = vmatpush.bf16.msra.mxu0 0
        %4966 = vmatpush.bf16.msra.mxu0 0
        %4967 = vmatpush.bf16.msra.mxu0 %v4916
        %4968 = vmatpush.bf16.msra.mxu0 %v4912
        %4969 = vmatpush.bf16.msra.mxu0 %v4908
        %4970 = vmatpush.bf16.msra.mxu0 %v4904
        %4971 = vmatmul.bf16.gmra.mxu0 %v4935
        %v4972 = vpop.f32.mrf.mxu0
        %v4973 = vadd.f32 0.0, %v4972
        %v4974 = vpop.f32.mrf.mxu0
        %4975 = vdwg.mxu0
        %4976 = vmatpush.bf16.msra.mxu0 0
        %4977 = vmatpush.bf16.msra.mxu0 0
        %4978 = vmatpush.bf16.msra.mxu0 0
        %4979 = vmatpush.bf16.msra.mxu0 0
        %4980 = vmatpush.bf16.msra.mxu0 %v4917
        %4981 = vmatpush.bf16.msra.mxu0 %v4913
        %4982 = vmatpush.bf16.msra.mxu0 %v4909
        %4983 = vmatpush.bf16.msra.mxu0 %v4905
        %4984 = vmatmul.bf16.gmra.mxu0 %v4935
        %v4985 = vpop.f32.mrf.mxu0
        %v4986 = vadd.f32 0.0, %v4985
        %v4987 = vpop.f32.mrf.mxu0
        %4988 = vdwg.mxu0
        %v5005 = vunpack.c.l.b16 %v4742
        %v5006 = vunpack.c.h.b16 %v4742
        %v5007 = vunpack.c.l.b16 %v4743
        %v5008 = vunpack.c.h.b16 %v4743
        %v5009 = vunpack.c.l.b16 %v4744
        %v5010 = vunpack.c.h.b16 %v4744
        %v5011 = vunpack.c.l.b16 %v4745
        %v5012 = vunpack.c.h.b16 %v4745
        %v5013 = vunpack.c.l.b16 %v4746
        %v5014 = vunpack.c.h.b16 %v4746
        %v5015 = vunpack.c.l.b16 %v4747
        %v5016 = vunpack.c.h.b16 %v4747
        %v5017 = vunpack.c.l.b16 %v4748
        %v5018 = vunpack.c.h.b16 %v4748
        %v5019 = vunpack.c.l.b16 %v4749
        %v5020 = vunpack.c.h.b16 %v4749
        %v5021 = vunpack.c.l.b16 %v4750
        %v5022 = vunpack.c.h.b16 %v4750
        %v5023 = vunpack.c.l.b16 %v4751
        %v5024 = vunpack.c.h.b16 %v4751
        %v5025 = vunpack.c.l.b16 %v4752
        %v5026 = vunpack.c.h.b16 %v4752
        %v5027 = vunpack.c.l.b16 %v4753
        %v5028 = vunpack.c.h.b16 %v4753
        %v5029 = vunpack.c.l.b16 %v4754
        %v5030 = vunpack.c.h.b16 %v4754
        %v5031 = vunpack.c.l.b16 %v4755
        %v5032 = vunpack.c.h.b16 %v4755
        %v5033 = vunpack.c.l.b16 %v4756
        %v5034 = vunpack.c.h.b16 %v4756
        %v5035 = vunpack.c.l.b16 %v4757
        %v5036 = vunpack.c.h.b16 %v4757
        %v5037 = vpack.c.b16 %v5009, %v5005
        %v5038 = vpack.c.b16 %v5010, %v5006
        %v5039 = vpack.c.b16 %v5011, %v5007
        %v5040 = vpack.c.b16 %v5012, %v5008
        %v5041 = vpack.c.b16 %v5017, %v5013
        %v5042 = vpack.c.b16 %v5018, %v5014
        %v5043 = vpack.c.b16 %v5019, %v5015
        %v5044 = vpack.c.b16 %v5020, %v5016
        %v5045 = vpack.c.b16 %v5025, %v5021
        %v5046 = vpack.c.b16 %v5026, %v5022
        %v5047 = vpack.c.b16 %v5027, %v5023
        %v5048 = vpack.c.b16 %v5028, %v5024
        %v5049 = vpack.c.b16 %v5033, %v5029
        %v5050 = vpack.c.b16 %v5034, %v5030
        %v5051 = vpack.c.b16 %v5035, %v5031
        %v5052 = vpack.c.b16 %v5036, %v5032
        %v5070 = vsel %vm4247, %v4719, 0
        %5072 = vmatpush.bf16.msra.mxu0 0
        %5073 = vmatpush.bf16.msra.mxu0 0
        %5074 = vmatpush.bf16.msra.mxu0 0
        %5075 = vmatpush.bf16.msra.mxu0 0
        %5076 = vmatpush.bf16.msra.mxu0 %v5049
        %5077 = vmatpush.bf16.msra.mxu0 %v5045
        %5078 = vmatpush.bf16.msra.mxu0 %v5041
        %5079 = vmatpush.bf16.msra.mxu0 %v5037
        %5080 = vmatmul.bf16.gmra.mxu0 %v5070
        %v5081 = vpop.f32.mrf.mxu0
        %v5082 = vadd.f32 0.0, %v5081
        %v5083 = vpop.f32.mrf.mxu0
        %5084 = vdwg.mxu0
        %5085 = vmatpush.bf16.msra.mxu0 0
        %5086 = vmatpush.bf16.msra.mxu0 0
        %5087 = vmatpush.bf16.msra.mxu0 0
        %5088 = vmatpush.bf16.msra.mxu0 0
        %5089 = vmatpush.bf16.msra.mxu0 %v5050
        %5090 = vmatpush.bf16.msra.mxu0 %v5046
        %5091 = vmatpush.bf16.msra.mxu0 %v5042
        %5092 = vmatpush.bf16.msra.mxu0 %v5038
        %5093 = vmatmul.bf16.gmra.mxu0 %v5070
        %v5094 = vpop.f32.mrf.mxu0
        %v5095 = vadd.f32 0.0, %v5094
        %v5096 = vpop.f32.mrf.mxu0
        %5097 = vdwg.mxu0
        %5098 = vmatpush.bf16.msra.mxu0 0
        %5099 = vmatpush.bf16.msra.mxu0 0
        %5100 = vmatpush.bf16.msra.mxu0 0
        %5101 = vmatpush.bf16.msra.mxu0 0
        %5102 = vmatpush.bf16.msra.mxu0 %v5051
        %5103 = vmatpush.bf16.msra.mxu0 %v5047
        %5104 = vmatpush.bf16.msra.mxu0 %v5043
        %5105 = vmatpush.bf16.msra.mxu0 %v5039
        %5106 = vmatmul.bf16.gmra.mxu0 %v5070
        %v5107 = vpop.f32.mrf.mxu0
        %v5108 = vadd.f32 0.0, %v5107
        %v5109 = vpop.f32.mrf.mxu0
        %5110 = vdwg.mxu0
        %5111 = vmatpush.bf16.msra.mxu0 0
        %5112 = vmatpush.bf16.msra.mxu0 0
        %5113 = vmatpush.bf16.msra.mxu0 0
        %5114 = vmatpush.bf16.msra.mxu0 0
        %5115 = vmatpush.bf16.msra.mxu0 %v5052
        %5116 = vmatpush.bf16.msra.mxu0 %v5048
        %5117 = vmatpush.bf16.msra.mxu0 %v5044
        %5118 = vmatpush.bf16.msra.mxu0 %v5040
        %5119 = vmatmul.bf16.gmra.mxu0 %v5070
        %v5120 = vpop.f32.mrf.mxu0
        %v5121 = vadd.f32 0.0, %v5120
        %v5122 = vpop.f32.mrf.mxu0
        %5123 = vdwg.mxu0
        %v5140 = vunpack.c.l.b16 %v4758
        %v5141 = vunpack.c.h.b16 %v4758
        %v5142 = vunpack.c.l.b16 %v4759
        %v5143 = vunpack.c.h.b16 %v4759
        %v5144 = vunpack.c.l.b16 %v4760
        %v5145 = vunpack.c.h.b16 %v4760
        %v5146 = vunpack.c.l.b16 %v4761
        %v5147 = vunpack.c.h.b16 %v4761
        %v5148 = vunpack.c.l.b16 %v4762
        %v5149 = vunpack.c.h.b16 %v4762
        %v5150 = vunpack.c.l.b16 %v4763
        %v5151 = vunpack.c.h.b16 %v4763
        %v5152 = vunpack.c.l.b16 %v4764
        %v5153 = vunpack.c.h.b16 %v4764
        %v5154 = vunpack.c.l.b16 %v4765
        %v5155 = vunpack.c.h.b16 %v4765
        %v5156 = vunpack.c.l.b16 %v4766
        %v5157 = vunpack.c.h.b16 %v4766
        %v5158 = vunpack.c.l.b16 %v4767
        %v5159 = vunpack.c.h.b16 %v4767
        %v5160 = vunpack.c.l.b16 %v4768
        %v5161 = vunpack.c.h.b16 %v4768
        %v5162 = vunpack.c.l.b16 %v4769
        %v5163 = vunpack.c.h.b16 %v4769
        %v5164 = vunpack.c.l.b16 %v4770
        %v5165 = vunpack.c.h.b16 %v4770
        %v5166 = vunpack.c.l.b16 %v4771
        %v5167 = vunpack.c.h.b16 %v4771
        %v5168 = vunpack.c.l.b16 %v4772
        %v5169 = vunpack.c.h.b16 %v4772
        %v5170 = vunpack.c.l.b16 %v4773
        %v5171 = vunpack.c.h.b16 %v4773
        %v5172 = vpack.c.b16 %v5144, %v5140
        %v5173 = vpack.c.b16 %v5145, %v5141
        %v5174 = vpack.c.b16 %v5146, %v5142
        %v5175 = vpack.c.b16 %v5147, %v5143
        %v5176 = vpack.c.b16 %v5152, %v5148
        %v5177 = vpack.c.b16 %v5153, %v5149
        %v5178 = vpack.c.b16 %v5154, %v5150
        %v5179 = vpack.c.b16 %v5155, %v5151
        %v5180 = vpack.c.b16 %v5160, %v5156
        %v5181 = vpack.c.b16 %v5161, %v5157
        %v5182 = vpack.c.b16 %v5162, %v5158
        %v5183 = vpack.c.b16 %v5163, %v5159
        %v5184 = vpack.c.b16 %v5168, %v5164
        %v5185 = vpack.c.b16 %v5169, %v5165
        %v5186 = vpack.c.b16 %v5170, %v5166
        %v5187 = vpack.c.b16 %v5171, %v5167
        %v5205 = vsel %vm4247, %v4720, 0
        %5207 = vmatpush.bf16.msra.mxu0 0
        %5208 = vmatpush.bf16.msra.mxu0 0
        %5209 = vmatpush.bf16.msra.mxu0 0
        %5210 = vmatpush.bf16.msra.mxu0 0
        %5211 = vmatpush.bf16.msra.mxu0 %v5184
        %5212 = vmatpush.bf16.msra.mxu0 %v5180
        %5213 = vmatpush.bf16.msra.mxu0 %v5176
        %5214 = vmatpush.bf16.msra.mxu0 %v5172
        %5215 = vmatmul.bf16.gmra.mxu0 %v5205
        %v5216 = vpop.f32.mrf.mxu0
        %v5217 = vadd.f32 0.0, %v5216
        %v5218 = vpop.f32.mrf.mxu0
        %5219 = vdwg.mxu0
        %5220 = vmatpush.bf16.msra.mxu0 0
        %5221 = vmatpush.bf16.msra.mxu0 0
        %5222 = vmatpush.bf16.msra.mxu0 0
        %5223 = vmatpush.bf16.msra.mxu0 0
        %5224 = vmatpush.bf16.msra.mxu0 %v5185
        %5225 = vmatpush.bf16.msra.mxu0 %v5181
        %5226 = vmatpush.bf16.msra.mxu0 %v5177
        %5227 = vmatpush.bf16.msra.mxu0 %v5173
        %5228 = vmatmul.bf16.gmra.mxu0 %v5205
        %v5229 = vpop.f32.mrf.mxu0
        %v5230 = vadd.f32 0.0, %v5229
        %v5231 = vpop.f32.mrf.mxu0
        %5232 = vdwg.mxu0
        %5233 = vmatpush.bf16.msra.mxu0 0
        %5234 = vmatpush.bf16.msra.mxu0 0
        %5235 = vmatpush.bf16.msra.mxu0 0
        %5236 = vmatpush.bf16.msra.mxu0 0
        %5237 = vmatpush.bf16.msra.mxu0 %v5186
        %5238 = vmatpush.bf16.msra.mxu0 %v5182
        %5239 = vmatpush.bf16.msra.mxu0 %v5178
        %5240 = vmatpush.bf16.msra.mxu0 %v5174
        %5241 = vmatmul.bf16.gmra.mxu0 %v5205
        %v5242 = vpop.f32.mrf.mxu0
        %v5243 = vadd.f32 0.0, %v5242
        %v5244 = vpop.f32.mrf.mxu0
        %5245 = vdwg.mxu0
        %5246 = vmatpush.bf16.msra.mxu0 0
        %5247 = vmatpush.bf16.msra.mxu0 0
        %5248 = vmatpush.bf16.msra.mxu0 0
        %5249 = vmatpush.bf16.msra.mxu0 0
        %5250 = vmatpush.bf16.msra.mxu0 %v5187
        %5251 = vmatpush.bf16.msra.mxu0 %v5183
        %5252 = vmatpush.bf16.msra.mxu0 %v5179
        %5253 = vmatpush.bf16.msra.mxu0 %v5175
        %5254 = vmatmul.bf16.gmra.mxu0 %v5205
        %v5255 = vpop.f32.mrf.mxu0
        %v5256 = vadd.f32 0.0, %v5255
        %v5257 = vpop.f32.mrf.mxu0
        %5258 = vdwg.mxu0
        %v5275 = vunpack.c.l.b16 %v4774
        %v5276 = vunpack.c.h.b16 %v4774
        %v5277 = vunpack.c.l.b16 %v4775
        %v5278 = vunpack.c.h.b16 %v4775
        %v5279 = vunpack.c.l.b16 %v4776
        %v5280 = vunpack.c.h.b16 %v4776
        %v5281 = vunpack.c.l.b16 %v4777
        %v5282 = vunpack.c.h.b16 %v4777
        %v5283 = vunpack.c.l.b16 %v4778
        %v5284 = vunpack.c.h.b16 %v4778
        %v5285 = vunpack.c.l.b16 %v4779
        %v5286 = vunpack.c.h.b16 %v4779
        %v5287 = vunpack.c.l.b16 %v4780
        %v5288 = vunpack.c.h.b16 %v4780
        %v5289 = vunpack.c.l.b16 %v4781
        %v5290 = vunpack.c.h.b16 %v4781
        %v5291 = vunpack.c.l.b16 %v4782
        %v5292 = vunpack.c.h.b16 %v4782
        %v5293 = vunpack.c.l.b16 %v4783
        %v5294 = vunpack.c.h.b16 %v4783
        %v5295 = vunpack.c.l.b16 %v4784
        %v5296 = vunpack.c.h.b16 %v4784
        %v5297 = vunpack.c.l.b16 %v4785
        %v5298 = vunpack.c.h.b16 %v4785
        %v5299 = vunpack.c.l.b16 %v4786
        %v5300 = vunpack.c.h.b16 %v4786
        %v5301 = vunpack.c.l.b16 %v4787
        %v5302 = vunpack.c.h.b16 %v4787
        %v5303 = vunpack.c.l.b16 %v4788
        %v5304 = vunpack.c.h.b16 %v4788
        %v5305 = vunpack.c.l.b16 %v4789
        %v5306 = vunpack.c.h.b16 %v4789
        %v5307 = vpack.c.b16 %v5279, %v5275
        %v5308 = vpack.c.b16 %v5280, %v5276
        %v5309 = vpack.c.b16 %v5281, %v5277
        %v5310 = vpack.c.b16 %v5282, %v5278
        %v5311 = vpack.c.b16 %v5287, %v5283
        %v5312 = vpack.c.b16 %v5288, %v5284
        %v5313 = vpack.c.b16 %v5289, %v5285
        %v5314 = vpack.c.b16 %v5290, %v5286
        %v5315 = vpack.c.b16 %v5295, %v5291
        %v5316 = vpack.c.b16 %v5296, %v5292
        %v5317 = vpack.c.b16 %v5297, %v5293
        %v5318 = vpack.c.b16 %v5298, %v5294
        %v5319 = vpack.c.b16 %v5303, %v5299
        %v5320 = vpack.c.b16 %v5304, %v5300
        %v5321 = vpack.c.b16 %v5305, %v5301
        %v5322 = vpack.c.b16 %v5306, %v5302
        %v5340 = vsel %vm4247, %v4721, 0
        %5342 = vmatpush.bf16.msra.mxu0 0
        %5343 = vmatpush.bf16.msra.mxu0 0
        %5344 = vmatpush.bf16.msra.mxu0 0
        %5345 = vmatpush.bf16.msra.mxu0 0
        %5346 = vmatpush.bf16.msra.mxu0 %v5319
        %5347 = vmatpush.bf16.msra.mxu0 %v5315
        %5348 = vmatpush.bf16.msra.mxu0 %v5311
        %5349 = vmatpush.bf16.msra.mxu0 %v5307
        %5350 = vmatmul.bf16.gmra.mxu0 %v5340
        %v5351 = vpop.f32.mrf.mxu0
        %v5352 = vadd.f32 0.0, %v5351
        %v5353 = vpop.f32.mrf.mxu0
        %5354 = vdwg.mxu0
        %5355 = vmatpush.bf16.msra.mxu0 0
        %5356 = vmatpush.bf16.msra.mxu0 0
        %5357 = vmatpush.bf16.msra.mxu0 0
        %5358 = vmatpush.bf16.msra.mxu0 0
        %5359 = vmatpush.bf16.msra.mxu0 %v5320
        %5360 = vmatpush.bf16.msra.mxu0 %v5316
        %5361 = vmatpush.bf16.msra.mxu0 %v5312
        %5362 = vmatpush.bf16.msra.mxu0 %v5308
        %5363 = vmatmul.bf16.gmra.mxu0 %v5340
        %v5364 = vpop.f32.mrf.mxu0
        %v5365 = vadd.f32 0.0, %v5364
        %v5366 = vpop.f32.mrf.mxu0
        %5367 = vdwg.mxu0
        %5368 = vmatpush.bf16.msra.mxu0 0
        %5369 = vmatpush.bf16.msra.mxu0 0
        %5370 = vmatpush.bf16.msra.mxu0 0
        %5371 = vmatpush.bf16.msra.mxu0 0
        %5372 = vmatpush.bf16.msra.mxu0 %v5321
        %5373 = vmatpush.bf16.msra.mxu0 %v5317
        %5374 = vmatpush.bf16.msra.mxu0 %v5313
        %5375 = vmatpush.bf16.msra.mxu0 %v5309
        %5376 = vmatmul.bf16.gmra.mxu0 %v5340
        %v5377 = vpop.f32.mrf.mxu0
        %v5378 = vadd.f32 0.0, %v5377
        %v5379 = vpop.f32.mrf.mxu0
        %5380 = vdwg.mxu0
        %5381 = vmatpush.bf16.msra.mxu0 0
        %5382 = vmatpush.bf16.msra.mxu0 0
        %5383 = vmatpush.bf16.msra.mxu0 0
        %5384 = vmatpush.bf16.msra.mxu0 0
        %5385 = vmatpush.bf16.msra.mxu0 %v5322
        %5386 = vmatpush.bf16.msra.mxu0 %v5318
        %5387 = vmatpush.bf16.msra.mxu0 %v5314
        %5388 = vmatpush.bf16.msra.mxu0 %v5310
        %5389 = vmatmul.bf16.gmra.mxu0 %v5340
        %v5390 = vpop.f32.mrf.mxu0
        %v5391 = vadd.f32 0.0, %v5390
        %v5392 = vpop.f32.mrf.mxu0
        %5393 = vdwg.mxu0
        %v5410 = vunpack.c.l.b16 %v4790
        %v5411 = vunpack.c.h.b16 %v4790
        %v5412 = vunpack.c.l.b16 %v4791
        %v5413 = vunpack.c.h.b16 %v4791
        %v5414 = vunpack.c.l.b16 %v4792
        %v5415 = vunpack.c.h.b16 %v4792
        %v5416 = vunpack.c.l.b16 %v4793
        %v5417 = vunpack.c.h.b16 %v4793
        %v5418 = vunpack.c.l.b16 %v4794
        %v5419 = vunpack.c.h.b16 %v4794
        %v5420 = vunpack.c.l.b16 %v4795
        %v5421 = vunpack.c.h.b16 %v4795
        %v5422 = vunpack.c.l.b16 %v4796
        %v5423 = vunpack.c.h.b16 %v4796
        %v5424 = vunpack.c.l.b16 %v4797
        %v5425 = vunpack.c.h.b16 %v4797
        %v5426 = vunpack.c.l.b16 %v4798
        %v5427 = vunpack.c.h.b16 %v4798
        %v5428 = vunpack.c.l.b16 %v4799
        %v5429 = vunpack.c.h.b16 %v4799
        %v5430 = vunpack.c.l.b16 %v4800
        %v5431 = vunpack.c.h.b16 %v4800
        %v5432 = vunpack.c.l.b16 %v4801
        %v5433 = vunpack.c.h.b16 %v4801
        %v5434 = vunpack.c.l.b16 %v4802
        %v5435 = vunpack.c.h.b16 %v4802
        %v5436 = vunpack.c.l.b16 %v4803
        %v5437 = vunpack.c.h.b16 %v4803
        %v5438 = vunpack.c.l.b16 %v4804
        %v5439 = vunpack.c.h.b16 %v4804
        %v5440 = vunpack.c.l.b16 %v4805
        %v5441 = vunpack.c.h.b16 %v4805
        %v5442 = vpack.c.b16 %v5414, %v5410
        %v5443 = vpack.c.b16 %v5415, %v5411
        %v5444 = vpack.c.b16 %v5416, %v5412
        %v5445 = vpack.c.b16 %v5417, %v5413
        %v5446 = vpack.c.b16 %v5422, %v5418
        %v5447 = vpack.c.b16 %v5423, %v5419
        %v5448 = vpack.c.b16 %v5424, %v5420
        %v5449 = vpack.c.b16 %v5425, %v5421
        %v5450 = vpack.c.b16 %v5430, %v5426
        %v5451 = vpack.c.b16 %v5431, %v5427
        %v5452 = vpack.c.b16 %v5432, %v5428
        %v5453 = vpack.c.b16 %v5433, %v5429
        %v5454 = vpack.c.b16 %v5438, %v5434
        %v5455 = vpack.c.b16 %v5439, %v5435
        %v5456 = vpack.c.b16 %v5440, %v5436
        %v5457 = vpack.c.b16 %v5441, %v5437
        %v5475 = vsel %vm4247, %v4722, 0
        %5477 = vmatpush.bf16.msra.mxu0 0
        %5478 = vmatpush.bf16.msra.mxu0 0
        %5479 = vmatpush.bf16.msra.mxu0 0
        %5480 = vmatpush.bf16.msra.mxu0 0
        %5481 = vmatpush.bf16.msra.mxu0 %v5454
        %5482 = vmatpush.bf16.msra.mxu0 %v5450
        %5483 = vmatpush.bf16.msra.mxu0 %v5446
        %5484 = vmatpush.bf16.msra.mxu0 %v5442
        %5485 = vmatmul.bf16.gmra.mxu0 %v5475
        %v5486 = vpop.f32.mrf.mxu0
        %v5487 = vadd.f32 0.0, %v5486
        %v5488 = vpop.f32.mrf.mxu0
        %5489 = vdwg.mxu0
        %5490 = vmatpush.bf16.msra.mxu0 0
        %5491 = vmatpush.bf16.msra.mxu0 0
        %5492 = vmatpush.bf16.msra.mxu0 0
        %5493 = vmatpush.bf16.msra.mxu0 0
        %5494 = vmatpush.bf16.msra.mxu0 %v5455
        %5495 = vmatpush.bf16.msra.mxu0 %v5451
        %5496 = vmatpush.bf16.msra.mxu0 %v5447
        %5497 = vmatpush.bf16.msra.mxu0 %v5443
        %5498 = vmatmul.bf16.gmra.mxu0 %v5475
        %v5499 = vpop.f32.mrf.mxu0
        %v5500 = vadd.f32 0.0, %v5499
        %v5501 = vpop.f32.mrf.mxu0
        %5502 = vdwg.mxu0
        %5503 = vmatpush.bf16.msra.mxu0 0
        %5504 = vmatpush.bf16.msra.mxu0 0
        %5505 = vmatpush.bf16.msra.mxu0 0
        %5506 = vmatpush.bf16.msra.mxu0 0
        %5507 = vmatpush.bf16.msra.mxu0 %v5456
        %5508 = vmatpush.bf16.msra.mxu0 %v5452
        %5509 = vmatpush.bf16.msra.mxu0 %v5448
        %5510 = vmatpush.bf16.msra.mxu0 %v5444
        %5511 = vmatmul.bf16.gmra.mxu0 %v5475
        %v5512 = vpop.f32.mrf.mxu0
        %v5513 = vadd.f32 0.0, %v5512
        %v5514 = vpop.f32.mrf.mxu0
        %5515 = vdwg.mxu0
        %5516 = vmatpush.bf16.msra.mxu0 0
        %5517 = vmatpush.bf16.msra.mxu0 0
        %5518 = vmatpush.bf16.msra.mxu0 0
        %5519 = vmatpush.bf16.msra.mxu0 0
        %5520 = vmatpush.bf16.msra.mxu0 %v5457
        %5521 = vmatpush.bf16.msra.mxu0 %v5453
        %5522 = vmatpush.bf16.msra.mxu0 %v5449
        %5523 = vmatpush.bf16.msra.mxu0 %v5445
        %5524 = vmatmul.bf16.gmra.mxu0 %v5475
        %v5525 = vpop.f32.mrf.mxu0
        %v5526 = vadd.f32 0.0, %v5525
        %v5527 = vpop.f32.mrf.mxu0
        %5528 = vdwg.mxu0
        %v5545 = vunpack.c.l.b16 %v4806
        %v5546 = vunpack.c.h.b16 %v4806
        %v5547 = vunpack.c.l.b16 %v4807
        %v5548 = vunpack.c.h.b16 %v4807
        %v5549 = vunpack.c.l.b16 %v4808
        %v5550 = vunpack.c.h.b16 %v4808
        %v5551 = vunpack.c.l.b16 %v4809
        %v5552 = vunpack.c.h.b16 %v4809
        %v5553 = vunpack.c.l.b16 %v4810
        %v5554 = vunpack.c.h.b16 %v4810
        %v5555 = vunpack.c.l.b16 %v4811
        %v5556 = vunpack.c.h.b16 %v4811
        %v5557 = vunpack.c.l.b16 %v4812
        %v5558 = vunpack.c.h.b16 %v4812
        %v5559 = vunpack.c.l.b16 %v4813
        %v5560 = vunpack.c.h.b16 %v4813
        %v5561 = vunpack.c.l.b16 %v4814
        %v5562 = vunpack.c.h.b16 %v4814
        %v5563 = vunpack.c.l.b16 %v4815
        %v5564 = vunpack.c.h.b16 %v4815
        %v5565 = vunpack.c.l.b16 %v4816
        %v5566 = vunpack.c.h.b16 %v4816
        %v5567 = vunpack.c.l.b16 %v4817
        %v5568 = vunpack.c.h.b16 %v4817
        %v5569 = vunpack.c.l.b16 %v4818
        %v5570 = vunpack.c.h.b16 %v4818
        %v5571 = vunpack.c.l.b16 %v4819
        %v5572 = vunpack.c.h.b16 %v4819
        %v5573 = vunpack.c.l.b16 %v4820
        %v5574 = vunpack.c.h.b16 %v4820
        %v5575 = vunpack.c.l.b16 %v4821
        %v5576 = vunpack.c.h.b16 %v4821
        %v5577 = vpack.c.b16 %v5549, %v5545
        %v5578 = vpack.c.b16 %v5550, %v5546
        %v5579 = vpack.c.b16 %v5551, %v5547
        %v5580 = vpack.c.b16 %v5552, %v5548
        %v5581 = vpack.c.b16 %v5557, %v5553
        %v5582 = vpack.c.b16 %v5558, %v5554
        %v5583 = vpack.c.b16 %v5559, %v5555
        %v5584 = vpack.c.b16 %v5560, %v5556
        %v5585 = vpack.c.b16 %v5565, %v5561
        %v5586 = vpack.c.b16 %v5566, %v5562
        %v5587 = vpack.c.b16 %v5567, %v5563
        %v5588 = vpack.c.b16 %v5568, %v5564
        %v5589 = vpack.c.b16 %v5573, %v5569
        %v5590 = vpack.c.b16 %v5574, %v5570
        %v5591 = vpack.c.b16 %v5575, %v5571
        %v5592 = vpack.c.b16 %v5576, %v5572
        %v5610 = vsel %vm4247, %v4723, 0
        %5612 = vmatpush.bf16.msra.mxu0 0
        %5613 = vmatpush.bf16.msra.mxu0 0
        %5614 = vmatpush.bf16.msra.mxu0 0
        %5615 = vmatpush.bf16.msra.mxu0 0
        %5616 = vmatpush.bf16.msra.mxu0 %v5589
        %5617 = vmatpush.bf16.msra.mxu0 %v5585
        %5618 = vmatpush.bf16.msra.mxu0 %v5581
        %5619 = vmatpush.bf16.msra.mxu0 %v5577
        %5620 = vmatmul.bf16.gmra.mxu0 %v5610
        %v5621 = vpop.f32.mrf.mxu0
        %v5622 = vadd.f32 0.0, %v5621
        %v5623 = vpop.f32.mrf.mxu0
        %5624 = vdwg.mxu0
        %5625 = vmatpush.bf16.msra.mxu0 0
        %5626 = vmatpush.bf16.msra.mxu0 0
        %5627 = vmatpush.bf16.msra.mxu0 0
        %5628 = vmatpush.bf16.msra.mxu0 0
        %5629 = vmatpush.bf16.msra.mxu0 %v5590
        %5630 = vmatpush.bf16.msra.mxu0 %v5586
        %5631 = vmatpush.bf16.msra.mxu0 %v5582
        %5632 = vmatpush.bf16.msra.mxu0 %v5578
        %5633 = vmatmul.bf16.gmra.mxu0 %v5610
        %v5634 = vpop.f32.mrf.mxu0
        %v5635 = vadd.f32 0.0, %v5634
        %v5636 = vpop.f32.mrf.mxu0
        %5637 = vdwg.mxu0
        %5638 = vmatpush.bf16.msra.mxu0 0
        %5639 = vmatpush.bf16.msra.mxu0 0
        %5640 = vmatpush.bf16.msra.mxu0 0
        %5641 = vmatpush.bf16.msra.mxu0 0
        %5642 = vmatpush.bf16.msra.mxu0 %v5591
        %5643 = vmatpush.bf16.msra.mxu0 %v5587
        %5644 = vmatpush.bf16.msra.mxu0 %v5583
        %5645 = vmatpush.bf16.msra.mxu0 %v5579
        %5646 = vmatmul.bf16.gmra.mxu0 %v5610
        %v5647 = vpop.f32.mrf.mxu0
        %v5648 = vadd.f32 0.0, %v5647
        %v5649 = vpop.f32.mrf.mxu0
        %5650 = vdwg.mxu0
        %5651 = vmatpush.bf16.msra.mxu0 0
        %5652 = vmatpush.bf16.msra.mxu0 0
        %5653 = vmatpush.bf16.msra.mxu0 0
        %5654 = vmatpush.bf16.msra.mxu0 0
        %5655 = vmatpush.bf16.msra.mxu0 %v5592
        %5656 = vmatpush.bf16.msra.mxu0 %v5588
        %5657 = vmatpush.bf16.msra.mxu0 %v5584
        %5658 = vmatpush.bf16.msra.mxu0 %v5580
        %5659 = vmatmul.bf16.gmra.mxu0 %v5610
        %v5660 = vpop.f32.mrf.mxu0
        %v5661 = vadd.f32 0.0, %v5660
        %v5662 = vpop.f32.mrf.mxu0
        %5663 = vdwg.mxu0
        %v5680 = vunpack.c.l.b16 %v4822
        %v5681 = vunpack.c.h.b16 %v4822
        %v5682 = vunpack.c.l.b16 %v4823
        %v5683 = vunpack.c.h.b16 %v4823
        %v5684 = vunpack.c.l.b16 %v4824
        %v5685 = vunpack.c.h.b16 %v4824
        %v5686 = vunpack.c.l.b16 %v4825
        %v5687 = vunpack.c.h.b16 %v4825
        %v5688 = vunpack.c.l.b16 %v4826
        %v5689 = vunpack.c.h.b16 %v4826
        %v5690 = vunpack.c.l.b16 %v4827
        %v5691 = vunpack.c.h.b16 %v4827
        %v5692 = vunpack.c.l.b16 %v4828
        %v5693 = vunpack.c.h.b16 %v4828
        %v5694 = vunpack.c.l.b16 %v4829
        %v5695 = vunpack.c.h.b16 %v4829
        %v5696 = vunpack.c.l.b16 %v4830
        %v5697 = vunpack.c.h.b16 %v4830
        %v5698 = vunpack.c.l.b16 %v4831
        %v5699 = vunpack.c.h.b16 %v4831
        %v5700 = vunpack.c.l.b16 %v4832
        %v5701 = vunpack.c.h.b16 %v4832
        %v5702 = vunpack.c.l.b16 %v4833
        %v5703 = vunpack.c.h.b16 %v4833
        %v5704 = vunpack.c.l.b16 %v4834
        %v5705 = vunpack.c.h.b16 %v4834
        %v5706 = vunpack.c.l.b16 %v4835
        %v5707 = vunpack.c.h.b16 %v4835
        %v5708 = vunpack.c.l.b16 %v4836
        %v5709 = vunpack.c.h.b16 %v4836
        %v5710 = vunpack.c.l.b16 %v4837
        %v5711 = vunpack.c.h.b16 %v4837
        %v5712 = vpack.c.b16 %v5684, %v5680
        %v5713 = vpack.c.b16 %v5685, %v5681
        %v5714 = vpack.c.b16 %v5686, %v5682
        %v5715 = vpack.c.b16 %v5687, %v5683
        %v5716 = vpack.c.b16 %v5692, %v5688
        %v5717 = vpack.c.b16 %v5693, %v5689
        %v5718 = vpack.c.b16 %v5694, %v5690
        %v5719 = vpack.c.b16 %v5695, %v5691
        %v5720 = vpack.c.b16 %v5700, %v5696
        %v5721 = vpack.c.b16 %v5701, %v5697
        %v5722 = vpack.c.b16 %v5702, %v5698
        %v5723 = vpack.c.b16 %v5703, %v5699
        %v5724 = vpack.c.b16 %v5708, %v5704
        %v5725 = vpack.c.b16 %v5709, %v5705
        %v5726 = vpack.c.b16 %v5710, %v5706
        %v5727 = vpack.c.b16 %v5711, %v5707
        %v5745 = vsel %vm4247, %v4724, 0
        %5747 = vmatpush.bf16.msra.mxu0 0
        %5748 = vmatpush.bf16.msra.mxu0 0
        %5749 = vmatpush.bf16.msra.mxu0 0
        %5750 = vmatpush.bf16.msra.mxu0 0
        %5751 = vmatpush.bf16.msra.mxu0 %v5724
        %5752 = vmatpush.bf16.msra.mxu0 %v5720
        %5753 = vmatpush.bf16.msra.mxu0 %v5716
        %5754 = vmatpush.bf16.msra.mxu0 %v5712
        %5755 = vmatmul.bf16.gmra.mxu0 %v5745
        %v5756 = vpop.f32.mrf.mxu0
        %v5757 = vadd.f32 0.0, %v5756
        %v5758 = vpop.f32.mrf.mxu0
        %5759 = vdwg.mxu0
        %5760 = vmatpush.bf16.msra.mxu0 0
        %5761 = vmatpush.bf16.msra.mxu0 0
        %5762 = vmatpush.bf16.msra.mxu0 0
        %5763 = vmatpush.bf16.msra.mxu0 0
        %5764 = vmatpush.bf16.msra.mxu0 %v5725
        %5765 = vmatpush.bf16.msra.mxu0 %v5721
        %5766 = vmatpush.bf16.msra.mxu0 %v5717
        %5767 = vmatpush.bf16.msra.mxu0 %v5713
        %5768 = vmatmul.bf16.gmra.mxu0 %v5745
        %v5769 = vpop.f32.mrf.mxu0
        %v5770 = vadd.f32 0.0, %v5769
        %v5771 = vpop.f32.mrf.mxu0
        %5772 = vdwg.mxu0
        %5773 = vmatpush.bf16.msra.mxu0 0
        %5774 = vmatpush.bf16.msra.mxu0 0
        %5775 = vmatpush.bf16.msra.mxu0 0
        %5776 = vmatpush.bf16.msra.mxu0 0
        %5777 = vmatpush.bf16.msra.mxu0 %v5726
        %5778 = vmatpush.bf16.msra.mxu0 %v5722
        %5779 = vmatpush.bf16.msra.mxu0 %v5718
        %5780 = vmatpush.bf16.msra.mxu0 %v5714
        %5781 = vmatmul.bf16.gmra.mxu0 %v5745
        %v5782 = vpop.f32.mrf.mxu0
        %v5783 = vadd.f32 0.0, %v5782
        %v5784 = vpop.f32.mrf.mxu0
        %5785 = vdwg.mxu0
        %5786 = vmatpush.bf16.msra.mxu0 0
        %5787 = vmatpush.bf16.msra.mxu0 0
        %5788 = vmatpush.bf16.msra.mxu0 0
        %5789 = vmatpush.bf16.msra.mxu0 0
        %5790 = vmatpush.bf16.msra.mxu0 %v5727
        %5791 = vmatpush.bf16.msra.mxu0 %v5723
        %5792 = vmatpush.bf16.msra.mxu0 %v5719
        %5793 = vmatpush.bf16.msra.mxu0 %v5715
        %5794 = vmatmul.bf16.gmra.mxu0 %v5745
        %v5795 = vpop.f32.mrf.mxu0
        %v5796 = vadd.f32 0.0, %v5795
        %v5797 = vpop.f32.mrf.mxu0
        %5798 = vdwg.mxu0
        %v5815 = vunpack.c.l.b16 %v4838
        %v5816 = vunpack.c.h.b16 %v4838
        %v5817 = vunpack.c.l.b16 %v4839
        %v5818 = vunpack.c.h.b16 %v4839
        %v5819 = vunpack.c.l.b16 %v4840
        %v5820 = vunpack.c.h.b16 %v4840
        %v5821 = vunpack.c.l.b16 %v4841
        %v5822 = vunpack.c.h.b16 %v4841
        %v5823 = vunpack.c.l.b16 %v4842
        %v5824 = vunpack.c.h.b16 %v4842
        %v5825 = vunpack.c.l.b16 %v4843
        %v5826 = vunpack.c.h.b16 %v4843
        %v5827 = vunpack.c.l.b16 %v4844
        %v5828 = vunpack.c.h.b16 %v4844
        %v5829 = vunpack.c.l.b16 %v4845
        %v5830 = vunpack.c.h.b16 %v4845
        %v5831 = vunpack.c.l.b16 %v4846
        %v5832 = vunpack.c.h.b16 %v4846
        %v5833 = vunpack.c.l.b16 %v4847
        %v5834 = vunpack.c.h.b16 %v4847
        %v5835 = vunpack.c.l.b16 %v4848
        %v5836 = vunpack.c.h.b16 %v4848
        %v5837 = vunpack.c.l.b16 %v4849
        %v5838 = vunpack.c.h.b16 %v4849
        %v5839 = vunpack.c.l.b16 %v4850
        %v5840 = vunpack.c.h.b16 %v4850
        %v5841 = vunpack.c.l.b16 %v4851
        %v5842 = vunpack.c.h.b16 %v4851
        %v5843 = vunpack.c.l.b16 %v4852
        %v5844 = vunpack.c.h.b16 %v4852
        %v5845 = vunpack.c.l.b16 %v4853
        %v5846 = vunpack.c.h.b16 %v4853
        %v5847 = vpack.c.b16 %v5819, %v5815
        %v5848 = vpack.c.b16 %v5820, %v5816
        %v5849 = vpack.c.b16 %v5821, %v5817
        %v5850 = vpack.c.b16 %v5822, %v5818
        %v5851 = vpack.c.b16 %v5827, %v5823
        %v5852 = vpack.c.b16 %v5828, %v5824
        %v5853 = vpack.c.b16 %v5829, %v5825
        %v5854 = vpack.c.b16 %v5830, %v5826
        %v5855 = vpack.c.b16 %v5835, %v5831
        %v5856 = vpack.c.b16 %v5836, %v5832
        %v5857 = vpack.c.b16 %v5837, %v5833
        %v5858 = vpack.c.b16 %v5838, %v5834
        %v5859 = vpack.c.b16 %v5843, %v5839
        %v5860 = vpack.c.b16 %v5844, %v5840
        %v5861 = vpack.c.b16 %v5845, %v5841
        %v5862 = vpack.c.b16 %v5846, %v5842
        %v5880 = vsel %vm4247, %v4725, 0
        %5882 = vmatpush.bf16.msra.mxu0 0
        %5883 = vmatpush.bf16.msra.mxu0 0
        %5884 = vmatpush.bf16.msra.mxu0 0
        %5885 = vmatpush.bf16.msra.mxu0 0
        %5886 = vmatpush.bf16.msra.mxu0 %v5859
        %5887 = vmatpush.bf16.msra.mxu0 %v5855
        %5888 = vmatpush.bf16.msra.mxu0 %v5851
        %5889 = vmatpush.bf16.msra.mxu0 %v5847
        %5890 = vmatmul.bf16.gmra.mxu0 %v5880
        %v5891 = vpop.f32.mrf.mxu0
        %v5892 = vadd.f32 0.0, %v5891
        %v5893 = vpop.f32.mrf.mxu0
        %5894 = vdwg.mxu0
        %5895 = vmatpush.bf16.msra.mxu0 0
        %5896 = vmatpush.bf16.msra.mxu0 0
        %5897 = vmatpush.bf16.msra.mxu0 0
        %5898 = vmatpush.bf16.msra.mxu0 0
        %5899 = vmatpush.bf16.msra.mxu0 %v5860
        %5900 = vmatpush.bf16.msra.mxu0 %v5856
        %5901 = vmatpush.bf16.msra.mxu0 %v5852
        %5902 = vmatpush.bf16.msra.mxu0 %v5848
        %5903 = vmatmul.bf16.gmra.mxu0 %v5880
        %v5904 = vpop.f32.mrf.mxu0
        %v5905 = vadd.f32 0.0, %v5904
        %v5906 = vpop.f32.mrf.mxu0
        %5907 = vdwg.mxu0
        %5908 = vmatpush.bf16.msra.mxu0 0
        %5909 = vmatpush.bf16.msra.mxu0 0
        %5910 = vmatpush.bf16.msra.mxu0 0
        %5911 = vmatpush.bf16.msra.mxu0 0
        %5912 = vmatpush.bf16.msra.mxu0 %v5861
        %5913 = vmatpush.bf16.msra.mxu0 %v5857
        %5914 = vmatpush.bf16.msra.mxu0 %v5853
        %5915 = vmatpush.bf16.msra.mxu0 %v5849
        %5916 = vmatmul.bf16.gmra.mxu0 %v5880
        %v5917 = vpop.f32.mrf.mxu0
        %v5918 = vadd.f32 0.0, %v5917
        %v5919 = vpop.f32.mrf.mxu0
        %5920 = vdwg.mxu0
        %5921 = vmatpush.bf16.msra.mxu0 0
        %5922 = vmatpush.bf16.msra.mxu0 0
        %5923 = vmatpush.bf16.msra.mxu0 0
        %5924 = vmatpush.bf16.msra.mxu0 0
        %5925 = vmatpush.bf16.msra.mxu0 %v5862
        %5926 = vmatpush.bf16.msra.mxu0 %v5858
        %5927 = vmatpush.bf16.msra.mxu0 %v5854
        %5928 = vmatpush.bf16.msra.mxu0 %v5850
        %5929 = vmatmul.bf16.gmra.mxu0 %v5880
        %v5930 = vpop.f32.mrf.mxu0
        %v5931 = vadd.f32 0.0, %v5930
        %v5932 = vpop.f32.mrf.mxu0
        %5933 = vdwg.mxu0
        %vm5934 = vcmask 1043456
        %v5935 = vsel %vm5934, %v4947, 0.0
        %v5936 = vsel %vm5934, %v5082, 0.0
        %v5937 = vadd.f32 %v5935, %v5936
        %v5938 = vsel %vm5934, %v5217, 0.0
        %v5939 = vadd.f32 %v5937, %v5938
        %v5940 = vsel %vm5934, %v5352, 0.0
        %v5941 = vadd.f32 %v5939, %v5940
        %v5942 = vsel %vm5934, %v5487, 0.0
        %v5943 = vadd.f32 %v5941, %v5942
        %v5944 = vsel %vm5934, %v5622, 0.0
        %v5945 = vadd.f32 %v5943, %v5944
        %v5946 = vsel %vm5934, %v5757, 0.0
        %v5947 = vadd.f32 %v5945, %v5946
        %v5948 = vsel %vm5934, %v5892, 0.0
        %v5949 = vadd.f32 %v5947, %v5948
        %v5950 = vsel %vm5934, %v4960, 0.0
        %v5951 = vsel %vm5934, %v5095, 0.0
        %v5952 = vadd.f32 %v5950, %v5951
        %v5953 = vsel %vm5934, %v5230, 0.0
        %v5954 = vadd.f32 %v5952, %v5953
        %v5955 = vsel %vm5934, %v5365, 0.0
        %v5956 = vadd.f32 %v5954, %v5955
        %v5957 = vsel %vm5934, %v5500, 0.0
        %v5958 = vadd.f32 %v5956, %v5957
        %v5959 = vsel %vm5934, %v5635, 0.0
        %v5960 = vadd.f32 %v5958, %v5959
        %v5961 = vsel %vm5934, %v5770, 0.0
        %v5962 = vadd.f32 %v5960, %v5961
        %v5963 = vsel %vm5934, %v5905, 0.0
        %v5964 = vadd.f32 %v5962, %v5963
        %v5965 = vsel %vm5934, %v4973, 0.0
        %v5966 = vsel %vm5934, %v5108, 0.0
        %v5967 = vadd.f32 %v5965, %v5966
        %v5968 = vsel %vm5934, %v5243, 0.0
        %v5969 = vadd.f32 %v5967, %v5968
        %v5970 = vsel %vm5934, %v5378, 0.0
        %v5971 = vadd.f32 %v5969, %v5970
        %v5972 = vsel %vm5934, %v5513, 0.0
        %v5973 = vadd.f32 %v5971, %v5972
        %v5974 = vsel %vm5934, %v5648, 0.0
        %v5975 = vadd.f32 %v5973, %v5974
        %v5976 = vsel %vm5934, %v5783, 0.0
        %v5977 = vadd.f32 %v5975, %v5976
        %v5978 = vsel %vm5934, %v5918, 0.0
        %v5979 = vadd.f32 %v5977, %v5978
        %v5980 = vsel %vm5934, %v4986, 0.0
        %v5981 = vsel %vm5934, %v5121, 0.0
        %v5982 = vadd.f32 %v5980, %v5981
        %v5983 = vsel %vm5934, %v5256, 0.0
        %v5984 = vadd.f32 %v5982, %v5983
        %v5985 = vsel %vm5934, %v5391, 0.0
        %v5986 = vadd.f32 %v5984, %v5985
        %v5987 = vsel %vm5934, %v5526, 0.0
        %v5988 = vadd.f32 %v5986, %v5987
        %v5989 = vsel %vm5934, %v5661, 0.0
        %v5990 = vadd.f32 %v5988, %v5989
        %v5991 = vsel %vm5934, %v5796, 0.0
        %v5992 = vadd.f32 %v5990, %v5991
        %v5993 = vsel %vm5934, %v5931, 0.0
        %v5994 = vadd.f32 %v5992, %v5993
        %v5995 = vld [vmem:[%s4] sm:$0xf]
        %v5997 = vperm.slane %v5995, 0
        %v5998 = vperm.slane %v5995, 1
        %v5999 = vperm.slane %v5995, 2
        %v6000 = vperm.slane %v5995, 3
        %v6005 = vadd.f32 %v5949, %v5997
        %v6006 = vadd.f32 %v5964, %v5998
        %v6007 = vadd.f32 %v5979, %v5999
        %v6008 = vadd.f32 %v5994, %v6000
        %v6013 = vrot.slane %v6006, 4
        %v6014 = vrot.slane %v6008, 4
        %v6015 = vsel %vm5934, %v6005, %v6013
        %v6016 = vsel %vm5934, %v6007, %v6014
        %6019 = vst [vmem:[%s244] sm:$0xff] %v6015
        %6020 = vst [vmem:[%s244 + $0x8] sm:$0xff] %v6016
        %s6021 = sand.u32 %s159, 1
        %s6022 = scalar_lea.sflag [#allocation3], %s6021
        %s6023 = sand.u32 %s159, 1
        %s6024 = smul.addr %s6023, 16
        %s6025 = scalar_lea.vmem [#allocation2], %s6024
        // Predicated region
        $region45: #{tpu_custom_call.1} parent=43 // pred_check
          %p6026 = pneg %p169
        $region46: #{tpu_custom_call.1} parent=43 // pred_check_branch
          %6028 = sbr.rel (%p6026) target = $region48
        $region47: #{tpu_custom_call.1} parent=43 // pred_region
          %6030 = vsyncadd %s6022, 0
          %s6031 = smul.addr %s20, 4
          %s6032 = smul.addr %s6031, 4
          %s6033 = scalar_lea.hbm %s6, %s6032
          %s6035 = sshll.u32 %s6025, 4
          %s6036 = int_to_ptr.vmem [resolvable:$true] %s6035
          %s6037 = sshll.u32 %s6033, 4
          %s6038 = int_to_ptr.hbm [resolvable:$true] %s6037
          %6040 = dma.vmem_to_hbm [thread:$0]  %s6036, 256, %s6038, %s6022
        $region48: #{tpu_custom_call.1} parent=43 // pred_fallthru
          _
      $region44: #{tpu_custom_call.1} parent=5 // pred_fallthru
        _
      %p6041 = scmp.le.s32.totalorder 2, %s15
      // Predicated region
      $region49: #{tpu_custom_call.1} parent=5 // pred_check
        %p6042 = pneg %p6041
      $region50: #{tpu_custom_call.1} parent=5 // pred_check_branch
        %6044 = sbr.rel (%p6042) target = $region52
      $region51: #{tpu_custom_call.1} parent=5 // pred_region
        %s6045 = ssub.s32 %s15, 2
        // Predicated region
        $region53: #{tpu_custom_call.1} parent=51 // pred_check
          %p6046 = pneg %p175
        $region54: #{tpu_custom_call.1} parent=51 // pred_check_branch
          %6048 = sbr.rel (%p6046) target = $region56
        $region55: #{tpu_custom_call.1} parent=51 // pred_region
          %s6049 = sand.u32 %s160, 1
          %s6050 = scalar_lea.sflag [#allocation3], %s6049
          %s6051 = sand.u32 %s160, 1
          %s6052 = smul.addr %s6051, 16
          %s6053 = scalar_lea.vmem [#allocation2], %s6052
          %6055 = dma.done %s6050, 256
        $region56: #{tpu_custom_call.1} parent=51 // pred_fallthru
          _
      $region52: #{tpu_custom_call.1} parent=5 // pred_fallthru
        _
    $region6: #{tpu_custom_call.1} parent=1 // loop_footer
      %s19 = sadd.s32 1, %s15
    $region7: #{tpu_custom_call.1} parent=1 // loop_footer_branch
      %14 = sbr.rel target = $region3
    $region8: #{tpu_custom_call.1} parent=1 // loop_exit
      _
    %6056 = vsyncpa [#allocation3], 1
    %s6057 = scalar_lea.sflag [#allocation3], 1
    %6058 = vsyncpa %s6057, 1

</llo_original>
